<compile_context>
chip_gen: v6e
topology: v6e:2x2x1
jax: 0.10.0
libtpu: 0.0.40
codegen_flags: <defaults>
</compile_context>

<pallas_src>
import functools

import jax
import jax.numpy as jnp
from jax.experimental import pallas as pl
from jax.experimental.pallas import tpu as pltpu

HIDDEN = 768


def krel_kernel(mixw_ref,            # SMEM (3,)        f32 scalar mix weights
                pooled_ref,          # VMEM (3, TB, H)  f32 masked-mean pooled encodings
                wpool_ref,           # VMEM (H, H)      bf16 pooler weight
                bpool_ref,           # VMEM (1, H)      f32 pooler bias
                whead_ref,           # VMEM (3, H, Cp)  bf16 [w_tar, w_rel, w_sub]
                bhead_ref,           # VMEM (3, Cp)     f32  [b_tar, b_rel, b_sub]
                out_ref):            # VMEM (TB, Cp)    f32
    tb = out_ref.shape[0]
    hidden = wpool_ref.shape[0]

    # Shared BERT-style pooler: one (3*TB, H) @ (H, H) MXU pass for all three
    # sequences.  The reshape only collapses the leading dim (TB is a multiple
    # of 8, H a multiple of 128) so it is layout-free.
    stacked = pooled_ref[...].reshape(3 * tb, hidden)
    pooled = jnp.tanh(
        jnp.dot(stacked.astype(jnp.bfloat16), wpool_ref[...],
                preferred_element_type=jnp.float32)
        + bpool_ref[...])
    pooled = pooled.astype(jnp.bfloat16)

    # dropout(p=0.3) in eval mode == identity.

    # Three head dots on the stacked weight; f32 accumulation on the MXU.
    r_tar = jnp.dot(pooled[0 * tb:1 * tb], whead_ref[0],
                    preferred_element_type=jnp.float32)
    r_rel = jnp.dot(pooled[1 * tb:2 * tb], whead_ref[1],
                    preferred_element_type=jnp.float32)
    r_sub = jnp.dot(pooled[2 * tb:3 * tb], whead_ref[2],
                    preferred_element_type=jnp.float32)

    # Scalar mix weights applied to the f32 logits (matches the PyTorch
    # `w0*out_tar + w1*out_rel + w2*out_sub`), biases folded the same way.
    w0 = mixw_ref[0]
    w1 = mixw_ref[1]
    w2 = mixw_ref[2]
    bias = (w0 * bhead_ref[0:1, :] + w1 * bhead_ref[1:2, :]
            + w2 * bhead_ref[2:3, :])                                  # (1, Cp)
    out_ref[...] = w0 * r_tar + w1 * r_rel + w2 * r_sub + bias


@functools.partial(jax.jit, static_argnames=("n_classes",))
def krel_forward(tar_ids, rel_ids, sub_ids, params, *, n_classes):
    emb_table = params["emb_table"]                       # (V, H) bf16
    H = emb_table.shape[1]
    B, S = tar_ids.shape
    Cp = params["w_head"].shape[2]                        # n_classes padded to 128 lanes

    # ---- stand-in encoder front half (plain JAX; XLA fuses gather+reduce) --
    # Masked mean pooling over the sequence.  Contract: pad token id == 0 and
    # token id 0 is never a real token (BERT convention).
    def pool(ids):
        valid = ids > 0
        emb = jnp.take(emb_table, ids, axis=0).astype(jnp.float32)      # (B,S,H)
        summed = jnp.sum(jnp.where(valid[:, :, None], emb, 0.0), axis=1)  # (B,H)
        cnt = jnp.maximum(jnp.sum(valid, axis=1, dtype=jnp.float32), 1.0)
        return summed / cnt[:, None]

    pooled = jnp.stack([pool(tar_ids), pool(rel_ids), pool(sub_ids)],
                       axis=0)                                          # (3,B,H) f32

    # Batch tile: multiple of 8 sublanes, capped at 256 rows, and sized so the
    # "parallel" grid has >= 2 steps whenever B allows (keeps both v7x TCs
    # busy; costs nothing on single-TC v5e/v6e).
    TB = min(256, max(8, ((pl.cdiv(B, 2) + 7) // 8) * 8))
    Bp = pl.cdiv(B, TB) * TB
    if Bp != B:
        pooled = jnp.pad(pooled, ((0, 0), (0, Bp - B), (0, 0)))

    grid = (Bp // TB,)

    mixw_spec = pl.BlockSpec((3,), lambda i: (0,),
                             memory_space=pltpu.MemorySpace.SMEM)
    pooled_spec = pl.BlockSpec((3, TB, H), lambda i: (0, i, 0))
    # Weight operands: index_map -> origin, so they stay VMEM-resident across
    # batch tiles (total ~2 MiB; double-buffering them is a negligible cost,
    # so pipeline_mode tweaks are intentionally omitted).
    wpool_spec = pl.BlockSpec((H, H), lambda i: (0, 0))
    bpool_spec = pl.BlockSpec((1, H), lambda i: (0, 0))
    whead_spec = pl.BlockSpec((3, H, Cp), lambda i: (0, 0, 0))
    bhead_spec = pl.BlockSpec((3, Cp), lambda i: (0, 0))
    out_spec = pl.BlockSpec((TB, Cp), lambda i: (i, 0))

    out_padded = pl.pallas_call(
        krel_kernel,
        out_shape=jax.ShapeDtypeStruct((Bp, Cp), jnp.float32),
        grid_spec=pltpu.PrefetchScalarGridSpec(
            num_scalar_prefetch=0,
            grid=grid,
            in_specs=[mixw_spec, pooled_spec,
                      wpool_spec, bpool_spec,
                      whead_spec, bhead_spec],
            out_specs=out_spec),
        compiler_params=pltpu.CompilerParams(
            dimension_semantics=("parallel",),
            vmem_limit_bytes=32 * 1024 * 1024),
    )(params["mix_w"], pooled,
      params["w_pool"], params["b_pool"],
      params["w_head"], params["b_head"])

    return out_padded[:B, :n_classes]


def krel_reference(tar_ids, rel_ids, sub_ids, params, n_classes):
    """Pure-JAX f32 reference of the same stand-in forward."""
    emb = params["emb_table"].astype(jnp.float32)

    def pool(ids):
        valid = ids > 0
        e = jnp.take(emb, ids, axis=0)
        s = jnp.sum(jnp.where(valid[:, :, None], e, 0.0), axis=1)
        c = jnp.maximum(jnp.sum(valid, axis=1, dtype=jnp.float32), 1.0)
        return s / c[:, None]

    wp = params["w_pool"].astype(jnp.float32)
    wh = params["w_head"].astype(jnp.float32)
    bh = params["b_head"]
    mw = params["mix_w"]
    outs = []
    for k, ids in enumerate((tar_ids, rel_ids, sub_ids)):
        p = jnp.tanh(pool(ids) @ wp + params["b_pool"])
        outs.append(p @ wh[k] + bh[k][None, :])
    res = mw[0] * outs[0] + mw[1] * outs[1] + mw[2] * outs[2]
    return res[:, :n_classes]


def init_params(key, *, vocab=1000, hidden=768, n_classes=116):
    Cp = ((n_classes + 127) // 128) * 128
    ks = jax.random.split(key, 10)

    def dense(k, shape, scale=0.02):
        return (scale * jax.random.normal(k, shape)).astype(jnp.float32)

    def pad_cols(w):
        return jnp.pad(w, ((0, 0), (0, Cp - n_classes)))

    w_tar = pad_cols(dense(ks[3], (hidden, n_classes)))
    w_rel = pad_cols(dense(ks[4], (hidden, n_classes)))
    w_sub = pad_cols(dense(ks[5], (hidden, n_classes)))
    b_tar = jnp.pad(dense(ks[6], (n_classes,)), (0, Cp - n_classes))
    b_rel = jnp.pad(dense(ks[7], (n_classes,)), (0, Cp - n_classes))
    b_sub = jnp.pad(dense(ks[8], (n_classes,)), (0, Cp - n_classes))

    params = {
        # bf16 storage for the matmul operands; accumulation stays f32.
        "emb_table": dense(ks[0], (vocab, hidden)).astype(jnp.bfloat16),
        "w_pool": dense(ks[1], (hidden, hidden)).astype(jnp.bfloat16),
        "b_pool": dense(ks[2], (1, hidden)),                               # f32
        # heads stacked along a leading axis -> three accumulating dots.
        "w_head": jnp.stack([w_tar, w_rel, w_sub],
                            axis=0).astype(jnp.bfloat16),                  # (3, H, Cp)
        "b_head": jnp.stack([b_tar, b_rel, b_sub], axis=0),                # (3, Cp) f32
        # the three torch.nn.Parameter(torch.randn(1)) scalar mix weights
        "mix_w": jax.random.normal(ks[9], (3,)).astype(jnp.float32),
    }
    return params


if __name__ == "__main__":
    key = jax.random.PRNGKey(0)
    k_params, k_tar, k_rel, k_sub = jax.random.split(key, 4)

    B, S = 2, 8
    n_classes = 116
    vocab = 1000

    params = init_params(k_params, vocab=vocab, hidden=HIDDEN, n_classes=n_classes)

    def make_ids(k):
        ids = jax.random.randint(k, (B, S), 1, vocab, dtype=jnp.int32)
        # zero out trailing positions of row 1 to exercise the mask path
        keep = jnp.arange(S)[None, :] < jnp.array([[S], [S - 3]])
        return jnp.where(keep, ids, 0).astype(jnp.int32)

    tar_ids = make_ids(k_tar)
    rel_ids = make_ids(k_rel)
    sub_ids = make_ids(k_sub)

    res = krel_forward(tar_ids, rel_ids, sub_ids, params, n_classes=n_classes)
    res = jax.block_until_ready(res)
    assert res.shape == (B, n_classes), res.shape
    assert bool(jnp.all(jnp.isfinite(res)))

    ref = jax.block_until_ready(
        krel_reference(tar_ids, rel_ids, sub_ids, params, n_classes))
    assert bool(jnp.allclose(res, ref, rtol=2e-2, atol=2e-3)), (
        float(jnp.max(jnp.abs(res - ref))))

    print("KERNEL_OK")
</pallas_src>

<mosaic_0001>
module attributes {stable_mosaic.version = 11 : i64} {
  func.func @krel_kernel(%arg0: i32, %arg1: memref<3xf32, #tpu.memory_space<smem>>, %arg2: memref<3x8x768xf32, #tpu.memory_space<vmem>>, %arg3: memref<768x768xbf16, #tpu.memory_space<vmem>>, %arg4: memref<1x768xf32, #tpu.memory_space<vmem>>, %arg5: memref<3x768x128xbf16, #tpu.memory_space<vmem>>, %arg6: memref<3x128xf32, #tpu.memory_space<vmem>>, %arg7: memref<8x128xf32, #tpu.memory_space<vmem>>) attributes {dimension_semantics = [#tpu.dimension_semantics<parallel>], iteration_bounds = array<i64: 1>, scalar_prefetch = 0 : i64, scratch_operands = 0 : i64, tpu.core_type = #tpu.core_type<tc>, window_params = [{transform_indices = @transform_0, window_bounds = array<i64: 3>}, {transform_indices = @transform_1, window_bounds = array<i64: 3, 8, 768>}, {pipeline_mode = #tpu.pipeline_mode<synchronous>, transform_indices = @transform_2, window_bounds = array<i64: 768, 768>}, {pipeline_mode = #tpu.pipeline_mode<synchronous>, transform_indices = @transform_3, window_bounds = array<i64: 1, 768>}, {pipeline_mode = #tpu.pipeline_mode<synchronous>, transform_indices = @transform_4, window_bounds = array<i64: 3, 768, 128>}, {pipeline_mode = #tpu.pipeline_mode<synchronous>, transform_indices = @transform_5, window_bounds = array<i64: 3, 128>}, {transform_indices = @transform_6, window_bounds = array<i64: 8, 128>}]} {
    %c0 = arith.constant 0 : index
    %c0_0 = arith.constant 0 : index
    %c0_1 = arith.constant 0 : index
    %0 = vector.load %arg2[%c0, %c0_0, %c0_1] : memref<3x8x768xf32, #tpu.memory_space<vmem>>, vector<3x8x768xf32>
    %1 = vector.shape_cast %0 : vector<3x8x768xf32> to vector<24x768xf32>
    %2 = arith.truncf %1 : vector<24x768xf32> to vector<24x768xbf16>
    %c0_2 = arith.constant 0 : index
    %c0_3 = arith.constant 0 : index
    %3 = vector.load %arg3[%c0_2, %c0_3] : memref<768x768xbf16, #tpu.memory_space<vmem>>, vector<768x768xbf16>
    %cst = arith.constant dense<0.000000e+00> : vector<24x768xf32>
    %4 = tpu.matmul %2, %3, %cst {dimension_numbers = #tpu.dot_dimension_numbers<[1], [0], [0], [1], [0, 0, 1, 1], [], []>} : vector<24x768xbf16>, vector<768x768xbf16>, vector<24x768xf32> -> vector<24x768xf32>
    %c0_4 = arith.constant 0 : index
    %c0_5 = arith.constant 0 : index
    %5 = vector.load %arg4[%c0_4, %c0_5] : memref<1x768xf32, #tpu.memory_space<vmem>>, vector<1x768xf32>
    %6 = vector.broadcast %5 : vector<1x768xf32> to vector<24x768xf32>
    %7 = arith.addf %4, %6 : vector<24x768xf32>
    %8 = math.tanh %7 : vector<24x768xf32>
    %9 = arith.truncf %8 : vector<24x768xf32> to vector<24x768xbf16>
    %10 = vector.extract_strided_slice %9 {offsets = [0, 0], sizes = [8, 768], strides = [1, 1]} : vector<24x768xbf16> to vector<8x768xbf16>
    %c0_6 = arith.constant 0 : index
    %c0_7 = arith.constant 0 : index
    %c0_8 = arith.constant 0 : index
    %11 = vector.load %arg5[%c0_6, %c0_7, %c0_8] : memref<3x768x128xbf16, #tpu.memory_space<vmem>>, vector<1x768x128xbf16>
    %12 = vector.shape_cast %11 : vector<1x768x128xbf16> to vector<768x128xbf16>
    %cst_9 = arith.constant dense<0.000000e+00> : vector<8x128xf32>
    %13 = tpu.matmul %10, %12, %cst_9 {dimension_numbers = #tpu.dot_dimension_numbers<[1], [0], [0], [1], [0, 0, 1, 1], [], []>} : vector<8x768xbf16>, vector<768x128xbf16>, vector<8x128xf32> -> vector<8x128xf32>
    %14 = vector.extract_strided_slice %9 {offsets = [8, 0], sizes = [8, 768], strides = [1, 1]} : vector<24x768xbf16> to vector<8x768xbf16>
    %c1 = arith.constant 1 : index
    %c0_10 = arith.constant 0 : index
    %c0_11 = arith.constant 0 : index
    %15 = vector.load %arg5[%c1, %c0_10, %c0_11] : memref<3x768x128xbf16, #tpu.memory_space<vmem>>, vector<1x768x128xbf16>
    %16 = vector.shape_cast %15 : vector<1x768x128xbf16> to vector<768x128xbf16>
    %cst_12 = arith.constant dense<0.000000e+00> : vector<8x128xf32>
    %17 = tpu.matmul %14, %16, %cst_12 {dimension_numbers = #tpu.dot_dimension_numbers<[1], [0], [0], [1], [0, 0, 1, 1], [], []>} : vector<8x768xbf16>, vector<768x128xbf16>, vector<8x128xf32> -> vector<8x128xf32>
    %18 = vector.extract_strided_slice %9 {offsets = [16, 0], sizes = [8, 768], strides = [1, 1]} : vector<24x768xbf16> to vector<8x768xbf16>
    %c2 = arith.constant 2 : index
    %c0_13 = arith.constant 0 : index
    %c0_14 = arith.constant 0 : index
    %19 = vector.load %arg5[%c2, %c0_13, %c0_14] : memref<3x768x128xbf16, #tpu.memory_space<vmem>>, vector<1x768x128xbf16>
    %20 = vector.shape_cast %19 : vector<1x768x128xbf16> to vector<768x128xbf16>
    %cst_15 = arith.constant dense<0.000000e+00> : vector<8x128xf32>
    %21 = tpu.matmul %18, %20, %cst_15 {dimension_numbers = #tpu.dot_dimension_numbers<[1], [0], [0], [1], [0, 0, 1, 1], [], []>} : vector<8x768xbf16>, vector<768x128xbf16>, vector<8x128xf32> -> vector<8x128xf32>
    %c0_16 = arith.constant 0 : index
    %22 = memref.load %arg1[%c0_16] : memref<3xf32, #tpu.memory_space<smem>>
    %c1_17 = arith.constant 1 : index
    %23 = memref.load %arg1[%c1_17] : memref<3xf32, #tpu.memory_space<smem>>
    %c2_18 = arith.constant 2 : index
    %24 = memref.load %arg1[%c2_18] : memref<3xf32, #tpu.memory_space<smem>>
    %c0_19 = arith.constant 0 : index
    %c0_20 = arith.constant 0 : index
    %25 = vector.load %arg6[%c0_19, %c0_20] : memref<3x128xf32, #tpu.memory_space<vmem>>, vector<1x128xf32>
    %26 = vector.broadcast %22 : f32 to vector<1x128xf32>
    %27 = arith.mulf %26, %25 : vector<1x128xf32>
    %c1_21 = arith.constant 1 : index
    %c0_22 = arith.constant 0 : index
    %28 = vector.load %arg6[%c1_21, %c0_22] : memref<3x128xf32, #tpu.memory_space<vmem>>, vector<1x128xf32>
    %29 = vector.broadcast %23 : f32 to vector<1x128xf32>
    %30 = arith.mulf %29, %28 : vector<1x128xf32>
    %31 = arith.addf %27, %30 : vector<1x128xf32>
    %c2_23 = arith.constant 2 : index
    %c0_24 = arith.constant 0 : index
    %32 = vector.load %arg6[%c2_23, %c0_24] : memref<3x128xf32, #tpu.memory_space<vmem>>, vector<1x128xf32>
    %33 = vector.broadcast %24 : f32 to vector<1x128xf32>
    %34 = arith.mulf %33, %32 : vector<1x128xf32>
    %35 = arith.addf %31, %34 : vector<1x128xf32>
    %36 = vector.broadcast %22 : f32 to vector<8x128xf32>
    %37 = arith.mulf %36, %13 : vector<8x128xf32>
    %38 = vector.broadcast %23 : f32 to vector<8x128xf32>
    %39 = arith.mulf %38, %17 : vector<8x128xf32>
    %40 = arith.addf %37, %39 : vector<8x128xf32>
    %41 = vector.broadcast %24 : f32 to vector<8x128xf32>
    %42 = arith.mulf %41, %21 : vector<8x128xf32>
    %43 = arith.addf %40, %42 : vector<8x128xf32>
    %44 = vector.broadcast %35 : vector<1x128xf32> to vector<8x128xf32>
    %45 = arith.addf %43, %44 : vector<8x128xf32>
    %c0_25 = arith.constant 0 : index
    %c0_26 = arith.constant 0 : index
    %46 = vector.load %arg7[%c0_25, %c0_26] : memref<8x128xf32, #tpu.memory_space<vmem>>, vector<8x128xf32>
    tpu.vector_store %arg7[%c0_25, %c0_26], %45 {strides = array<i32>} : memref<8x128xf32, #tpu.memory_space<vmem>>, vector<8x128xf32>,
    return
  }
  func.func @transform_0(%arg0: i32) -> i32 {
    %c0_i32 = arith.constant 0 : i32
    %c0_i32_0 = arith.constant 0 : i32
    return %c0_i32 : i32
  }
  func.func @transform_1(%arg0: i32) -> (i32, i32, i32) {
    %c0_i32 = arith.constant 0 : i32
    %c0_i32_0 = arith.constant 0 : i32
    %c0_i32_1 = arith.constant 0 : i32
    return %c0_i32, %arg0, %c0_i32_0 : i32, i32, i32
  }
  func.func @transform_2(%arg0: i32) -> (i32, i32) {
    %c0_i32 = arith.constant 0 : i32
    %c0_i32_0 = arith.constant 0 : i32
    %c0_i32_1 = arith.constant 0 : i32
    return %c0_i32, %c0_i32_0 : i32, i32
  }
  func.func @transform_3(%arg0: i32) -> (i32, i32) {
    %c0_i32 = arith.constant 0 : i32
    %c0_i32_0 = arith.constant 0 : i32
    %c0_i32_1 = arith.constant 0 : i32
    return %c0_i32, %c0_i32_0 : i32, i32
  }
  func.func @transform_4(%arg0: i32) -> (i32, i32, i32) {
    %c0_i32 = arith.constant 0 : i32
    %c0_i32_0 = arith.constant 0 : i32
    %c0_i32_1 = arith.constant 0 : i32
    %c0_i32_2 = arith.constant 0 : i32
    return %c0_i32, %c0_i32_0, %c0_i32_1 : i32, i32, i32
  }
  func.func @transform_5(%arg0: i32) -> (i32, i32) {
    %c0_i32 = arith.constant 0 : i32
    %c0_i32_0 = arith.constant 0 : i32
    %c0_i32_1 = arith.constant 0 : i32
    return %c0_i32, %c0_i32_0 : i32, i32
  }
  func.func @transform_6(%arg0: i32) -> (i32, i32) {
    %c0_i32 = arith.constant 0 : i32
    %c0_i32_0 = arith.constant 0 : i32
    return %arg0, %c0_i32 : i32, i32
  }
}

</mosaic_0001>

<llo_original>
// kernel: krel_forward.1
$region0: #{krel_forward.1}
  #allocation0 [shape = 'u32[]', space=smem, size = 0x4, offset = 0x4, fixed_abs, tag = 'smem constant byte address 0x4 - core index']
  #allocation1 [shape = 'u32[144,128]{1,0:T(1,128)}', space=vmem, size = 0x12000, scoped, tag = 'internal scratch']
  %s0 = inlined_call_operand.hbm [shape: f32[3], index: 0, kind: input, shape index: {}]
  %s1 = inlined_call_operand.vmem [shape: f32[3,8,768], index: 1, kind: input, shape index: {}]
  %s2 = inlined_call_operand.hbm [shape: bf16[768,768], index: 2, kind: input, shape index: {}]
  %s3 = inlined_call_operand.hbm [shape: f32[1,768], index: 3, kind: input, shape index: {}]
  %s4 = inlined_call_operand.hbm [shape: bf16[3,768,128], index: 4, kind: input, shape index: {}]
  %s5 = inlined_call_operand.hbm [shape: f32[3,128], index: 5, kind: input, shape index: {}]
  %s6 = inlined_call_operand.vmem [shape: f32[8,128], index: 6, kind: output, shape index: {}]
  %s7 = sld [smem:[#allocation0]]
  $region54: #{krel_forward.1} parent=0
    _
  %s9 = ssub.s32 1, %s7
  %s10 = scalar_select 0, %s9, %s7
  $region1: #{krel_forward.1} parent=0
    #allocation2 [shape = 'u8[512]{0}', space=smem, size = 0x200, scoped, tag = 'input window, operand 0, single buffered']
    #allocation3 [shape = 's32[1]{0}', space=sflag, size = 0x4, scoped, tag = 'scoped memory for krel_forward.1']
    #allocation4 [shape = 's32[1]{0}', space=sflag, size = 0x4, scoped, tag = 'scoped memory for krel_forward.1']
    #allocation5 [shape = 'u8[1179648]{0}', space=vmem, size = 0x120000, scoped, tag = 'input window, operand 2, single buffered']
    #allocation6 [shape = 'u8[3072]{0}', space=vmem, size = 0xc00, scoped, tag = 'input window, operand 3, single buffered']
    #allocation7 [shape = 's32[1]{0}', space=sflag, size = 0x4, scoped, tag = 'scoped memory for krel_forward.1']
    #allocation8 [shape = 'u8[589824]{0}', space=vmem, size = 0x90000, scoped, tag = 'input window, operand 4, single buffered']
    #allocation9 [shape = 'u8[2048]{0}', space=vmem, size = 0x800, scoped, tag = 'input window, operand 5, single buffered']
    #allocation10 [shape = 's32[1]{0}', space=sflag, size = 0x4, scoped, tag = 'scoped memory for krel_forward.1']
    %11 = vsyncpa [#allocation4], 0
    %12 = vsyncpa [#allocation3], 0
    %13 = vsyncpa [#allocation7], 0
    %14 = vsyncpa [#allocation10], 0
    // Predicated region
    $region2: #{krel_forward.1} parent=1 // pred_check
      _
    $region3: #{krel_forward.1} parent=1 // pred_check_branch
      %16 = sbr.rel (0) target = $region5
    $region4: #{krel_forward.1} parent=1 // pred_region
      %s18 = ssub.s32 16, 16
      %19 = vsyncadd [#allocation4], %s18
      %22 = dma.hbm_to_smem %s0, 16, [#allocation2], [#allocation4]
    $region5: #{krel_forward.1} parent=1 // pred_fallthru
      _
    // Predicated region
    $region6: #{krel_forward.1} parent=1 // pred_check
      _
    $region7: #{krel_forward.1} parent=1 // pred_check_branch
      %24 = sbr.rel (0) target = $region9
    $region8: #{krel_forward.1} parent=1 // pred_region
      _
    $region9: #{krel_forward.1} parent=1 // pred_fallthru
      _
    // Predicated region
    $region10: #{krel_forward.1} parent=1 // pred_check
      _
    $region11: #{krel_forward.1} parent=1 // pred_check_branch
      %26 = sbr.rel (0) target = $region13
    $region12: #{krel_forward.1} parent=1 // pred_region
      %s28 = ssub.s32 36864, 36864
      %29 = vsyncadd [#allocation3], %s28
      %s30 = sshll.u32 [#allocation5], 4
      %s31 = int_to_ptr.vmem [resolvable:$true] %s30
      %36 = dma.hbm_to_vmem [thread:$0]  %s2, 36864, %s31, [#allocation3], 384, 384, 24
    $region13: #{krel_forward.1} parent=1 // pred_fallthru
      _
    // Predicated region
    $region14: #{krel_forward.1} parent=1 // pred_check
      _
    $region15: #{krel_forward.1} parent=1 // pred_check_branch
      %38 = sbr.rel (0) target = $region17
    $region16: #{krel_forward.1} parent=1 // pred_region
      %s40 = ssub.s32 96, 96
      %41 = vsyncadd [#allocation7], %s40
      %s43 = sshll.u32 [#allocation6], 4
      %s44 = int_to_ptr.vmem [resolvable:$true] %s43
      %46 = dma.hbm_to_vmem [thread:$0]  %s3, 96, %s44, [#allocation7]
    $region17: #{krel_forward.1} parent=1 // pred_fallthru
      _
    // Predicated region
    $region18: #{krel_forward.1} parent=1 // pred_check
      _
    $region19: #{krel_forward.1} parent=1 // pred_check_branch
      %48 = sbr.rel (0) target = $region21
    $region20: #{krel_forward.1} parent=1 // pred_region
      %s50 = ssub.s32 18432, 18432
      %51 = vsyncadd [#allocation7], %s50
      %s52 = sshll.u32 [#allocation8], 4
      %s53 = int_to_ptr.vmem [resolvable:$true] %s52
      %58 = dma.hbm_to_vmem [thread:$0]  %s4, 18432, %s53, [#allocation7], 64, 64, 4
    $region21: #{krel_forward.1} parent=1 // pred_fallthru
      _
    // Predicated region
    $region22: #{krel_forward.1} parent=1 // pred_check
      _
    $region23: #{krel_forward.1} parent=1 // pred_check_branch
      %60 = sbr.rel (0) target = $region25
    $region24: #{krel_forward.1} parent=1 // pred_region
      %s62 = ssub.s32 64, 64
      %63 = vsyncadd [#allocation10], %s62
      %s65 = sshll.u32 [#allocation9], 4
      %s66 = int_to_ptr.vmem [resolvable:$true] %s65
      %68 = dma.hbm_to_vmem [thread:$0]  %s5, 64, %s66, [#allocation10]
    $region25: #{krel_forward.1} parent=1 // pred_fallthru
      _
    // Predicated region
    $region26: #{krel_forward.1} parent=1 // pred_check
      _
    $region27: #{krel_forward.1} parent=1 // pred_check_branch
      %70 = sbr.rel (0) target = $region29
    $region28: #{krel_forward.1} parent=1 // pred_region
      %71 = dma.done [#allocation4], 16
    $region29: #{krel_forward.1} parent=1 // pred_fallthru
      _
    // Predicated region
    $region30: #{krel_forward.1} parent=1 // pred_check
      _
    $region31: #{krel_forward.1} parent=1 // pred_check_branch
      %73 = sbr.rel (0) target = $region33
    $region32: #{krel_forward.1} parent=1 // pred_region
      %74 = dma.done [#allocation3], 36864
    $region33: #{krel_forward.1} parent=1 // pred_fallthru
      _
    // Predicated region
    $region34: #{krel_forward.1} parent=1 // pred_check
      _
    $region35: #{krel_forward.1} parent=1 // pred_check_branch
      %76 = sbr.rel (0) target = $region37
    $region36: #{krel_forward.1} parent=1 // pred_region
      %77 = dma.done [#allocation7], 96
    $region37: #{krel_forward.1} parent=1 // pred_fallthru
      _
    // Predicated region
    $region38: #{krel_forward.1} parent=1 // pred_check
      _
    $region39: #{krel_forward.1} parent=1 // pred_check_branch
      %79 = sbr.rel (0) target = $region41
    $region40: #{krel_forward.1} parent=1 // pred_region
      %80 = dma.done [#allocation7], 18432
    $region41: #{krel_forward.1} parent=1 // pred_fallthru
      _
    // Predicated region
    $region42: #{krel_forward.1} parent=1 // pred_check
      _
    $region43: #{krel_forward.1} parent=1 // pred_check_branch
      %82 = sbr.rel (0) target = $region45
    $region44: #{krel_forward.1} parent=1 // pred_region
      %83 = dma.done [#allocation10], 64
    $region45: #{krel_forward.1} parent=1 // pred_fallthru
      _
    %84 = sfence
    %v86 = vld [vmem:[%s1] sm:$0xff]
    %v87 = vld [vmem:[%s1 + $0x8] sm:$0xff]
    %v88 = vld [vmem:[%s1 + $0x10] sm:$0xff]
    %v89 = vld [vmem:[%s1 + $0x18] sm:$0xff]
    %v90 = vld [vmem:[%s1 + $0x20] sm:$0xff]
    %v91 = vld [vmem:[%s1 + $0x28] sm:$0xff]
    %v92 = vld [vmem:[%s1 + $0x30] sm:$0xff]
    %v93 = vld [vmem:[%s1 + $0x38] sm:$0xff]
    %v94 = vld [vmem:[%s1 + $0x40] sm:$0xff]
    %v95 = vld [vmem:[%s1 + $0x48] sm:$0xff]
    %v96 = vld [vmem:[%s1 + $0x50] sm:$0xff]
    %v97 = vld [vmem:[%s1 + $0x58] sm:$0xff]
    %v98 = vld [vmem:[%s1 + $0x60] sm:$0xff]
    %v99 = vld [vmem:[%s1 + $0x68] sm:$0xff]
    %v100 = vld [vmem:[%s1 + $0x70] sm:$0xff]
    %v101 = vld [vmem:[%s1 + $0x78] sm:$0xff]
    %v102 = vld [vmem:[%s1 + $0x80] sm:$0xff]
    %v103 = vld [vmem:[%s1 + $0x88] sm:$0xff]
    %v104 = vpack.c.bf16 %v92, %v86
    %v105 = vpack.c.bf16 %v93, %v87
    %v106 = vpack.c.bf16 %v94, %v88
    %v107 = vpack.c.bf16 %v95, %v89
    %v108 = vpack.c.bf16 %v96, %v90
    %v109 = vpack.c.bf16 %v97, %v91
    %v110 = vpack.c.bf16 %v98, %v98
    %v111 = vpack.c.bf16 %v99, %v99
    %v112 = vpack.c.bf16 %v100, %v100
    %v113 = vpack.c.bf16 %v101, %v101
    %v114 = vpack.c.bf16 %v102, %v102
    %v115 = vpack.c.bf16 %v103, %v103
    %v116 = vld [vmem:[#allocation5] sm:$0xff]
    %v117 = vld [vmem:[#allocation5 + $0x8] sm:$0xff]
    %v118 = vld [vmem:[#allocation5 + $0x10] sm:$0xff]
    %v119 = vld [vmem:[#allocation5 + $0x18] sm:$0xff]
    %v120 = vld [vmem:[#allocation5 + $0x20] sm:$0xff]
    %v121 = vld [vmem:[#allocation5 + $0x28] sm:$0xff]
    %v122 = vld [vmem:[#allocation5 + $0x30] sm:$0xff]
    %v123 = vld [vmem:[#allocation5 + $0x38] sm:$0xff]
    %v124 = vld [vmem:[#allocation5 + $0x40] sm:$0xff]
    %v125 = vld [vmem:[#allocation5 + $0x48] sm:$0xff]
    %v126 = vld [vmem:[#allocation5 + $0x50] sm:$0xff]
    %v127 = vld [vmem:[#allocation5 + $0x58] sm:$0xff]
    %v128 = vld [vmem:[#allocation5 + $0x60] sm:$0xff]
    %v129 = vld [vmem:[#allocation5 + $0x68] sm:$0xff]
    %v130 = vld [vmem:[#allocation5 + $0x70] sm:$0xff]
    %v131 = vld [vmem:[#allocation5 + $0x78] sm:$0xff]
    %v132 = vld [vmem:[#allocation5 + $0x80] sm:$0xff]
    %v133 = vld [vmem:[#allocation5 + $0x88] sm:$0xff]
    %v134 = vld [vmem:[#allocation5 + $0x90] sm:$0xff]
    %v135 = vld [vmem:[#allocation5 + $0x98] sm:$0xff]
    %v136 = vld [vmem:[#allocation5 + $0xa0] sm:$0xff]
    %v137 = vld [vmem:[#allocation5 + $0xa8] sm:$0xff]
    %v138 = vld [vmem:[#allocation5 + $0xb0] sm:$0xff]
    %v139 = vld [vmem:[#allocation5 + $0xb8] sm:$0xff]
    %v140 = vld [vmem:[#allocation5 + $0xc0] sm:$0xff]
    %v141 = vld [vmem:[#allocation5 + $0xc8] sm:$0xff]
    %v142 = vld [vmem:[#allocation5 + $0xd0] sm:$0xff]
    %v143 = vld [vmem:[#allocation5 + $0xd8] sm:$0xff]
    %v144 = vld [vmem:[#allocation5 + $0xe0] sm:$0xff]
    %v145 = vld [vmem:[#allocation5 + $0xe8] sm:$0xff]
    %v146 = vld [vmem:[#allocation5 + $0xf0] sm:$0xff]
    %v147 = vld [vmem:[#allocation5 + $0xf8] sm:$0xff]
    %v148 = vld [vmem:[#allocation5 + $0x100] sm:$0xff]
    %v149 = vld [vmem:[#allocation5 + $0x108] sm:$0xff]
    %v150 = vld [vmem:[#allocation5 + $0x110] sm:$0xff]
    %v151 = vld [vmem:[#allocation5 + $0x118] sm:$0xff]
    %v152 = vld [vmem:[#allocation5 + $0x120] sm:$0xff]
    %v153 = vld [vmem:[#allocation5 + $0x128] sm:$0xff]
    %v154 = vld [vmem:[#allocation5 + $0x130] sm:$0xff]
    %v155 = vld [vmem:[#allocation5 + $0x138] sm:$0xff]
    %v156 = vld [vmem:[#allocation5 + $0x140] sm:$0xff]
    %v157 = vld [vmem:[#allocation5 + $0x148] sm:$0xff]
    %v158 = vld [vmem:[#allocation5 + $0x150] sm:$0xff]
    %v159 = vld [vmem:[#allocation5 + $0x158] sm:$0xff]
    %v160 = vld [vmem:[#allocation5 + $0x160] sm:$0xff]
    %v161 = vld [vmem:[#allocation5 + $0x168] sm:$0xff]
    %v162 = vld [vmem:[#allocation5 + $0x170] sm:$0xff]
    %v163 = vld [vmem:[#allocation5 + $0x178] sm:$0xff]
    %v164 = vld [vmem:[#allocation5 + $0x180] sm:$0xff]
    %v165 = vld [vmem:[#allocation5 + $0x188] sm:$0xff]
    %v166 = vld [vmem:[#allocation5 + $0x190] sm:$0xff]
    %v167 = vld [vmem:[#allocation5 + $0x198] sm:$0xff]
    %v168 = vld [vmem:[#allocation5 + $0x1a0] sm:$0xff]
    %v169 = vld [vmem:[#allocation5 + $0x1a8] sm:$0xff]
    %v170 = vld [vmem:[#allocation5 + $0x1b0] sm:$0xff]
    %v171 = vld [vmem:[#allocation5 + $0x1b8] sm:$0xff]
    %v172 = vld [vmem:[#allocation5 + $0x1c0] sm:$0xff]
    %v173 = vld [vmem:[#allocation5 + $0x1c8] sm:$0xff]
    %v174 = vld [vmem:[#allocation5 + $0x1d0] sm:$0xff]
    %v175 = vld [vmem:[#allocation5 + $0x1d8] sm:$0xff]
    %v176 = vld [vmem:[#allocation5 + $0x1e0] sm:$0xff]
    %v177 = vld [vmem:[#allocation5 + $0x1e8] sm:$0xff]
    %v178 = vld [vmem:[#allocation5 + $0x1f0] sm:$0xff]
    %v179 = vld [vmem:[#allocation5 + $0x1f8] sm:$0xff]
    %v180 = vld [vmem:[#allocation5 + $0x200] sm:$0xff]
    %v181 = vld [vmem:[#allocation5 + $0x208] sm:$0xff]
    %v182 = vld [vmem:[#allocation5 + $0x210] sm:$0xff]
    %v183 = vld [vmem:[#allocation5 + $0x218] sm:$0xff]
    %v184 = vld [vmem:[#allocation5 + $0x220] sm:$0xff]
    %v185 = vld [vmem:[#allocation5 + $0x228] sm:$0xff]
    %v186 = vld [vmem:[#allocation5 + $0x230] sm:$0xff]
    %v187 = vld [vmem:[#allocation5 + $0x238] sm:$0xff]
    %v188 = vld [vmem:[#allocation5 + $0x240] sm:$0xff]
    %v189 = vld [vmem:[#allocation5 + $0x248] sm:$0xff]
    %v190 = vld [vmem:[#allocation5 + $0x250] sm:$0xff]
    %v191 = vld [vmem:[#allocation5 + $0x258] sm:$0xff]
    %v192 = vld [vmem:[#allocation5 + $0x260] sm:$0xff]
    %v193 = vld [vmem:[#allocation5 + $0x268] sm:$0xff]
    %v194 = vld [vmem:[#allocation5 + $0x270] sm:$0xff]
    %v195 = vld [vmem:[#allocation5 + $0x278] sm:$0xff]
    %v196 = vld [vmem:[#allocation5 + $0x280] sm:$0xff]
    %v197 = vld [vmem:[#allocation5 + $0x288] sm:$0xff]
    %v198 = vld [vmem:[#allocation5 + $0x290] sm:$0xff]
    %v199 = vld [vmem:[#allocation5 + $0x298] sm:$0xff]
    %v200 = vld [vmem:[#allocation5 + $0x2a0] sm:$0xff]
    %v201 = vld [vmem:[#allocation5 + $0x2a8] sm:$0xff]
    %v202 = vld [vmem:[#allocation5 + $0x2b0] sm:$0xff]
    %v203 = vld [vmem:[#allocation5 + $0x2b8] sm:$0xff]
    %v204 = vld [vmem:[#allocation5 + $0x2c0] sm:$0xff]
    %v205 = vld [vmem:[#allocation5 + $0x2c8] sm:$0xff]
    %v206 = vld [vmem:[#allocation5 + $0x2d0] sm:$0xff]
    %v207 = vld [vmem:[#allocation5 + $0x2d8] sm:$0xff]
    %v208 = vld [vmem:[#allocation5 + $0x2e0] sm:$0xff]
    %v209 = vld [vmem:[#allocation5 + $0x2e8] sm:$0xff]
    %v210 = vld [vmem:[#allocation5 + $0x2f0] sm:$0xff]
    %v211 = vld [vmem:[#allocation5 + $0x2f8] sm:$0xff]
    %v212 = vld [vmem:[#allocation5 + $0x300] sm:$0xff]
    %v213 = vld [vmem:[#allocation5 + $0x308] sm:$0xff]
    %v214 = vld [vmem:[#allocation5 + $0x310] sm:$0xff]
    %v215 = vld [vmem:[#allocation5 + $0x318] sm:$0xff]
    %v216 = vld [vmem:[#allocation5 + $0x320] sm:$0xff]
    %v217 = vld [vmem:[#allocation5 + $0x328] sm:$0xff]
    %v218 = vld [vmem:[#allocation5 + $0x330] sm:$0xff]
    %v219 = vld [vmem:[#allocation5 + $0x338] sm:$0xff]
    %v220 = vld [vmem:[#allocation5 + $0x340] sm:$0xff]
    %v221 = vld [vmem:[#allocation5 + $0x348] sm:$0xff]
    %v222 = vld [vmem:[#allocation5 + $0x350] sm:$0xff]
    %v223 = vld [vmem:[#allocation5 + $0x358] sm:$0xff]
    %v224 = vld [vmem:[#allocation5 + $0x360] sm:$0xff]
    %v225 = vld [vmem:[#allocation5 + $0x368] sm:$0xff]
    %v226 = vld [vmem:[#allocation5 + $0x370] sm:$0xff]
    %v227 = vld [vmem:[#allocation5 + $0x378] sm:$0xff]
    %v228 = vld [vmem:[#allocation5 + $0x380] sm:$0xff]
    %v229 = vld [vmem:[#allocation5 + $0x388] sm:$0xff]
    %v230 = vld [vmem:[#allocation5 + $0x390] sm:$0xff]
    %v231 = vld [vmem:[#allocation5 + $0x398] sm:$0xff]
    %v232 = vld [vmem:[#allocation5 + $0x3a0] sm:$0xff]
    %v233 = vld [vmem:[#allocation5 + $0x3a8] sm:$0xff]
    %v234 = vld [vmem:[#allocation5 + $0x3b0] sm:$0xff]
    %v235 = vld [vmem:[#allocation5 + $0x3b8] sm:$0xff]
    %v236 = vld [vmem:[#allocation5 + $0x3c0] sm:$0xff]
    %v237 = vld [vmem:[#allocation5 + $0x3c8] sm:$0xff]
    %v238 = vld [vmem:[#allocation5 + $0x3d0] sm:$0xff]
    %v239 = vld [vmem:[#allocation5 + $0x3d8] sm:$0xff]
    %v240 = vld [vmem:[#allocation5 + $0x3e0] sm:$0xff]
    %v241 = vld [vmem:[#allocation5 + $0x3e8] sm:$0xff]
    %v242 = vld [vmem:[#allocation5 + $0x3f0] sm:$0xff]
    %v243 = vld [vmem:[#allocation5 + $0x3f8] sm:$0xff]
    %v244 = vld [vmem:[#allocation5 + $0x400] sm:$0xff]
    %v245 = vld [vmem:[#allocation5 + $0x408] sm:$0xff]
    %v246 = vld [vmem:[#allocation5 + $0x410] sm:$0xff]
    %v247 = vld [vmem:[#allocation5 + $0x418] sm:$0xff]
    %v248 = vld [vmem:[#allocation5 + $0x420] sm:$0xff]
    %v249 = vld [vmem:[#allocation5 + $0x428] sm:$0xff]
    %v250 = vld [vmem:[#allocation5 + $0x430] sm:$0xff]
    %v251 = vld [vmem:[#allocation5 + $0x438] sm:$0xff]
    %v252 = vld [vmem:[#allocation5 + $0x440] sm:$0xff]
    %v253 = vld [vmem:[#allocation5 + $0x448] sm:$0xff]
    %v254 = vld [vmem:[#allocation5 + $0x450] sm:$0xff]
    %v255 = vld [vmem:[#allocation5 + $0x458] sm:$0xff]
    %v256 = vld [vmem:[#allocation5 + $0x460] sm:$0xff]
    %v257 = vld [vmem:[#allocation5 + $0x468] sm:$0xff]
    %v258 = vld [vmem:[#allocation5 + $0x470] sm:$0xff]
    %v259 = vld [vmem:[#allocation5 + $0x478] sm:$0xff]
    %v260 = vld [vmem:[#allocation5 + $0x480] sm:$0xff]
    %v261 = vld [vmem:[#allocation5 + $0x488] sm:$0xff]
    %v262 = vld [vmem:[#allocation5 + $0x490] sm:$0xff]
    %v263 = vld [vmem:[#allocation5 + $0x498] sm:$0xff]
    %v264 = vld [vmem:[#allocation5 + $0x4a0] sm:$0xff]
    %v265 = vld [vmem:[#allocation5 + $0x4a8] sm:$0xff]
    %v266 = vld [vmem:[#allocation5 + $0x4b0] sm:$0xff]
    %v267 = vld [vmem:[#allocation5 + $0x4b8] sm:$0xff]
    %v268 = vld [vmem:[#allocation5 + $0x4c0] sm:$0xff]
    %v269 = vld [vmem:[#allocation5 + $0x4c8] sm:$0xff]
    %v270 = vld [vmem:[#allocation5 + $0x4d0] sm:$0xff]
    %v271 = vld [vmem:[#allocation5 + $0x4d8] sm:$0xff]
    %v272 = vld [vmem:[#allocation5 + $0x4e0] sm:$0xff]
    %v273 = vld [vmem:[#allocation5 + $0x4e8] sm:$0xff]
    %v274 = vld [vmem:[#allocation5 + $0x4f0] sm:$0xff]
    %v275 = vld [vmem:[#allocation5 + $0x4f8] sm:$0xff]
    %v276 = vld [vmem:[#allocation5 + $0x500] sm:$0xff]
    %v277 = vld [vmem:[#allocation5 + $0x508] sm:$0xff]
    %v278 = vld [vmem:[#allocation5 + $0x510] sm:$0xff]
    %v279 = vld [vmem:[#allocation5 + $0x518] sm:$0xff]
    %v280 = vld [vmem:[#allocation5 + $0x520] sm:$0xff]
    %v281 = vld [vmem:[#allocation5 + $0x528] sm:$0xff]
    %v282 = vld [vmem:[#allocation5 + $0x530] sm:$0xff]
    %v283 = vld [vmem:[#allocation5 + $0x538] sm:$0xff]
    %v284 = vld [vmem:[#allocation5 + $0x540] sm:$0xff]
    %v285 = vld [vmem:[#allocation5 + $0x548] sm:$0xff]
    %v286 = vld [vmem:[#allocation5 + $0x550] sm:$0xff]
    %v287 = vld [vmem:[#allocation5 + $0x558] sm:$0xff]
    %v288 = vld [vmem:[#allocation5 + $0x560] sm:$0xff]
    %v289 = vld [vmem:[#allocation5 + $0x568] sm:$0xff]
    %v290 = vld [vmem:[#allocation5 + $0x570] sm:$0xff]
    %v291 = vld [vmem:[#allocation5 + $0x578] sm:$0xff]
    %v292 = vld [vmem:[#allocation5 + $0x580] sm:$0xff]
    %v293 = vld [vmem:[#allocation5 + $0x588] sm:$0xff]
    %v294 = vld [vmem:[#allocation5 + $0x590] sm:$0xff]
    %v295 = vld [vmem:[#allocation5 + $0x598] sm:$0xff]
    %v296 = vld [vmem:[#allocation5 + $0x5a0] sm:$0xff]
    %v297 = vld [vmem:[#allocation5 + $0x5a8] sm:$0xff]
    %v298 = vld [vmem:[#allocation5 + $0x5b0] sm:$0xff]
    %v299 = vld [vmem:[#allocation5 + $0x5b8] sm:$0xff]
    %v300 = vld [vmem:[#allocation5 + $0x5c0] sm:$0xff]
    %v301 = vld [vmem:[#allocation5 + $0x5c8] sm:$0xff]
    %v302 = vld [vmem:[#allocation5 + $0x5d0] sm:$0xff]
    %v303 = vld [vmem:[#allocation5 + $0x5d8] sm:$0xff]
    %v304 = vld [vmem:[#allocation5 + $0x5e0] sm:$0xff]
    %v305 = vld [vmem:[#allocation5 + $0x5e8] sm:$0xff]
    %v306 = vld [vmem:[#allocation5 + $0x5f0] sm:$0xff]
    %v307 = vld [vmem:[#allocation5 + $0x5f8] sm:$0xff]
    %v308 = vld [vmem:[#allocation5 + $0x600] sm:$0xff]
    %v309 = vld [vmem:[#allocation5 + $0x608] sm:$0xff]
    %v310 = vld [vmem:[#allocation5 + $0x610] sm:$0xff]
    %v311 = vld [vmem:[#allocation5 + $0x618] sm:$0xff]
    %v312 = vld [vmem:[#allocation5 + $0x620] sm:$0xff]
    %v313 = vld [vmem:[#allocation5 + $0x628] sm:$0xff]
    %v314 = vld [vmem:[#allocation5 + $0x630] sm:$0xff]
    %v315 = vld [vmem:[#allocation5 + $0x638] sm:$0xff]
    %v316 = vld [vmem:[#allocation5 + $0x640] sm:$0xff]
    %v317 = vld [vmem:[#allocation5 + $0x648] sm:$0xff]
    %v318 = vld [vmem:[#allocation5 + $0x650] sm:$0xff]
    %v319 = vld [vmem:[#allocation5 + $0x658] sm:$0xff]
    %v320 = vld [vmem:[#allocation5 + $0x660] sm:$0xff]
    %v321 = vld [vmem:[#allocation5 + $0x668] sm:$0xff]
    %v322 = vld [vmem:[#allocation5 + $0x670] sm:$0xff]
    %v323 = vld [vmem:[#allocation5 + $0x678] sm:$0xff]
    %v324 = vld [vmem:[#allocation5 + $0x680] sm:$0xff]
    %v325 = vld [vmem:[#allocation5 + $0x688] sm:$0xff]
    %v326 = vld [vmem:[#allocation5 + $0x690] sm:$0xff]
    %v327 = vld [vmem:[#allocation5 + $0x698] sm:$0xff]
    %v328 = vld [vmem:[#allocation5 + $0x6a0] sm:$0xff]
    %v329 = vld [vmem:[#allocation5 + $0x6a8] sm:$0xff]
    %v330 = vld [vmem:[#allocation5 + $0x6b0] sm:$0xff]
    %v331 = vld [vmem:[#allocation5 + $0x6b8] sm:$0xff]
    %v332 = vld [vmem:[#allocation5 + $0x6c0] sm:$0xff]
    %v333 = vld [vmem:[#allocation5 + $0x6c8] sm:$0xff]
    %v334 = vld [vmem:[#allocation5 + $0x6d0] sm:$0xff]
    %v335 = vld [vmem:[#allocation5 + $0x6d8] sm:$0xff]
    %v336 = vld [vmem:[#allocation5 + $0x6e0] sm:$0xff]
    %v337 = vld [vmem:[#allocation5 + $0x6e8] sm:$0xff]
    %v338 = vld [vmem:[#allocation5 + $0x6f0] sm:$0xff]
    %v339 = vld [vmem:[#allocation5 + $0x6f8] sm:$0xff]
    %v340 = vld [vmem:[#allocation5 + $0x700] sm:$0xff]
    %v341 = vld [vmem:[#allocation5 + $0x708] sm:$0xff]
    %v342 = vld [vmem:[#allocation5 + $0x710] sm:$0xff]
    %v343 = vld [vmem:[#allocation5 + $0x718] sm:$0xff]
    %v344 = vld [vmem:[#allocation5 + $0x720] sm:$0xff]
    %v345 = vld [vmem:[#allocation5 + $0x728] sm:$0xff]
    %v346 = vld [vmem:[#allocation5 + $0x730] sm:$0xff]
    %v347 = vld [vmem:[#allocation5 + $0x738] sm:$0xff]
    %v348 = vld [vmem:[#allocation5 + $0x740] sm:$0xff]
    %v349 = vld [vmem:[#allocation5 + $0x748] sm:$0xff]
    %v350 = vld [vmem:[#allocation5 + $0x750] sm:$0xff]
    %v351 = vld [vmem:[#allocation5 + $0x758] sm:$0xff]
    %v352 = vld [vmem:[#allocation5 + $0x760] sm:$0xff]
    %v353 = vld [vmem:[#allocation5 + $0x768] sm:$0xff]
    %v354 = vld [vmem:[#allocation5 + $0x770] sm:$0xff]
    %v355 = vld [vmem:[#allocation5 + $0x778] sm:$0xff]
    %v356 = vld [vmem:[#allocation5 + $0x780] sm:$0xff]
    %v357 = vld [vmem:[#allocation5 + $0x788] sm:$0xff]
    %v358 = vld [vmem:[#allocation5 + $0x790] sm:$0xff]
    %v359 = vld [vmem:[#allocation5 + $0x798] sm:$0xff]
    %v360 = vld [vmem:[#allocation5 + $0x7a0] sm:$0xff]
    %v361 = vld [vmem:[#allocation5 + $0x7a8] sm:$0xff]
    %v362 = vld [vmem:[#allocation5 + $0x7b0] sm:$0xff]
    %v363 = vld [vmem:[#allocation5 + $0x7b8] sm:$0xff]
    %v364 = vld [vmem:[#allocation5 + $0x7c0] sm:$0xff]
    %v365 = vld [vmem:[#allocation5 + $0x7c8] sm:$0xff]
    %v366 = vld [vmem:[#allocation5 + $0x7d0] sm:$0xff]
    %v367 = vld [vmem:[#allocation5 + $0x7d8] sm:$0xff]
    %v368 = vld [vmem:[#allocation5 + $0x7e0] sm:$0xff]
    %v369 = vld [vmem:[#allocation5 + $0x7e8] sm:$0xff]
    %v370 = vld [vmem:[#allocation5 + $0x7f0] sm:$0xff]
    %v371 = vld [vmem:[#allocation5 + $0x7f8] sm:$0xff]
    %v372 = vld [vmem:[#allocation5 + $0x800] sm:$0xff]
    %v373 = vld [vmem:[#allocation5 + $0x808] sm:$0xff]
    %v374 = vld [vmem:[#allocation5 + $0x810] sm:$0xff]
    %v375 = vld [vmem:[#allocation5 + $0x818] sm:$0xff]
    %v376 = vld [vmem:[#allocation5 + $0x820] sm:$0xff]
    %v377 = vld [vmem:[#allocation5 + $0x828] sm:$0xff]
    %v378 = vld [vmem:[#allocation5 + $0x830] sm:$0xff]
    %v379 = vld [vmem:[#allocation5 + $0x838] sm:$0xff]
    %v380 = vld [vmem:[#allocation5 + $0x840] sm:$0xff]
    %v381 = vld [vmem:[#allocation5 + $0x848] sm:$0xff]
    %v382 = vld [vmem:[#allocation5 + $0x850] sm:$0xff]
    %v383 = vld [vmem:[#allocation5 + $0x858] sm:$0xff]
    %v384 = vld [vmem:[#allocation5 + $0x860] sm:$0xff]
    %v385 = vld [vmem:[#allocation5 + $0x868] sm:$0xff]
    %v386 = vld [vmem:[#allocation5 + $0x870] sm:$0xff]
    %v387 = vld [vmem:[#allocation5 + $0x878] sm:$0xff]
    %v388 = vld [vmem:[#allocation5 + $0x880] sm:$0xff]
    %v389 = vld [vmem:[#allocation5 + $0x888] sm:$0xff]
    %v390 = vld [vmem:[#allocation5 + $0x890] sm:$0xff]
    %v391 = vld [vmem:[#allocation5 + $0x898] sm:$0xff]
    %v392 = vld [vmem:[#allocation5 + $0x8a0] sm:$0xff]
    %v393 = vld [vmem:[#allocation5 + $0x8a8] sm:$0xff]
    %v394 = vld [vmem:[#allocation5 + $0x8b0] sm:$0xff]
    %v395 = vld [vmem:[#allocation5 + $0x8b8] sm:$0xff]
    %v396 = vld [vmem:[#allocation5 + $0x8c0] sm:$0xff]
    %v397 = vld [vmem:[#allocation5 + $0x8c8] sm:$0xff]
    %v398 = vld [vmem:[#allocation5 + $0x8d0] sm:$0xff]
    %v399 = vld [vmem:[#allocation5 + $0x8d8] sm:$0xff]
    %v400 = vld [vmem:[#allocation5 + $0x8e0] sm:$0xff]
    %v401 = vld [vmem:[#allocation5 + $0x8e8] sm:$0xff]
    %v402 = vld [vmem:[#allocation5 + $0x8f0] sm:$0xff]
    %v403 = vld [vmem:[#allocation5 + $0x8f8] sm:$0xff]
    %v404 = vld [vmem:[#allocation6] sm:$0x3f]
    %v406 = vlaneseq
    %v407 = vshrl.u32 %v406, 7
    %v408 = vsub.s32 0, %v407
    %v409 = vrot.slane %v404, %v408
    %v410 = vlaneseq
    %v411 = vshrl.u32 %v410, 7
    %v412 = vsub.s32 1, %v411
    %v413 = vrot.slane %v404, %v412
    %v414 = vlaneseq
    %v415 = vshrl.u32 %v414, 7
    %v416 = vsub.s32 2, %v415
    %v417 = vrot.slane %v404, %v416
    %v418 = vlaneseq
    %v419 = vshrl.u32 %v418, 7
    %v420 = vsub.s32 3, %v419
    %v421 = vrot.slane %v404, %v420
    %v422 = vlaneseq
    %v423 = vshrl.u32 %v422, 7
    %v424 = vsub.s32 4, %v423
    %v425 = vrot.slane %v404, %v424
    %v426 = vlaneseq
    %v427 = vshrl.u32 %v426, 7
    %v428 = vsub.s32 5, %v427
    %v429 = vrot.slane %v404, %v428
    %v724 = vunpack.c.l.b16 %v116
    %v725 = vunpack.c.h.b16 %v116
    %v726 = vunpack.c.l.b16 %v117
    %v727 = vunpack.c.h.b16 %v117
    %v728 = vunpack.c.l.b16 %v118
    %v729 = vunpack.c.h.b16 %v118
    %v730 = vunpack.c.l.b16 %v119
    %v731 = vunpack.c.h.b16 %v119
    %v732 = vunpack.c.l.b16 %v120
    %v733 = vunpack.c.h.b16 %v120
    %v734 = vunpack.c.l.b16 %v121
    %v735 = vunpack.c.h.b16 %v121
    %v736 = vunpack.c.l.b16 %v122
    %v737 = vunpack.c.h.b16 %v122
    %v738 = vunpack.c.l.b16 %v123
    %v739 = vunpack.c.h.b16 %v123
    %v740 = vunpack.c.l.b16 %v124
    %v741 = vunpack.c.h.b16 %v124
    %v742 = vunpack.c.l.b16 %v125
    %v743 = vunpack.c.h.b16 %v125
    %v744 = vunpack.c.l.b16 %v126
    %v745 = vunpack.c.h.b16 %v126
    %v746 = vunpack.c.l.b16 %v127
    %v747 = vunpack.c.h.b16 %v127
    %v748 = vunpack.c.l.b16 %v128
    %v749 = vunpack.c.h.b16 %v128
    %v750 = vunpack.c.l.b16 %v129
    %v751 = vunpack.c.h.b16 %v129
    %v752 = vunpack.c.l.b16 %v130
    %v753 = vunpack.c.h.b16 %v130
    %v754 = vunpack.c.l.b16 %v131
    %v755 = vunpack.c.h.b16 %v131
    %v756 = vunpack.c.l.b16 %v132
    %v757 = vunpack.c.h.b16 %v132
    %v758 = vunpack.c.l.b16 %v133
    %v759 = vunpack.c.h.b16 %v133
    %v760 = vunpack.c.l.b16 %v134
    %v761 = vunpack.c.h.b16 %v134
    %v762 = vunpack.c.l.b16 %v135
    %v763 = vunpack.c.h.b16 %v135
    %v764 = vunpack.c.l.b16 %v136
    %v765 = vunpack.c.h.b16 %v136
    %v766 = vunpack.c.l.b16 %v137
    %v767 = vunpack.c.h.b16 %v137
    %v768 = vunpack.c.l.b16 %v138
    %v769 = vunpack.c.h.b16 %v138
    %v770 = vunpack.c.l.b16 %v139
    %v771 = vunpack.c.h.b16 %v139
    %v772 = vunpack.c.l.b16 %v140
    %v773 = vunpack.c.h.b16 %v140
    %v774 = vunpack.c.l.b16 %v141
    %v775 = vunpack.c.h.b16 %v141
    %v776 = vunpack.c.l.b16 %v142
    %v777 = vunpack.c.h.b16 %v142
    %v778 = vunpack.c.l.b16 %v143
    %v779 = vunpack.c.h.b16 %v143
    %v780 = vunpack.c.l.b16 %v144
    %v781 = vunpack.c.h.b16 %v144
    %v782 = vunpack.c.l.b16 %v145
    %v783 = vunpack.c.h.b16 %v145
    %v784 = vunpack.c.l.b16 %v146
    %v785 = vunpack.c.h.b16 %v146
    %v786 = vunpack.c.l.b16 %v147
    %v787 = vunpack.c.h.b16 %v147
    %v788 = vunpack.c.l.b16 %v148
    %v789 = vunpack.c.h.b16 %v148
    %v790 = vunpack.c.l.b16 %v149
    %v791 = vunpack.c.h.b16 %v149
    %v792 = vunpack.c.l.b16 %v150
    %v793 = vunpack.c.h.b16 %v150
    %v794 = vunpack.c.l.b16 %v151
    %v795 = vunpack.c.h.b16 %v151
    %v796 = vunpack.c.l.b16 %v152
    %v797 = vunpack.c.h.b16 %v152
    %v798 = vunpack.c.l.b16 %v153
    %v799 = vunpack.c.h.b16 %v153
    %v800 = vunpack.c.l.b16 %v154
    %v801 = vunpack.c.h.b16 %v154
    %v802 = vunpack.c.l.b16 %v155
    %v803 = vunpack.c.h.b16 %v155
    %v804 = vunpack.c.l.b16 %v156
    %v805 = vunpack.c.h.b16 %v156
    %v806 = vunpack.c.l.b16 %v157
    %v807 = vunpack.c.h.b16 %v157
    %v808 = vunpack.c.l.b16 %v158
    %v809 = vunpack.c.h.b16 %v158
    %v810 = vunpack.c.l.b16 %v159
    %v811 = vunpack.c.h.b16 %v159
    %v812 = vunpack.c.l.b16 %v160
    %v813 = vunpack.c.h.b16 %v160
    %v814 = vunpack.c.l.b16 %v161
    %v815 = vunpack.c.h.b16 %v161
    %v816 = vunpack.c.l.b16 %v162
    %v817 = vunpack.c.h.b16 %v162
    %v818 = vunpack.c.l.b16 %v163
    %v819 = vunpack.c.h.b16 %v163
    %v820 = vunpack.c.l.b16 %v164
    %v821 = vunpack.c.h.b16 %v164
    %v822 = vunpack.c.l.b16 %v165
    %v823 = vunpack.c.h.b16 %v165
    %v824 = vunpack.c.l.b16 %v166
    %v825 = vunpack.c.h.b16 %v166
    %v826 = vunpack.c.l.b16 %v167
    %v827 = vunpack.c.h.b16 %v167
    %v828 = vunpack.c.l.b16 %v168
    %v829 = vunpack.c.h.b16 %v168
    %v830 = vunpack.c.l.b16 %v169
    %v831 = vunpack.c.h.b16 %v169
    %v832 = vunpack.c.l.b16 %v170
    %v833 = vunpack.c.h.b16 %v170
    %v834 = vunpack.c.l.b16 %v171
    %v835 = vunpack.c.h.b16 %v171
    %v836 = vunpack.c.l.b16 %v172
    %v837 = vunpack.c.h.b16 %v172
    %v838 = vunpack.c.l.b16 %v173
    %v839 = vunpack.c.h.b16 %v173
    %v840 = vunpack.c.l.b16 %v174
    %v841 = vunpack.c.h.b16 %v174
    %v842 = vunpack.c.l.b16 %v175
    %v843 = vunpack.c.h.b16 %v175
    %v844 = vunpack.c.l.b16 %v176
    %v845 = vunpack.c.h.b16 %v176
    %v846 = vunpack.c.l.b16 %v177
    %v847 = vunpack.c.h.b16 %v177
    %v848 = vunpack.c.l.b16 %v178
    %v849 = vunpack.c.h.b16 %v178
    %v850 = vunpack.c.l.b16 %v179
    %v851 = vunpack.c.h.b16 %v179
    %v852 = vunpack.c.l.b16 %v180
    %v853 = vunpack.c.h.b16 %v180
    %v854 = vunpack.c.l.b16 %v181
    %v855 = vunpack.c.h.b16 %v181
    %v856 = vunpack.c.l.b16 %v182
    %v857 = vunpack.c.h.b16 %v182
    %v858 = vunpack.c.l.b16 %v183
    %v859 = vunpack.c.h.b16 %v183
    %v860 = vunpack.c.l.b16 %v184
    %v861 = vunpack.c.h.b16 %v184
    %v862 = vunpack.c.l.b16 %v185
    %v863 = vunpack.c.h.b16 %v185
    %v864 = vunpack.c.l.b16 %v186
    %v865 = vunpack.c.h.b16 %v186
    %v866 = vunpack.c.l.b16 %v187
    %v867 = vunpack.c.h.b16 %v187
    %v868 = vunpack.c.l.b16 %v188
    %v869 = vunpack.c.h.b16 %v188
    %v870 = vunpack.c.l.b16 %v189
    %v871 = vunpack.c.h.b16 %v189
    %v872 = vunpack.c.l.b16 %v190
    %v873 = vunpack.c.h.b16 %v190
    %v874 = vunpack.c.l.b16 %v191
    %v875 = vunpack.c.h.b16 %v191
    %v876 = vunpack.c.l.b16 %v192
    %v877 = vunpack.c.h.b16 %v192
    %v878 = vunpack.c.l.b16 %v193
    %v879 = vunpack.c.h.b16 %v193
    %v880 = vunpack.c.l.b16 %v194
    %v881 = vunpack.c.h.b16 %v194
    %v882 = vunpack.c.l.b16 %v195
    %v883 = vunpack.c.h.b16 %v195
    %v884 = vunpack.c.l.b16 %v196
    %v885 = vunpack.c.h.b16 %v196
    %v886 = vunpack.c.l.b16 %v197
    %v887 = vunpack.c.h.b16 %v197
    %v888 = vunpack.c.l.b16 %v198
    %v889 = vunpack.c.h.b16 %v198
    %v890 = vunpack.c.l.b16 %v199
    %v891 = vunpack.c.h.b16 %v199
    %v892 = vunpack.c.l.b16 %v200
    %v893 = vunpack.c.h.b16 %v200
    %v894 = vunpack.c.l.b16 %v201
    %v895 = vunpack.c.h.b16 %v201
    %v896 = vunpack.c.l.b16 %v202
    %v897 = vunpack.c.h.b16 %v202
    %v898 = vunpack.c.l.b16 %v203
    %v899 = vunpack.c.h.b16 %v203
    %v900 = vunpack.c.l.b16 %v204
    %v901 = vunpack.c.h.b16 %v204
    %v902 = vunpack.c.l.b16 %v205
    %v903 = vunpack.c.h.b16 %v205
    %v904 = vunpack.c.l.b16 %v206
    %v905 = vunpack.c.h.b16 %v206
    %v906 = vunpack.c.l.b16 %v207
    %v907 = vunpack.c.h.b16 %v207
    %v908 = vunpack.c.l.b16 %v208
    %v909 = vunpack.c.h.b16 %v208
    %v910 = vunpack.c.l.b16 %v209
    %v911 = vunpack.c.h.b16 %v209
    %v912 = vunpack.c.l.b16 %v210
    %v913 = vunpack.c.h.b16 %v210
    %v914 = vunpack.c.l.b16 %v211
    %v915 = vunpack.c.h.b16 %v211
    %v916 = vunpack.c.l.b16 %v212
    %v917 = vunpack.c.h.b16 %v212
    %v918 = vunpack.c.l.b16 %v213
    %v919 = vunpack.c.h.b16 %v213
    %v920 = vunpack.c.l.b16 %v214
    %v921 = vunpack.c.h.b16 %v214
    %v922 = vunpack.c.l.b16 %v215
    %v923 = vunpack.c.h.b16 %v215
    %v924 = vunpack.c.l.b16 %v216
    %v925 = vunpack.c.h.b16 %v216
    %v926 = vunpack.c.l.b16 %v217
    %v927 = vunpack.c.h.b16 %v217
    %v928 = vunpack.c.l.b16 %v218
    %v929 = vunpack.c.h.b16 %v218
    %v930 = vunpack.c.l.b16 %v219
    %v931 = vunpack.c.h.b16 %v219
    %v932 = vunpack.c.l.b16 %v220
    %v933 = vunpack.c.h.b16 %v220
    %v934 = vunpack.c.l.b16 %v221
    %v935 = vunpack.c.h.b16 %v221
    %v936 = vunpack.c.l.b16 %v222
    %v937 = vunpack.c.h.b16 %v222
    %v938 = vunpack.c.l.b16 %v223
    %v939 = vunpack.c.h.b16 %v223
    %v940 = vunpack.c.l.b16 %v224
    %v941 = vunpack.c.h.b16 %v224
    %v942 = vunpack.c.l.b16 %v225
    %v943 = vunpack.c.h.b16 %v225
    %v944 = vunpack.c.l.b16 %v226
    %v945 = vunpack.c.h.b16 %v226
    %v946 = vunpack.c.l.b16 %v227
    %v947 = vunpack.c.h.b16 %v227
    %v948 = vunpack.c.l.b16 %v228
    %v949 = vunpack.c.h.b16 %v228
    %v950 = vunpack.c.l.b16 %v229
    %v951 = vunpack.c.h.b16 %v229
    %v952 = vunpack.c.l.b16 %v230
    %v953 = vunpack.c.h.b16 %v230
    %v954 = vunpack.c.l.b16 %v231
    %v955 = vunpack.c.h.b16 %v231
    %v956 = vunpack.c.l.b16 %v232
    %v957 = vunpack.c.h.b16 %v232
    %v958 = vunpack.c.l.b16 %v233
    %v959 = vunpack.c.h.b16 %v233
    %v960 = vunpack.c.l.b16 %v234
    %v961 = vunpack.c.h.b16 %v234
    %v962 = vunpack.c.l.b16 %v235
    %v963 = vunpack.c.h.b16 %v235
    %v964 = vunpack.c.l.b16 %v236
    %v965 = vunpack.c.h.b16 %v236
    %v966 = vunpack.c.l.b16 %v237
    %v967 = vunpack.c.h.b16 %v237
    %v968 = vunpack.c.l.b16 %v238
    %v969 = vunpack.c.h.b16 %v238
    %v970 = vunpack.c.l.b16 %v239
    %v971 = vunpack.c.h.b16 %v239
    %v972 = vunpack.c.l.b16 %v240
    %v973 = vunpack.c.h.b16 %v240
    %v974 = vunpack.c.l.b16 %v241
    %v975 = vunpack.c.h.b16 %v241
    %v976 = vunpack.c.l.b16 %v242
    %v977 = vunpack.c.h.b16 %v242
    %v978 = vunpack.c.l.b16 %v243
    %v979 = vunpack.c.h.b16 %v243
    %v980 = vunpack.c.l.b16 %v244
    %v981 = vunpack.c.h.b16 %v244
    %v982 = vunpack.c.l.b16 %v245
    %v983 = vunpack.c.h.b16 %v245
    %v984 = vunpack.c.l.b16 %v246
    %v985 = vunpack.c.h.b16 %v246
    %v986 = vunpack.c.l.b16 %v247
    %v987 = vunpack.c.h.b16 %v247
    %v988 = vunpack.c.l.b16 %v248
    %v989 = vunpack.c.h.b16 %v248
    %v990 = vunpack.c.l.b16 %v249
    %v991 = vunpack.c.h.b16 %v249
    %v992 = vunpack.c.l.b16 %v250
    %v993 = vunpack.c.h.b16 %v250
    %v994 = vunpack.c.l.b16 %v251
    %v995 = vunpack.c.h.b16 %v251
    %v996 = vunpack.c.l.b16 %v252
    %v997 = vunpack.c.h.b16 %v252
    %v998 = vunpack.c.l.b16 %v253
    %v999 = vunpack.c.h.b16 %v253
    %v1000 = vunpack.c.l.b16 %v254
    %v1001 = vunpack.c.h.b16 %v254
    %v1002 = vunpack.c.l.b16 %v255
    %v1003 = vunpack.c.h.b16 %v255
    %v1004 = vunpack.c.l.b16 %v256
    %v1005 = vunpack.c.h.b16 %v256
    %v1006 = vunpack.c.l.b16 %v257
    %v1007 = vunpack.c.h.b16 %v257
    %v1008 = vunpack.c.l.b16 %v258
    %v1009 = vunpack.c.h.b16 %v258
    %v1010 = vunpack.c.l.b16 %v259
    %v1011 = vunpack.c.h.b16 %v259
    %v1012 = vunpack.c.l.b16 %v260
    %v1013 = vunpack.c.h.b16 %v260
    %v1014 = vunpack.c.l.b16 %v261
    %v1015 = vunpack.c.h.b16 %v261
    %v1016 = vunpack.c.l.b16 %v262
    %v1017 = vunpack.c.h.b16 %v262
    %v1018 = vunpack.c.l.b16 %v263
    %v1019 = vunpack.c.h.b16 %v263
    %v1020 = vunpack.c.l.b16 %v264
    %v1021 = vunpack.c.h.b16 %v264
    %v1022 = vunpack.c.l.b16 %v265
    %v1023 = vunpack.c.h.b16 %v265
    %v1024 = vunpack.c.l.b16 %v266
    %v1025 = vunpack.c.h.b16 %v266
    %v1026 = vunpack.c.l.b16 %v267
    %v1027 = vunpack.c.h.b16 %v267
    %v1028 = vunpack.c.l.b16 %v268
    %v1029 = vunpack.c.h.b16 %v268
    %v1030 = vunpack.c.l.b16 %v269
    %v1031 = vunpack.c.h.b16 %v269
    %v1032 = vunpack.c.l.b16 %v270
    %v1033 = vunpack.c.h.b16 %v270
    %v1034 = vunpack.c.l.b16 %v271
    %v1035 = vunpack.c.h.b16 %v271
    %v1036 = vunpack.c.l.b16 %v272
    %v1037 = vunpack.c.h.b16 %v272
    %v1038 = vunpack.c.l.b16 %v273
    %v1039 = vunpack.c.h.b16 %v273
    %v1040 = vunpack.c.l.b16 %v274
    %v1041 = vunpack.c.h.b16 %v274
    %v1042 = vunpack.c.l.b16 %v275
    %v1043 = vunpack.c.h.b16 %v275
    %v1044 = vunpack.c.l.b16 %v276
    %v1045 = vunpack.c.h.b16 %v276
    %v1046 = vunpack.c.l.b16 %v277
    %v1047 = vunpack.c.h.b16 %v277
    %v1048 = vunpack.c.l.b16 %v278
    %v1049 = vunpack.c.h.b16 %v278
    %v1050 = vunpack.c.l.b16 %v279
    %v1051 = vunpack.c.h.b16 %v279
    %v1052 = vunpack.c.l.b16 %v280
    %v1053 = vunpack.c.h.b16 %v280
    %v1054 = vunpack.c.l.b16 %v281
    %v1055 = vunpack.c.h.b16 %v281
    %v1056 = vunpack.c.l.b16 %v282
    %v1057 = vunpack.c.h.b16 %v282
    %v1058 = vunpack.c.l.b16 %v283
    %v1059 = vunpack.c.h.b16 %v283
    %v1060 = vunpack.c.l.b16 %v284
    %v1061 = vunpack.c.h.b16 %v284
    %v1062 = vunpack.c.l.b16 %v285
    %v1063 = vunpack.c.h.b16 %v285
    %v1064 = vunpack.c.l.b16 %v286
    %v1065 = vunpack.c.h.b16 %v286
    %v1066 = vunpack.c.l.b16 %v287
    %v1067 = vunpack.c.h.b16 %v287
    %v1068 = vunpack.c.l.b16 %v288
    %v1069 = vunpack.c.h.b16 %v288
    %v1070 = vunpack.c.l.b16 %v289
    %v1071 = vunpack.c.h.b16 %v289
    %v1072 = vunpack.c.l.b16 %v290
    %v1073 = vunpack.c.h.b16 %v290
    %v1074 = vunpack.c.l.b16 %v291
    %v1075 = vunpack.c.h.b16 %v291
    %v1076 = vunpack.c.l.b16 %v292
    %v1077 = vunpack.c.h.b16 %v292
    %v1078 = vunpack.c.l.b16 %v293
    %v1079 = vunpack.c.h.b16 %v293
    %v1080 = vunpack.c.l.b16 %v294
    %v1081 = vunpack.c.h.b16 %v294
    %v1082 = vunpack.c.l.b16 %v295
    %v1083 = vunpack.c.h.b16 %v295
    %v1084 = vunpack.c.l.b16 %v296
    %v1085 = vunpack.c.h.b16 %v296
    %v1086 = vunpack.c.l.b16 %v297
    %v1087 = vunpack.c.h.b16 %v297
    %v1088 = vunpack.c.l.b16 %v298
    %v1089 = vunpack.c.h.b16 %v298
    %v1090 = vunpack.c.l.b16 %v299
    %v1091 = vunpack.c.h.b16 %v299
    %v1092 = vunpack.c.l.b16 %v300
    %v1093 = vunpack.c.h.b16 %v300
    %v1094 = vunpack.c.l.b16 %v301
    %v1095 = vunpack.c.h.b16 %v301
    %v1096 = vunpack.c.l.b16 %v302
    %v1097 = vunpack.c.h.b16 %v302
    %v1098 = vunpack.c.l.b16 %v303
    %v1099 = vunpack.c.h.b16 %v303
    %v1100 = vunpack.c.l.b16 %v304
    %v1101 = vunpack.c.h.b16 %v304
    %v1102 = vunpack.c.l.b16 %v305
    %v1103 = vunpack.c.h.b16 %v305
    %v1104 = vunpack.c.l.b16 %v306
    %v1105 = vunpack.c.h.b16 %v306
    %v1106 = vunpack.c.l.b16 %v307
    %v1107 = vunpack.c.h.b16 %v307
    %v1108 = vunpack.c.l.b16 %v308
    %v1109 = vunpack.c.h.b16 %v308
    %v1110 = vunpack.c.l.b16 %v309
    %v1111 = vunpack.c.h.b16 %v309
    %v1112 = vunpack.c.l.b16 %v310
    %v1113 = vunpack.c.h.b16 %v310
    %v1114 = vunpack.c.l.b16 %v311
    %v1115 = vunpack.c.h.b16 %v311
    %v1116 = vunpack.c.l.b16 %v312
    %v1117 = vunpack.c.h.b16 %v312
    %v1118 = vunpack.c.l.b16 %v313
    %v1119 = vunpack.c.h.b16 %v313
    %v1120 = vunpack.c.l.b16 %v314
    %v1121 = vunpack.c.h.b16 %v314
    %v1122 = vunpack.c.l.b16 %v315
    %v1123 = vunpack.c.h.b16 %v315
    %v1124 = vunpack.c.l.b16 %v316
    %v1125 = vunpack.c.h.b16 %v316
    %v1126 = vunpack.c.l.b16 %v317
    %v1127 = vunpack.c.h.b16 %v317
    %v1128 = vunpack.c.l.b16 %v318
    %v1129 = vunpack.c.h.b16 %v318
    %v1130 = vunpack.c.l.b16 %v319
    %v1131 = vunpack.c.h.b16 %v319
    %v1132 = vunpack.c.l.b16 %v320
    %v1133 = vunpack.c.h.b16 %v320
    %v1134 = vunpack.c.l.b16 %v321
    %v1135 = vunpack.c.h.b16 %v321
    %v1136 = vunpack.c.l.b16 %v322
    %v1137 = vunpack.c.h.b16 %v322
    %v1138 = vunpack.c.l.b16 %v323
    %v1139 = vunpack.c.h.b16 %v323
    %v1140 = vunpack.c.l.b16 %v324
    %v1141 = vunpack.c.h.b16 %v324
    %v1142 = vunpack.c.l.b16 %v325
    %v1143 = vunpack.c.h.b16 %v325
    %v1144 = vunpack.c.l.b16 %v326
    %v1145 = vunpack.c.h.b16 %v326
    %v1146 = vunpack.c.l.b16 %v327
    %v1147 = vunpack.c.h.b16 %v327
    %v1148 = vunpack.c.l.b16 %v328
    %v1149 = vunpack.c.h.b16 %v328
    %v1150 = vunpack.c.l.b16 %v329
    %v1151 = vunpack.c.h.b16 %v329
    %v1152 = vunpack.c.l.b16 %v330
    %v1153 = vunpack.c.h.b16 %v330
    %v1154 = vunpack.c.l.b16 %v331
    %v1155 = vunpack.c.h.b16 %v331
    %v1156 = vunpack.c.l.b16 %v332
    %v1157 = vunpack.c.h.b16 %v332
    %v1158 = vunpack.c.l.b16 %v333
    %v1159 = vunpack.c.h.b16 %v333
    %v1160 = vunpack.c.l.b16 %v334
    %v1161 = vunpack.c.h.b16 %v334
    %v1162 = vunpack.c.l.b16 %v335
    %v1163 = vunpack.c.h.b16 %v335
    %v1164 = vunpack.c.l.b16 %v336
    %v1165 = vunpack.c.h.b16 %v336
    %v1166 = vunpack.c.l.b16 %v337
    %v1167 = vunpack.c.h.b16 %v337
    %v1168 = vunpack.c.l.b16 %v338
    %v1169 = vunpack.c.h.b16 %v338
    %v1170 = vunpack.c.l.b16 %v339
    %v1171 = vunpack.c.h.b16 %v339
    %v1172 = vunpack.c.l.b16 %v340
    %v1173 = vunpack.c.h.b16 %v340
    %v1174 = vunpack.c.l.b16 %v341
    %v1175 = vunpack.c.h.b16 %v341
    %v1176 = vunpack.c.l.b16 %v342
    %v1177 = vunpack.c.h.b16 %v342
    %v1178 = vunpack.c.l.b16 %v343
    %v1179 = vunpack.c.h.b16 %v343
    %v1180 = vunpack.c.l.b16 %v344
    %v1181 = vunpack.c.h.b16 %v344
    %v1182 = vunpack.c.l.b16 %v345
    %v1183 = vunpack.c.h.b16 %v345
    %v1184 = vunpack.c.l.b16 %v346
    %v1185 = vunpack.c.h.b16 %v346
    %v1186 = vunpack.c.l.b16 %v347
    %v1187 = vunpack.c.h.b16 %v347
    %v1188 = vunpack.c.l.b16 %v348
    %v1189 = vunpack.c.h.b16 %v348
    %v1190 = vunpack.c.l.b16 %v349
    %v1191 = vunpack.c.h.b16 %v349
    %v1192 = vunpack.c.l.b16 %v350
    %v1193 = vunpack.c.h.b16 %v350
    %v1194 = vunpack.c.l.b16 %v351
    %v1195 = vunpack.c.h.b16 %v351
    %v1196 = vunpack.c.l.b16 %v352
    %v1197 = vunpack.c.h.b16 %v352
    %v1198 = vunpack.c.l.b16 %v353
    %v1199 = vunpack.c.h.b16 %v353
    %v1200 = vunpack.c.l.b16 %v354
    %v1201 = vunpack.c.h.b16 %v354
    %v1202 = vunpack.c.l.b16 %v355
    %v1203 = vunpack.c.h.b16 %v355
    %v1204 = vunpack.c.l.b16 %v356
    %v1205 = vunpack.c.h.b16 %v356
    %v1206 = vunpack.c.l.b16 %v357
    %v1207 = vunpack.c.h.b16 %v357
    %v1208 = vunpack.c.l.b16 %v358
    %v1209 = vunpack.c.h.b16 %v358
    %v1210 = vunpack.c.l.b16 %v359
    %v1211 = vunpack.c.h.b16 %v359
    %v1212 = vunpack.c.l.b16 %v360
    %v1213 = vunpack.c.h.b16 %v360
    %v1214 = vunpack.c.l.b16 %v361
    %v1215 = vunpack.c.h.b16 %v361
    %v1216 = vunpack.c.l.b16 %v362
    %v1217 = vunpack.c.h.b16 %v362
    %v1218 = vunpack.c.l.b16 %v363
    %v1219 = vunpack.c.h.b16 %v363
    %v1220 = vunpack.c.l.b16 %v364
    %v1221 = vunpack.c.h.b16 %v364
    %v1222 = vunpack.c.l.b16 %v365
    %v1223 = vunpack.c.h.b16 %v365
    %v1224 = vunpack.c.l.b16 %v366
    %v1225 = vunpack.c.h.b16 %v366
    %v1226 = vunpack.c.l.b16 %v367
    %v1227 = vunpack.c.h.b16 %v367
    %v1228 = vunpack.c.l.b16 %v368
    %v1229 = vunpack.c.h.b16 %v368
    %v1230 = vunpack.c.l.b16 %v369
    %v1231 = vunpack.c.h.b16 %v369
    %v1232 = vunpack.c.l.b16 %v370
    %v1233 = vunpack.c.h.b16 %v370
    %v1234 = vunpack.c.l.b16 %v371
    %v1235 = vunpack.c.h.b16 %v371
    %v1236 = vunpack.c.l.b16 %v372
    %v1237 = vunpack.c.h.b16 %v372
    %v1238 = vunpack.c.l.b16 %v373
    %v1239 = vunpack.c.h.b16 %v373
    %v1240 = vunpack.c.l.b16 %v374
    %v1241 = vunpack.c.h.b16 %v374
    %v1242 = vunpack.c.l.b16 %v375
    %v1243 = vunpack.c.h.b16 %v375
    %v1244 = vunpack.c.l.b16 %v376
    %v1245 = vunpack.c.h.b16 %v376
    %v1246 = vunpack.c.l.b16 %v377
    %v1247 = vunpack.c.h.b16 %v377
    %v1248 = vunpack.c.l.b16 %v378
    %v1249 = vunpack.c.h.b16 %v378
    %v1250 = vunpack.c.l.b16 %v379
    %v1251 = vunpack.c.h.b16 %v379
    %v1252 = vunpack.c.l.b16 %v380
    %v1253 = vunpack.c.h.b16 %v380
    %v1254 = vunpack.c.l.b16 %v381
    %v1255 = vunpack.c.h.b16 %v381
    %v1256 = vunpack.c.l.b16 %v382
    %v1257 = vunpack.c.h.b16 %v382
    %v1258 = vunpack.c.l.b16 %v383
    %v1259 = vunpack.c.h.b16 %v383
    %v1260 = vunpack.c.l.b16 %v384
    %v1261 = vunpack.c.h.b16 %v384
    %v1262 = vunpack.c.l.b16 %v385
    %v1263 = vunpack.c.h.b16 %v385
    %v1264 = vunpack.c.l.b16 %v386
    %v1265 = vunpack.c.h.b16 %v386
    %v1266 = vunpack.c.l.b16 %v387
    %v1267 = vunpack.c.h.b16 %v387
    %v1268 = vunpack.c.l.b16 %v388
    %v1269 = vunpack.c.h.b16 %v388
    %v1270 = vunpack.c.l.b16 %v389
    %v1271 = vunpack.c.h.b16 %v389
    %v1272 = vunpack.c.l.b16 %v390
    %v1273 = vunpack.c.h.b16 %v390
    %v1274 = vunpack.c.l.b16 %v391
    %v1275 = vunpack.c.h.b16 %v391
    %v1276 = vunpack.c.l.b16 %v392
    %v1277 = vunpack.c.h.b16 %v392
    %v1278 = vunpack.c.l.b16 %v393
    %v1279 = vunpack.c.h.b16 %v393
    %v1280 = vunpack.c.l.b16 %v394
    %v1281 = vunpack.c.h.b16 %v394
    %v1282 = vunpack.c.l.b16 %v395
    %v1283 = vunpack.c.h.b16 %v395
    %v1284 = vunpack.c.l.b16 %v396
    %v1285 = vunpack.c.h.b16 %v396
    %v1286 = vunpack.c.l.b16 %v397
    %v1287 = vunpack.c.h.b16 %v397
    %v1288 = vunpack.c.l.b16 %v398
    %v1289 = vunpack.c.h.b16 %v398
    %v1290 = vunpack.c.l.b16 %v399
    %v1291 = vunpack.c.h.b16 %v399
    %v1292 = vunpack.c.l.b16 %v400
    %v1293 = vunpack.c.h.b16 %v400
    %v1294 = vunpack.c.l.b16 %v401
    %v1295 = vunpack.c.h.b16 %v401
    %v1296 = vunpack.c.l.b16 %v402
    %v1297 = vunpack.c.h.b16 %v402
    %v1298 = vunpack.c.l.b16 %v403
    %v1299 = vunpack.c.h.b16 %v403
    %v1300 = vpack.c.b16 %v730, %v724
    %v1301 = vpack.c.b16 %v731, %v725
    %v1302 = vpack.c.b16 %v732, %v726
    %v1303 = vpack.c.b16 %v733, %v727
    %v1304 = vpack.c.b16 %v734, %v728
    %v1305 = vpack.c.b16 %v735, %v729
    %v1306 = vpack.c.b16 %v742, %v736
    %v1307 = vpack.c.b16 %v743, %v737
    %v1308 = vpack.c.b16 %v744, %v738
    %v1309 = vpack.c.b16 %v745, %v739
    %v1310 = vpack.c.b16 %v746, %v740
    %v1311 = vpack.c.b16 %v747, %v741
    %v1312 = vpack.c.b16 %v754, %v748
    %v1313 = vpack.c.b16 %v755, %v749
    %v1314 = vpack.c.b16 %v756, %v750
    %v1315 = vpack.c.b16 %v757, %v751
    %v1316 = vpack.c.b16 %v758, %v752
    %v1317 = vpack.c.b16 %v759, %v753
    %v1318 = vpack.c.b16 %v766, %v760
    %v1319 = vpack.c.b16 %v767, %v761
    %v1320 = vpack.c.b16 %v768, %v762
    %v1321 = vpack.c.b16 %v769, %v763
    %v1322 = vpack.c.b16 %v770, %v764
    %v1323 = vpack.c.b16 %v771, %v765
    %v1324 = vpack.c.b16 %v778, %v772
    %v1325 = vpack.c.b16 %v779, %v773
    %v1326 = vpack.c.b16 %v780, %v774
    %v1327 = vpack.c.b16 %v781, %v775
    %v1328 = vpack.c.b16 %v782, %v776
    %v1329 = vpack.c.b16 %v783, %v777
    %v1330 = vpack.c.b16 %v790, %v784
    %v1331 = vpack.c.b16 %v791, %v785
    %v1332 = vpack.c.b16 %v792, %v786
    %v1333 = vpack.c.b16 %v793, %v787
    %v1334 = vpack.c.b16 %v794, %v788
    %v1335 = vpack.c.b16 %v795, %v789
    %v1336 = vpack.c.b16 %v802, %v796
    %v1337 = vpack.c.b16 %v803, %v797
    %v1338 = vpack.c.b16 %v804, %v798
    %v1339 = vpack.c.b16 %v805, %v799
    %v1340 = vpack.c.b16 %v806, %v800
    %v1341 = vpack.c.b16 %v807, %v801
    %v1342 = vpack.c.b16 %v814, %v808
    %v1343 = vpack.c.b16 %v815, %v809
    %v1344 = vpack.c.b16 %v816, %v810
    %v1345 = vpack.c.b16 %v817, %v811
    %v1346 = vpack.c.b16 %v818, %v812
    %v1347 = vpack.c.b16 %v819, %v813
    %v1348 = vpack.c.b16 %v826, %v820
    %v1349 = vpack.c.b16 %v827, %v821
    %v1350 = vpack.c.b16 %v828, %v822
    %v1351 = vpack.c.b16 %v829, %v823
    %v1352 = vpack.c.b16 %v830, %v824
    %v1353 = vpack.c.b16 %v831, %v825
    %v1354 = vpack.c.b16 %v838, %v832
    %v1355 = vpack.c.b16 %v839, %v833
    %v1356 = vpack.c.b16 %v840, %v834
    %v1357 = vpack.c.b16 %v841, %v835
    %v1358 = vpack.c.b16 %v842, %v836
    %v1359 = vpack.c.b16 %v843, %v837
    %v1360 = vpack.c.b16 %v850, %v844
    %v1361 = vpack.c.b16 %v851, %v845
    %v1362 = vpack.c.b16 %v852, %v846
    %v1363 = vpack.c.b16 %v853, %v847
    %v1364 = vpack.c.b16 %v854, %v848
    %v1365 = vpack.c.b16 %v855, %v849
    %v1366 = vpack.c.b16 %v862, %v856
    %v1367 = vpack.c.b16 %v863, %v857
    %v1368 = vpack.c.b16 %v864, %v858
    %v1369 = vpack.c.b16 %v865, %v859
    %v1370 = vpack.c.b16 %v866, %v860
    %v1371 = vpack.c.b16 %v867, %v861
    %v1372 = vpack.c.b16 %v874, %v868
    %v1373 = vpack.c.b16 %v875, %v869
    %v1374 = vpack.c.b16 %v876, %v870
    %v1375 = vpack.c.b16 %v877, %v871
    %v1376 = vpack.c.b16 %v878, %v872
    %v1377 = vpack.c.b16 %v879, %v873
    %v1378 = vpack.c.b16 %v886, %v880
    %v1379 = vpack.c.b16 %v887, %v881
    %v1380 = vpack.c.b16 %v888, %v882
    %v1381 = vpack.c.b16 %v889, %v883
    %v1382 = vpack.c.b16 %v890, %v884
    %v1383 = vpack.c.b16 %v891, %v885
    %v1384 = vpack.c.b16 %v898, %v892
    %v1385 = vpack.c.b16 %v899, %v893
    %v1386 = vpack.c.b16 %v900, %v894
    %v1387 = vpack.c.b16 %v901, %v895
    %v1388 = vpack.c.b16 %v902, %v896
    %v1389 = vpack.c.b16 %v903, %v897
    %v1390 = vpack.c.b16 %v910, %v904
    %v1391 = vpack.c.b16 %v911, %v905
    %v1392 = vpack.c.b16 %v912, %v906
    %v1393 = vpack.c.b16 %v913, %v907
    %v1394 = vpack.c.b16 %v914, %v908
    %v1395 = vpack.c.b16 %v915, %v909
    %v1396 = vpack.c.b16 %v922, %v916
    %v1397 = vpack.c.b16 %v923, %v917
    %v1398 = vpack.c.b16 %v924, %v918
    %v1399 = vpack.c.b16 %v925, %v919
    %v1400 = vpack.c.b16 %v926, %v920
    %v1401 = vpack.c.b16 %v927, %v921
    %v1402 = vpack.c.b16 %v934, %v928
    %v1403 = vpack.c.b16 %v935, %v929
    %v1404 = vpack.c.b16 %v936, %v930
    %v1405 = vpack.c.b16 %v937, %v931
    %v1406 = vpack.c.b16 %v938, %v932
    %v1407 = vpack.c.b16 %v939, %v933
    %v1408 = vpack.c.b16 %v946, %v940
    %v1409 = vpack.c.b16 %v947, %v941
    %v1410 = vpack.c.b16 %v948, %v942
    %v1411 = vpack.c.b16 %v949, %v943
    %v1412 = vpack.c.b16 %v950, %v944
    %v1413 = vpack.c.b16 %v951, %v945
    %v1414 = vpack.c.b16 %v958, %v952
    %v1415 = vpack.c.b16 %v959, %v953
    %v1416 = vpack.c.b16 %v960, %v954
    %v1417 = vpack.c.b16 %v961, %v955
    %v1418 = vpack.c.b16 %v962, %v956
    %v1419 = vpack.c.b16 %v963, %v957
    %v1420 = vpack.c.b16 %v970, %v964
    %v1421 = vpack.c.b16 %v971, %v965
    %v1422 = vpack.c.b16 %v972, %v966
    %v1423 = vpack.c.b16 %v973, %v967
    %v1424 = vpack.c.b16 %v974, %v968
    %v1425 = vpack.c.b16 %v975, %v969
    %v1426 = vpack.c.b16 %v982, %v976
    %v1427 = vpack.c.b16 %v983, %v977
    %v1428 = vpack.c.b16 %v984, %v978
    %v1429 = vpack.c.b16 %v985, %v979
    %v1430 = vpack.c.b16 %v986, %v980
    %v1431 = vpack.c.b16 %v987, %v981
    %v1432 = vpack.c.b16 %v994, %v988
    %v1433 = vpack.c.b16 %v995, %v989
    %v1434 = vpack.c.b16 %v996, %v990
    %v1435 = vpack.c.b16 %v997, %v991
    %v1436 = vpack.c.b16 %v998, %v992
    %v1437 = vpack.c.b16 %v999, %v993
    %v1438 = vpack.c.b16 %v1006, %v1000
    %v1439 = vpack.c.b16 %v1007, %v1001
    %v1440 = vpack.c.b16 %v1008, %v1002
    %v1441 = vpack.c.b16 %v1009, %v1003
    %v1442 = vpack.c.b16 %v1010, %v1004
    %v1443 = vpack.c.b16 %v1011, %v1005
    %v1444 = vpack.c.b16 %v1018, %v1012
    %v1445 = vpack.c.b16 %v1019, %v1013
    %v1446 = vpack.c.b16 %v1020, %v1014
    %v1447 = vpack.c.b16 %v1021, %v1015
    %v1448 = vpack.c.b16 %v1022, %v1016
    %v1449 = vpack.c.b16 %v1023, %v1017
    %v1450 = vpack.c.b16 %v1030, %v1024
    %v1451 = vpack.c.b16 %v1031, %v1025
    %v1452 = vpack.c.b16 %v1032, %v1026
    %v1453 = vpack.c.b16 %v1033, %v1027
    %v1454 = vpack.c.b16 %v1034, %v1028
    %v1455 = vpack.c.b16 %v1035, %v1029
    %v1456 = vpack.c.b16 %v1042, %v1036
    %v1457 = vpack.c.b16 %v1043, %v1037
    %v1458 = vpack.c.b16 %v1044, %v1038
    %v1459 = vpack.c.b16 %v1045, %v1039
    %v1460 = vpack.c.b16 %v1046, %v1040
    %v1461 = vpack.c.b16 %v1047, %v1041
    %v1462 = vpack.c.b16 %v1054, %v1048
    %v1463 = vpack.c.b16 %v1055, %v1049
    %v1464 = vpack.c.b16 %v1056, %v1050
    %v1465 = vpack.c.b16 %v1057, %v1051
    %v1466 = vpack.c.b16 %v1058, %v1052
    %v1467 = vpack.c.b16 %v1059, %v1053
    %v1468 = vpack.c.b16 %v1066, %v1060
    %v1469 = vpack.c.b16 %v1067, %v1061
    %v1470 = vpack.c.b16 %v1068, %v1062
    %v1471 = vpack.c.b16 %v1069, %v1063
    %v1472 = vpack.c.b16 %v1070, %v1064
    %v1473 = vpack.c.b16 %v1071, %v1065
    %v1474 = vpack.c.b16 %v1078, %v1072
    %v1475 = vpack.c.b16 %v1079, %v1073
    %v1476 = vpack.c.b16 %v1080, %v1074
    %v1477 = vpack.c.b16 %v1081, %v1075
    %v1478 = vpack.c.b16 %v1082, %v1076
    %v1479 = vpack.c.b16 %v1083, %v1077
    %v1480 = vpack.c.b16 %v1090, %v1084
    %v1481 = vpack.c.b16 %v1091, %v1085
    %v1482 = vpack.c.b16 %v1092, %v1086
    %v1483 = vpack.c.b16 %v1093, %v1087
    %v1484 = vpack.c.b16 %v1094, %v1088
    %v1485 = vpack.c.b16 %v1095, %v1089
    %v1486 = vpack.c.b16 %v1102, %v1096
    %v1487 = vpack.c.b16 %v1103, %v1097
    %v1488 = vpack.c.b16 %v1104, %v1098
    %v1489 = vpack.c.b16 %v1105, %v1099
    %v1490 = vpack.c.b16 %v1106, %v1100
    %v1491 = vpack.c.b16 %v1107, %v1101
    %v1492 = vpack.c.b16 %v1114, %v1108
    %v1493 = vpack.c.b16 %v1115, %v1109
    %v1494 = vpack.c.b16 %v1116, %v1110
    %v1495 = vpack.c.b16 %v1117, %v1111
    %v1496 = vpack.c.b16 %v1118, %v1112
    %v1497 = vpack.c.b16 %v1119, %v1113
    %v1498 = vpack.c.b16 %v1126, %v1120
    %v1499 = vpack.c.b16 %v1127, %v1121
    %v1500 = vpack.c.b16 %v1128, %v1122
    %v1501 = vpack.c.b16 %v1129, %v1123
    %v1502 = vpack.c.b16 %v1130, %v1124
    %v1503 = vpack.c.b16 %v1131, %v1125
    %v1504 = vpack.c.b16 %v1138, %v1132
    %v1505 = vpack.c.b16 %v1139, %v1133
    %v1506 = vpack.c.b16 %v1140, %v1134
    %v1507 = vpack.c.b16 %v1141, %v1135
    %v1508 = vpack.c.b16 %v1142, %v1136
    %v1509 = vpack.c.b16 %v1143, %v1137
    %v1510 = vpack.c.b16 %v1150, %v1144
    %v1511 = vpack.c.b16 %v1151, %v1145
    %v1512 = vpack.c.b16 %v1152, %v1146
    %v1513 = vpack.c.b16 %v1153, %v1147
    %v1514 = vpack.c.b16 %v1154, %v1148
    %v1515 = vpack.c.b16 %v1155, %v1149
    %v1516 = vpack.c.b16 %v1162, %v1156
    %v1517 = vpack.c.b16 %v1163, %v1157
    %v1518 = vpack.c.b16 %v1164, %v1158
    %v1519 = vpack.c.b16 %v1165, %v1159
    %v1520 = vpack.c.b16 %v1166, %v1160
    %v1521 = vpack.c.b16 %v1167, %v1161
    %v1522 = vpack.c.b16 %v1174, %v1168
    %v1523 = vpack.c.b16 %v1175, %v1169
    %v1524 = vpack.c.b16 %v1176, %v1170
    %v1525 = vpack.c.b16 %v1177, %v1171
    %v1526 = vpack.c.b16 %v1178, %v1172
    %v1527 = vpack.c.b16 %v1179, %v1173
    %v1528 = vpack.c.b16 %v1186, %v1180
    %v1529 = vpack.c.b16 %v1187, %v1181
    %v1530 = vpack.c.b16 %v1188, %v1182
    %v1531 = vpack.c.b16 %v1189, %v1183
    %v1532 = vpack.c.b16 %v1190, %v1184
    %v1533 = vpack.c.b16 %v1191, %v1185
    %v1534 = vpack.c.b16 %v1198, %v1192
    %v1535 = vpack.c.b16 %v1199, %v1193
    %v1536 = vpack.c.b16 %v1200, %v1194
    %v1537 = vpack.c.b16 %v1201, %v1195
    %v1538 = vpack.c.b16 %v1202, %v1196
    %v1539 = vpack.c.b16 %v1203, %v1197
    %v1540 = vpack.c.b16 %v1210, %v1204
    %v1541 = vpack.c.b16 %v1211, %v1205
    %v1542 = vpack.c.b16 %v1212, %v1206
    %v1543 = vpack.c.b16 %v1213, %v1207
    %v1544 = vpack.c.b16 %v1214, %v1208
    %v1545 = vpack.c.b16 %v1215, %v1209
    %v1546 = vpack.c.b16 %v1222, %v1216
    %v1547 = vpack.c.b16 %v1223, %v1217
    %v1548 = vpack.c.b16 %v1224, %v1218
    %v1549 = vpack.c.b16 %v1225, %v1219
    %v1550 = vpack.c.b16 %v1226, %v1220
    %v1551 = vpack.c.b16 %v1227, %v1221
    %v1552 = vpack.c.b16 %v1234, %v1228
    %v1553 = vpack.c.b16 %v1235, %v1229
    %v1554 = vpack.c.b16 %v1236, %v1230
    %v1555 = vpack.c.b16 %v1237, %v1231
    %v1556 = vpack.c.b16 %v1238, %v1232
    %v1557 = vpack.c.b16 %v1239, %v1233
    %v1558 = vpack.c.b16 %v1246, %v1240
    %v1559 = vpack.c.b16 %v1247, %v1241
    %v1560 = vpack.c.b16 %v1248, %v1242
    %v1561 = vpack.c.b16 %v1249, %v1243
    %v1562 = vpack.c.b16 %v1250, %v1244
    %v1563 = vpack.c.b16 %v1251, %v1245
    %v1564 = vpack.c.b16 %v1258, %v1252
    %v1565 = vpack.c.b16 %v1259, %v1253
    %v1566 = vpack.c.b16 %v1260, %v1254
    %v1567 = vpack.c.b16 %v1261, %v1255
    %v1568 = vpack.c.b16 %v1262, %v1256
    %v1569 = vpack.c.b16 %v1263, %v1257
    %v1570 = vpack.c.b16 %v1270, %v1264
    %v1571 = vpack.c.b16 %v1271, %v1265
    %v1572 = vpack.c.b16 %v1272, %v1266
    %v1573 = vpack.c.b16 %v1273, %v1267
    %v1574 = vpack.c.b16 %v1274, %v1268
    %v1575 = vpack.c.b16 %v1275, %v1269
    %v1576 = vpack.c.b16 %v1282, %v1276
    %v1577 = vpack.c.b16 %v1283, %v1277
    %v1578 = vpack.c.b16 %v1284, %v1278
    %v1579 = vpack.c.b16 %v1285, %v1279
    %v1580 = vpack.c.b16 %v1286, %v1280
    %v1581 = vpack.c.b16 %v1287, %v1281
    %v1582 = vpack.c.b16 %v1294, %v1288
    %v1583 = vpack.c.b16 %v1295, %v1289
    %v1584 = vpack.c.b16 %v1296, %v1290
    %v1585 = vpack.c.b16 %v1297, %v1291
    %v1586 = vpack.c.b16 %v1298, %v1292
    %v1587 = vpack.c.b16 %v1299, %v1293
    %1876 = vmatprep.subr.bf16.mxu0 %v1343
    %1877 = vmatpush1.bf16.msra.mxu0 %v1342
    %1878 = vmatprep.subr.bf16.mxu0 %v1337
    %1879 = vmatpush1.bf16.msra.mxu0 %v1336
    %1880 = vmatprep.subr.bf16.mxu0 %v1331
    %1881 = vmatpush1.bf16.msra.mxu0 %v1330
    %1882 = vmatprep.subr.bf16.mxu0 %v1325
    %1883 = vmatpush1.bf16.msra.mxu0 %v1324
    %1884 = vmatprep.subr.bf16.mxu0 %v1319
    %1885 = vmatpush1.bf16.msra.mxu0 %v1318
    %1886 = vmatprep.subr.bf16.mxu0 %v1313
    %1887 = vmatpush1.bf16.msra.mxu0 %v1312
    %1888 = vmatprep.subr.bf16.mxu0 %v1307
    %1889 = vmatpush1.bf16.msra.mxu0 %v1306
    %1890 = vmatprep.subr.bf16.mxu0 %v1301
    %1891 = vmatpush1.bf16.msra.mxu0 %v1300
    %1892 = vmatprep.subr.bf16.mxu0 %v1391
    %1893 = vmatpush2.bf16.msra.mxu0 %v1390
    %1894 = vmatprep.subr.bf16.mxu0 %v1385
    %1895 = vmatpush2.bf16.msra.mxu0 %v1384
    %1896 = vmatprep.subr.bf16.mxu0 %v1379
    %1897 = vmatpush2.bf16.msra.mxu0 %v1378
    %1898 = vmatprep.subr.bf16.mxu0 %v1373
    %1899 = vmatpush2.bf16.msra.mxu0 %v1372
    %1900 = vmatprep.subr.bf16.mxu0 %v1367
    %1901 = vmatpush2.bf16.msra.mxu0 %v1366
    %1902 = vmatprep.subr.bf16.mxu0 %v1361
    %1903 = vmatpush2.bf16.msra.mxu0 %v1360
    %1904 = vmatprep.subr.bf16.mxu0 %v1355
    %1905 = vmatpush2.bf16.msra.mxu0 %v1354
    %1906 = vmatprep.subr.bf16.mxu0 %v1349
    %1907 = vmatpush2.bf16.msra.mxu0 %v1348
    %1908 = vmatprep.mubr.bf16.mxu0 %v105
    %1909 = vmatmul.mubr.bf16.gmra.mxu0 %v104
    %v1910 = vpop.f32.mrf.mxu0
    %v1911 = vadd.f32 %v409, %v1910
    %v1912 = vpop.f32.mrf.mxu0
    %v1913 = vadd.f32 %v413, %v1912
    %v1914 = vpop.f32.mrf.mxu0
    %v1915 = vadd.f32 %v409, %v1914
    %v1916 = vpop.f32.mrf.mxu0
    %v1917 = vadd.f32 %v413, %v1916
    %1918 = vmatprep.mubr.bf16.mxu0 %v111
    %1919 = vmatmul.mubr.bf16.gmra.mxu0 %v110
    %v1920 = vpop.f32.mrf.mxu0
    %v1921 = vadd.f32 %v409, %v1920
    %v1922 = vpop.f32.mrf.mxu0
    %v1923 = vadd.f32 %v413, %v1922
    %v1924 = vpop.f32.mrf.mxu0
    %v1925 = vpop.f32.mrf.mxu0
    %1926 = vdwg.mxu0
    %1927 = vmatprep.subr.bf16.mxu0 %v1439
    %1928 = vmatpush1.bf16.msra.mxu0 %v1438
    %1929 = vmatprep.subr.bf16.mxu0 %v1433
    %1930 = vmatpush1.bf16.msra.mxu0 %v1432
    %1931 = vmatprep.subr.bf16.mxu0 %v1427
    %1932 = vmatpush1.bf16.msra.mxu0 %v1426
    %1933 = vmatprep.subr.bf16.mxu0 %v1421
    %1934 = vmatpush1.bf16.msra.mxu0 %v1420
    %1935 = vmatprep.subr.bf16.mxu0 %v1415
    %1936 = vmatpush1.bf16.msra.mxu0 %v1414
    %1937 = vmatprep.subr.bf16.mxu0 %v1409
    %1938 = vmatpush1.bf16.msra.mxu0 %v1408
    %1939 = vmatprep.subr.bf16.mxu0 %v1403
    %1940 = vmatpush1.bf16.msra.mxu0 %v1402
    %1941 = vmatprep.subr.bf16.mxu0 %v1397
    %1942 = vmatpush1.bf16.msra.mxu0 %v1396
    %1943 = vmatprep.subr.bf16.mxu0 %v1487
    %1944 = vmatpush2.bf16.msra.mxu0 %v1486
    %1945 = vmatprep.subr.bf16.mxu0 %v1481
    %1946 = vmatpush2.bf16.msra.mxu0 %v1480
    %1947 = vmatprep.subr.bf16.mxu0 %v1475
    %1948 = vmatpush2.bf16.msra.mxu0 %v1474
    %1949 = vmatprep.subr.bf16.mxu0 %v1469
    %1950 = vmatpush2.bf16.msra.mxu0 %v1468
    %1951 = vmatprep.subr.bf16.mxu0 %v1463
    %1952 = vmatpush2.bf16.msra.mxu0 %v1462
    %1953 = vmatprep.subr.bf16.mxu0 %v1457
    %1954 = vmatpush2.bf16.msra.mxu0 %v1456
    %1955 = vmatprep.subr.bf16.mxu0 %v1451
    %1956 = vmatpush2.bf16.msra.mxu0 %v1450
    %1957 = vmatprep.subr.bf16.mxu0 %v1445
    %1958 = vmatpush2.bf16.msra.mxu0 %v1444
    %1959 = vmatprep.mubr.bf16.mxu0 %v107
    %1960 = vmatmul.mubr.bf16.gmra.mxu0 %v106
    %v1961 = vpop.f32.mrf.mxu0
    %v1962 = vadd.f32 %v1911, %v1961
    %v1963 = vpop.f32.mrf.mxu0
    %v1964 = vadd.f32 %v1913, %v1963
    %v1965 = vpop.f32.mrf.mxu0
    %v1966 = vadd.f32 %v1915, %v1965
    %v1967 = vpop.f32.mrf.mxu0
    %v1968 = vadd.f32 %v1917, %v1967
    %1969 = vmatprep.mubr.bf16.mxu0 %v113
    %1970 = vmatmul.mubr.bf16.gmra.mxu0 %v112
    %v1971 = vpop.f32.mrf.mxu0
    %v1972 = vadd.f32 %v1921, %v1971
    %v1973 = vpop.f32.mrf.mxu0
    %v1974 = vadd.f32 %v1923, %v1973
    %v1975 = vpop.f32.mrf.mxu0
    %v1976 = vpop.f32.mrf.mxu0
    %1977 = vdwg.mxu0
    %1978 = vmatprep.subr.bf16.mxu0 %v1535
    %1979 = vmatpush1.bf16.msra.mxu0 %v1534
    %1980 = vmatprep.subr.bf16.mxu0 %v1529
    %1981 = vmatpush1.bf16.msra.mxu0 %v1528
    %1982 = vmatprep.subr.bf16.mxu0 %v1523
    %1983 = vmatpush1.bf16.msra.mxu0 %v1522
    %1984 = vmatprep.subr.bf16.mxu0 %v1517
    %1985 = vmatpush1.bf16.msra.mxu0 %v1516
    %1986 = vmatprep.subr.bf16.mxu0 %v1511
    %1987 = vmatpush1.bf16.msra.mxu0 %v1510
    %1988 = vmatprep.subr.bf16.mxu0 %v1505
    %1989 = vmatpush1.bf16.msra.mxu0 %v1504
    %1990 = vmatprep.subr.bf16.mxu0 %v1499
    %1991 = vmatpush1.bf16.msra.mxu0 %v1498
    %1992 = vmatprep.subr.bf16.mxu0 %v1493
    %1993 = vmatpush1.bf16.msra.mxu0 %v1492
    %1994 = vmatprep.subr.bf16.mxu0 %v1583
    %1995 = vmatpush2.bf16.msra.mxu0 %v1582
    %1996 = vmatprep.subr.bf16.mxu0 %v1577
    %1997 = vmatpush2.bf16.msra.mxu0 %v1576
    %1998 = vmatprep.subr.bf16.mxu0 %v1571
    %1999 = vmatpush2.bf16.msra.mxu0 %v1570
    %2000 = vmatprep.subr.bf16.mxu0 %v1565
    %2001 = vmatpush2.bf16.msra.mxu0 %v1564
    %2002 = vmatprep.subr.bf16.mxu0 %v1559
    %2003 = vmatpush2.bf16.msra.mxu0 %v1558
    %2004 = vmatprep.subr.bf16.mxu0 %v1553
    %2005 = vmatpush2.bf16.msra.mxu0 %v1552
    %2006 = vmatprep.subr.bf16.mxu0 %v1547
    %2007 = vmatpush2.bf16.msra.mxu0 %v1546
    %2008 = vmatprep.subr.bf16.mxu0 %v1541
    %2009 = vmatpush2.bf16.msra.mxu0 %v1540
    %2010 = vmatprep.mubr.bf16.mxu0 %v109
    %2011 = vmatmul.mubr.bf16.gmra.mxu0 %v108
    %v2012 = vpop.f32.mrf.mxu0
    %v2013 = vadd.f32 %v1962, %v2012
    %v2014 = vpop.f32.mrf.mxu0
    %v2015 = vadd.f32 %v1964, %v2014
    %v2016 = vpop.f32.mrf.mxu0
    %v2017 = vadd.f32 %v1966, %v2016
    %v2018 = vpop.f32.mrf.mxu0
    %v2019 = vadd.f32 %v1968, %v2018
    %2020 = vmatprep.mubr.bf16.mxu0 %v115
    %2021 = vmatmul.mubr.bf16.gmra.mxu0 %v114
    %v2022 = vpop.f32.mrf.mxu0
    %v2023 = vadd.f32 %v1972, %v2022
    %v2024 = vpop.f32.mrf.mxu0
    %v2025 = vadd.f32 %v1974, %v2024
    %v2026 = vpop.f32.mrf.mxu0
    %v2027 = vpop.f32.mrf.mxu0
    %2028 = vdwg.mxu0
    %2029 = vmatprep.subr.bf16.mxu0 %v1345
    %2030 = vmatpush1.bf16.msra.mxu0 %v1344
    %2031 = vmatprep.subr.bf16.mxu0 %v1339
    %2032 = vmatpush1.bf16.msra.mxu0 %v1338
    %2033 = vmatprep.subr.bf16.mxu0 %v1333
    %2034 = vmatpush1.bf16.msra.mxu0 %v1332
    %2035 = vmatprep.subr.bf16.mxu0 %v1327
    %2036 = vmatpush1.bf16.msra.mxu0 %v1326
    %2037 = vmatprep.subr.bf16.mxu0 %v1321
    %2038 = vmatpush1.bf16.msra.mxu0 %v1320
    %2039 = vmatprep.subr.bf16.mxu0 %v1315
    %2040 = vmatpush1.bf16.msra.mxu0 %v1314
    %2041 = vmatprep.subr.bf16.mxu0 %v1309
    %2042 = vmatpush1.bf16.msra.mxu0 %v1308
    %2043 = vmatprep.subr.bf16.mxu0 %v1303
    %2044 = vmatpush1.bf16.msra.mxu0 %v1302
    %2045 = vmatprep.subr.bf16.mxu0 %v1393
    %2046 = vmatpush2.bf16.msra.mxu0 %v1392
    %2047 = vmatprep.subr.bf16.mxu0 %v1387
    %2048 = vmatpush2.bf16.msra.mxu0 %v1386
    %2049 = vmatprep.subr.bf16.mxu0 %v1381
    %2050 = vmatpush2.bf16.msra.mxu0 %v1380
    %2051 = vmatprep.subr.bf16.mxu0 %v1375
    %2052 = vmatpush2.bf16.msra.mxu0 %v1374
    %2053 = vmatprep.subr.bf16.mxu0 %v1369
    %2054 = vmatpush2.bf16.msra.mxu0 %v1368
    %2055 = vmatprep.subr.bf16.mxu0 %v1363
    %2056 = vmatpush2.bf16.msra.mxu0 %v1362
    %2057 = vmatprep.subr.bf16.mxu0 %v1357
    %2058 = vmatpush2.bf16.msra.mxu0 %v1356
    %2059 = vmatprep.subr.bf16.mxu0 %v1351
    %2060 = vmatpush2.bf16.msra.mxu0 %v1350
    %2061 = vmatprep.mubr.bf16.mxu0 %v105
    %2062 = vmatmul.mubr.bf16.gmra.mxu0 %v104
    %v2063 = vpop.f32.mrf.mxu0
    %v2064 = vadd.f32 %v417, %v2063
    %v2065 = vpop.f32.mrf.mxu0
    %v2066 = vadd.f32 %v421, %v2065
    %v2067 = vpop.f32.mrf.mxu0
    %v2068 = vadd.f32 %v417, %v2067
    %v2069 = vpop.f32.mrf.mxu0
    %v2070 = vadd.f32 %v421, %v2069
    %2071 = vmatprep.mubr.bf16.mxu0 %v111
    %2072 = vmatmul.mubr.bf16.gmra.mxu0 %v110
    %v2073 = vpop.f32.mrf.mxu0
    %v2074 = vadd.f32 %v417, %v2073
    %v2075 = vpop.f32.mrf.mxu0
    %v2076 = vadd.f32 %v421, %v2075
    %v2077 = vpop.f32.mrf.mxu0
    %v2078 = vpop.f32.mrf.mxu0
    %2079 = vdwg.mxu0
    %2080 = vmatprep.subr.bf16.mxu0 %v1441
    %2081 = vmatpush1.bf16.msra.mxu0 %v1440
    %2082 = vmatprep.subr.bf16.mxu0 %v1435
    %2083 = vmatpush1.bf16.msra.mxu0 %v1434
    %2084 = vmatprep.subr.bf16.mxu0 %v1429
    %2085 = vmatpush1.bf16.msra.mxu0 %v1428
    %2086 = vmatprep.subr.bf16.mxu0 %v1423
    %2087 = vmatpush1.bf16.msra.mxu0 %v1422
    %2088 = vmatprep.subr.bf16.mxu0 %v1417
    %2089 = vmatpush1.bf16.msra.mxu0 %v1416
    %2090 = vmatprep.subr.bf16.mxu0 %v1411
    %2091 = vmatpush1.bf16.msra.mxu0 %v1410
    %2092 = vmatprep.subr.bf16.mxu0 %v1405
    %2093 = vmatpush1.bf16.msra.mxu0 %v1404
    %2094 = vmatprep.subr.bf16.mxu0 %v1399
    %2095 = vmatpush1.bf16.msra.mxu0 %v1398
    %2096 = vmatprep.subr.bf16.mxu0 %v1489
    %2097 = vmatpush2.bf16.msra.mxu0 %v1488
    %2098 = vmatprep.subr.bf16.mxu0 %v1483
    %2099 = vmatpush2.bf16.msra.mxu0 %v1482
    %2100 = vmatprep.subr.bf16.mxu0 %v1477
    %2101 = vmatpush2.bf16.msra.mxu0 %v1476
    %2102 = vmatprep.subr.bf16.mxu0 %v1471
    %2103 = vmatpush2.bf16.msra.mxu0 %v1470
    %2104 = vmatprep.subr.bf16.mxu0 %v1465
    %2105 = vmatpush2.bf16.msra.mxu0 %v1464
    %2106 = vmatprep.subr.bf16.mxu0 %v1459
    %2107 = vmatpush2.bf16.msra.mxu0 %v1458
    %2108 = vmatprep.subr.bf16.mxu0 %v1453
    %2109 = vmatpush2.bf16.msra.mxu0 %v1452
    %2110 = vmatprep.subr.bf16.mxu0 %v1447
    %2111 = vmatpush2.bf16.msra.mxu0 %v1446
    %2112 = vmatprep.mubr.bf16.mxu0 %v107
    %2113 = vmatmul.mubr.bf16.gmra.mxu0 %v106
    %v2114 = vpop.f32.mrf.mxu0
    %v2115 = vadd.f32 %v2064, %v2114
    %v2116 = vpop.f32.mrf.mxu0
    %v2117 = vadd.f32 %v2066, %v2116
    %v2118 = vpop.f32.mrf.mxu0
    %v2119 = vadd.f32 %v2068, %v2118
    %v2120 = vpop.f32.mrf.mxu0
    %v2121 = vadd.f32 %v2070, %v2120
    %2122 = vmatprep.mubr.bf16.mxu0 %v113
    %2123 = vmatmul.mubr.bf16.gmra.mxu0 %v112
    %v2124 = vpop.f32.mrf.mxu0
    %v2125 = vadd.f32 %v2074, %v2124
    %v2126 = vpop.f32.mrf.mxu0
    %v2127 = vadd.f32 %v2076, %v2126
    %v2128 = vpop.f32.mrf.mxu0
    %v2129 = vpop.f32.mrf.mxu0
    %2130 = vdwg.mxu0
    %2131 = vmatprep.subr.bf16.mxu0 %v1537
    %2132 = vmatpush1.bf16.msra.mxu0 %v1536
    %2133 = vmatprep.subr.bf16.mxu0 %v1531
    %2134 = vmatpush1.bf16.msra.mxu0 %v1530
    %2135 = vmatprep.subr.bf16.mxu0 %v1525
    %2136 = vmatpush1.bf16.msra.mxu0 %v1524
    %2137 = vmatprep.subr.bf16.mxu0 %v1519
    %2138 = vmatpush1.bf16.msra.mxu0 %v1518
    %2139 = vmatprep.subr.bf16.mxu0 %v1513
    %2140 = vmatpush1.bf16.msra.mxu0 %v1512
    %2141 = vmatprep.subr.bf16.mxu0 %v1507
    %2142 = vmatpush1.bf16.msra.mxu0 %v1506
    %2143 = vmatprep.subr.bf16.mxu0 %v1501
    %2144 = vmatpush1.bf16.msra.mxu0 %v1500
    %2145 = vmatprep.subr.bf16.mxu0 %v1495
    %2146 = vmatpush1.bf16.msra.mxu0 %v1494
    %2147 = vmatprep.subr.bf16.mxu0 %v1585
    %2148 = vmatpush2.bf16.msra.mxu0 %v1584
    %2149 = vmatprep.subr.bf16.mxu0 %v1579
    %2150 = vmatpush2.bf16.msra.mxu0 %v1578
    %2151 = vmatprep.subr.bf16.mxu0 %v1573
    %2152 = vmatpush2.bf16.msra.mxu0 %v1572
    %2153 = vmatprep.subr.bf16.mxu0 %v1567
    %2154 = vmatpush2.bf16.msra.mxu0 %v1566
    %2155 = vmatprep.subr.bf16.mxu0 %v1561
    %2156 = vmatpush2.bf16.msra.mxu0 %v1560
    %2157 = vmatprep.subr.bf16.mxu0 %v1555
    %2158 = vmatpush2.bf16.msra.mxu0 %v1554
    %2159 = vmatprep.subr.bf16.mxu0 %v1549
    %2160 = vmatpush2.bf16.msra.mxu0 %v1548
    %2161 = vmatprep.subr.bf16.mxu0 %v1543
    %2162 = vmatpush2.bf16.msra.mxu0 %v1542
    %2163 = vmatprep.mubr.bf16.mxu0 %v109
    %2164 = vmatmul.mubr.bf16.gmra.mxu0 %v108
    %v2165 = vpop.f32.mrf.mxu0
    %v2166 = vadd.f32 %v2115, %v2165
    %v2167 = vpop.f32.mrf.mxu0
    %v2168 = vadd.f32 %v2117, %v2167
    %v2169 = vpop.f32.mrf.mxu0
    %v2170 = vadd.f32 %v2119, %v2169
    %v2171 = vpop.f32.mrf.mxu0
    %v2172 = vadd.f32 %v2121, %v2171
    %2173 = vmatprep.mubr.bf16.mxu0 %v115
    %2174 = vmatmul.mubr.bf16.gmra.mxu0 %v114
    %v2175 = vpop.f32.mrf.mxu0
    %v2176 = vadd.f32 %v2125, %v2175
    %v2177 = vpop.f32.mrf.mxu0
    %v2178 = vadd.f32 %v2127, %v2177
    %v2179 = vpop.f32.mrf.mxu0
    %v2180 = vpop.f32.mrf.mxu0
    %2181 = vdwg.mxu0
    %2182 = vmatprep.subr.bf16.mxu0 %v1347
    %2183 = vmatpush1.bf16.msra.mxu0 %v1346
    %2184 = vmatprep.subr.bf16.mxu0 %v1341
    %2185 = vmatpush1.bf16.msra.mxu0 %v1340
    %2186 = vmatprep.subr.bf16.mxu0 %v1335
    %2187 = vmatpush1.bf16.msra.mxu0 %v1334
    %2188 = vmatprep.subr.bf16.mxu0 %v1329
    %2189 = vmatpush1.bf16.msra.mxu0 %v1328
    %2190 = vmatprep.subr.bf16.mxu0 %v1323
    %2191 = vmatpush1.bf16.msra.mxu0 %v1322
    %2192 = vmatprep.subr.bf16.mxu0 %v1317
    %2193 = vmatpush1.bf16.msra.mxu0 %v1316
    %2194 = vmatprep.subr.bf16.mxu0 %v1311
    %2195 = vmatpush1.bf16.msra.mxu0 %v1310
    %2196 = vmatprep.subr.bf16.mxu0 %v1305
    %2197 = vmatpush1.bf16.msra.mxu0 %v1304
    %2198 = vmatprep.subr.bf16.mxu0 %v1395
    %2199 = vmatpush2.bf16.msra.mxu0 %v1394
    %2200 = vmatprep.subr.bf16.mxu0 %v1389
    %2201 = vmatpush2.bf16.msra.mxu0 %v1388
    %2202 = vmatprep.subr.bf16.mxu0 %v1383
    %2203 = vmatpush2.bf16.msra.mxu0 %v1382
    %2204 = vmatprep.subr.bf16.mxu0 %v1377
    %2205 = vmatpush2.bf16.msra.mxu0 %v1376
    %2206 = vmatprep.subr.bf16.mxu0 %v1371
    %2207 = vmatpush2.bf16.msra.mxu0 %v1370
    %2208 = vmatprep.subr.bf16.mxu0 %v1365
    %2209 = vmatpush2.bf16.msra.mxu0 %v1364
    %2210 = vmatprep.subr.bf16.mxu0 %v1359
    %2211 = vmatpush2.bf16.msra.mxu0 %v1358
    %2212 = vmatprep.subr.bf16.mxu0 %v1353
    %2213 = vmatpush2.bf16.msra.mxu0 %v1352
    %2214 = vmatprep.mubr.bf16.mxu0 %v105
    %2215 = vmatmul.mubr.bf16.gmra.mxu0 %v104
    %v2216 = vpop.f32.mrf.mxu0
    %v2217 = vadd.f32 %v425, %v2216
    %v2218 = vpop.f32.mrf.mxu0
    %v2219 = vadd.f32 %v429, %v2218
    %v2220 = vpop.f32.mrf.mxu0
    %v2221 = vadd.f32 %v425, %v2220
    %v2222 = vpop.f32.mrf.mxu0
    %v2223 = vadd.f32 %v429, %v2222
    %2224 = vmatprep.mubr.bf16.mxu0 %v111
    %2225 = vmatmul.mubr.bf16.gmra.mxu0 %v110
    %v2226 = vpop.f32.mrf.mxu0
    %v2227 = vadd.f32 %v425, %v2226
    %v2228 = vpop.f32.mrf.mxu0
    %v2229 = vadd.f32 %v429, %v2228
    %v2230 = vpop.f32.mrf.mxu0
    %v2231 = vpop.f32.mrf.mxu0
    %2232 = vdwg.mxu0
    %2233 = vmatprep.subr.bf16.mxu0 %v1443
    %2234 = vmatpush1.bf16.msra.mxu0 %v1442
    %2235 = vmatprep.subr.bf16.mxu0 %v1437
    %2236 = vmatpush1.bf16.msra.mxu0 %v1436
    %2237 = vmatprep.subr.bf16.mxu0 %v1431
    %2238 = vmatpush1.bf16.msra.mxu0 %v1430
    %2239 = vmatprep.subr.bf16.mxu0 %v1425
    %2240 = vmatpush1.bf16.msra.mxu0 %v1424
    %2241 = vmatprep.subr.bf16.mxu0 %v1419
    %2242 = vmatpush1.bf16.msra.mxu0 %v1418
    %2243 = vmatprep.subr.bf16.mxu0 %v1413
    %2244 = vmatpush1.bf16.msra.mxu0 %v1412
    %2245 = vmatprep.subr.bf16.mxu0 %v1407
    %2246 = vmatpush1.bf16.msra.mxu0 %v1406
    %2247 = vmatprep.subr.bf16.mxu0 %v1401
    %2248 = vmatpush1.bf16.msra.mxu0 %v1400
    %2249 = vmatprep.subr.bf16.mxu0 %v1491
    %2250 = vmatpush2.bf16.msra.mxu0 %v1490
    %2251 = vmatprep.subr.bf16.mxu0 %v1485
    %2252 = vmatpush2.bf16.msra.mxu0 %v1484
    %2253 = vmatprep.subr.bf16.mxu0 %v1479
    %2254 = vmatpush2.bf16.msra.mxu0 %v1478
    %2255 = vmatprep.subr.bf16.mxu0 %v1473
    %2256 = vmatpush2.bf16.msra.mxu0 %v1472
    %2257 = vmatprep.subr.bf16.mxu0 %v1467
    %2258 = vmatpush2.bf16.msra.mxu0 %v1466
    %2259 = vmatprep.subr.bf16.mxu0 %v1461
    %2260 = vmatpush2.bf16.msra.mxu0 %v1460
    %2261 = vmatprep.subr.bf16.mxu0 %v1455
    %2262 = vmatpush2.bf16.msra.mxu0 %v1454
    %2263 = vmatprep.subr.bf16.mxu0 %v1449
    %2264 = vmatpush2.bf16.msra.mxu0 %v1448
    %2265 = vmatprep.mubr.bf16.mxu0 %v107
    %2266 = vmatmul.mubr.bf16.gmra.mxu0 %v106
    %v2267 = vpop.f32.mrf.mxu0
    %v2268 = vadd.f32 %v2217, %v2267
    %v2269 = vpop.f32.mrf.mxu0
    %v2270 = vadd.f32 %v2219, %v2269
    %v2271 = vpop.f32.mrf.mxu0
    %v2272 = vadd.f32 %v2221, %v2271
    %v2273 = vpop.f32.mrf.mxu0
    %v2274 = vadd.f32 %v2223, %v2273
    %2275 = vmatprep.mubr.bf16.mxu0 %v113
    %2276 = vmatmul.mubr.bf16.gmra.mxu0 %v112
    %v2277 = vpop.f32.mrf.mxu0
    %v2278 = vadd.f32 %v2227, %v2277
    %v2279 = vpop.f32.mrf.mxu0
    %v2280 = vadd.f32 %v2229, %v2279
    %v2281 = vpop.f32.mrf.mxu0
    %v2282 = vpop.f32.mrf.mxu0
    %2283 = vdwg.mxu0
    %2284 = vmatprep.subr.bf16.mxu0 %v1539
    %2285 = vmatpush1.bf16.msra.mxu0 %v1538
    %2286 = vmatprep.subr.bf16.mxu0 %v1533
    %2287 = vmatpush1.bf16.msra.mxu0 %v1532
    %2288 = vmatprep.subr.bf16.mxu0 %v1527
    %2289 = vmatpush1.bf16.msra.mxu0 %v1526
    %2290 = vmatprep.subr.bf16.mxu0 %v1521
    %2291 = vmatpush1.bf16.msra.mxu0 %v1520
    %2292 = vmatprep.subr.bf16.mxu0 %v1515
    %2293 = vmatpush1.bf16.msra.mxu0 %v1514
    %2294 = vmatprep.subr.bf16.mxu0 %v1509
    %2295 = vmatpush1.bf16.msra.mxu0 %v1508
    %2296 = vmatprep.subr.bf16.mxu0 %v1503
    %2297 = vmatpush1.bf16.msra.mxu0 %v1502
    %2298 = vmatprep.subr.bf16.mxu0 %v1497
    %2299 = vmatpush1.bf16.msra.mxu0 %v1496
    %2300 = vmatprep.subr.bf16.mxu0 %v1587
    %2301 = vmatpush2.bf16.msra.mxu0 %v1586
    %2302 = vmatprep.subr.bf16.mxu0 %v1581
    %2303 = vmatpush2.bf16.msra.mxu0 %v1580
    %2304 = vmatprep.subr.bf16.mxu0 %v1575
    %2305 = vmatpush2.bf16.msra.mxu0 %v1574
    %2306 = vmatprep.subr.bf16.mxu0 %v1569
    %2307 = vmatpush2.bf16.msra.mxu0 %v1568
    %2308 = vmatprep.subr.bf16.mxu0 %v1563
    %2309 = vmatpush2.bf16.msra.mxu0 %v1562
    %2310 = vmatprep.subr.bf16.mxu0 %v1557
    %2311 = vmatpush2.bf16.msra.mxu0 %v1556
    %2312 = vmatprep.subr.bf16.mxu0 %v1551
    %2313 = vmatpush2.bf16.msra.mxu0 %v1550
    %2314 = vmatprep.subr.bf16.mxu0 %v1545
    %2315 = vmatpush2.bf16.msra.mxu0 %v1544
    %2316 = vmatprep.mubr.bf16.mxu0 %v109
    %2317 = vmatmul.mubr.bf16.gmra.mxu0 %v108
    %v2318 = vpop.f32.mrf.mxu0
    %v2319 = vadd.f32 %v2268, %v2318
    %v2320 = vpop.f32.mrf.mxu0
    %v2321 = vadd.f32 %v2270, %v2320
    %v2322 = vpop.f32.mrf.mxu0
    %v2323 = vadd.f32 %v2272, %v2322
    %v2324 = vpop.f32.mrf.mxu0
    %v2325 = vadd.f32 %v2274, %v2324
    %2326 = vmatprep.mubr.bf16.mxu0 %v115
    %2327 = vmatmul.mubr.bf16.gmra.mxu0 %v114
    %v2328 = vpop.f32.mrf.mxu0
    %v2329 = vadd.f32 %v2278, %v2328
    %v2330 = vpop.f32.mrf.mxu0
    %v2331 = vadd.f32 %v2280, %v2330
    %v2332 = vpop.f32.mrf.mxu0
    %v2333 = vpop.f32.mrf.mxu0
    %2334 = vdwg.mxu0
    %v2335 = vtanh.pop %v2013
    %v2336 = vtanh.pop %v2015
    %v2337 = vtanh.pop %v2166
    %v2338 = vtanh.pop %v2168
    %v2339 = vtanh.pop %v2319
    %v2340 = vtanh.pop %v2321
    %v2341 = vtanh.pop %v2017
    %v2342 = vtanh.pop %v2019
    %v2343 = vtanh.pop %v2170
    %v2344 = vtanh.pop %v2172
    %v2345 = vtanh.pop %v2323
    %v2346 = vtanh.pop %v2325
    %v2347 = vtanh.pop %v2023
    %v2348 = vtanh.pop %v2025
    %v2349 = vtanh.pop %v2176
    %v2350 = vtanh.pop %v2178
    %v2351 = vtanh.pop %v2329
    %v2352 = vtanh.pop %v2331
    %v2353 = vpack.c.bf16 %v2341, %v2335
    %v2354 = vpack.c.bf16 %v2342, %v2336
    %v2355 = vpack.c.bf16 %v2343, %v2337
    %v2356 = vpack.c.bf16 %v2344, %v2338
    %v2357 = vpack.c.bf16 %v2345, %v2339
    %v2358 = vpack.c.bf16 %v2346, %v2340
    %v2359 = vpack.c.bf16 %v2347, %v2347
    %v2360 = vpack.c.bf16 %v2348, %v2348
    %v2361 = vpack.c.bf16 %v2349, %v2349
    %v2362 = vpack.c.bf16 %v2350, %v2350
    %v2363 = vpack.c.bf16 %v2351, %v2351
    %v2364 = vpack.c.bf16 %v2352, %v2352
    %v2365 = vld [vmem:[#allocation8] sm:$0xf]
    %v2366 = vld [vmem:[#allocation8 + $0x4] sm:$0xf]
    %v2367 = vld [vmem:[#allocation8 + $0x8] sm:$0xf]
    %v2368 = vld [vmem:[#allocation8 + $0xc] sm:$0xf]
    %v2369 = vld [vmem:[#allocation8 + $0x10] sm:$0xf]
    %v2370 = vld [vmem:[#allocation8 + $0x14] sm:$0xf]
    %v2371 = vld [vmem:[#allocation8 + $0x18] sm:$0xf]
    %v2372 = vld [vmem:[#allocation8 + $0x1c] sm:$0xf]
    %v2373 = vld [vmem:[#allocation8 + $0x20] sm:$0xf]
    %v2374 = vld [vmem:[#allocation8 + $0x24] sm:$0xf]
    %v2375 = vld [vmem:[#allocation8 + $0x28] sm:$0xf]
    %v2376 = vld [vmem:[#allocation8 + $0x2c] sm:$0xf]
    %v2377 = vld [vmem:[#allocation8 + $0x30] sm:$0xf]
    %v2378 = vld [vmem:[#allocation8 + $0x34] sm:$0xf]
    %v2379 = vld [vmem:[#allocation8 + $0x38] sm:$0xf]
    %v2380 = vld [vmem:[#allocation8 + $0x3c] sm:$0xf]
    %v2381 = vld [vmem:[#allocation8 + $0x40] sm:$0xf]
    %v2382 = vld [vmem:[#allocation8 + $0x44] sm:$0xf]
    %v2383 = vld [vmem:[#allocation8 + $0x48] sm:$0xf]
    %v2384 = vld [vmem:[#allocation8 + $0x4c] sm:$0xf]
    %v2385 = vld [vmem:[#allocation8 + $0x50] sm:$0xf]
    %v2386 = vld [vmem:[#allocation8 + $0x54] sm:$0xf]
    %v2387 = vld [vmem:[#allocation8 + $0x58] sm:$0xf]
    %v2388 = vld [vmem:[#allocation8 + $0x5c] sm:$0xf]
    %v2389 = vld [vmem:[#allocation8 + $0x60] sm:$0xf]
    %v2390 = vld [vmem:[#allocation8 + $0x64] sm:$0xf]
    %v2391 = vld [vmem:[#allocation8 + $0x68] sm:$0xf]
    %v2392 = vld [vmem:[#allocation8 + $0x6c] sm:$0xf]
    %v2393 = vld [vmem:[#allocation8 + $0x70] sm:$0xf]
    %v2394 = vld [vmem:[#allocation8 + $0x74] sm:$0xf]
    %v2395 = vld [vmem:[#allocation8 + $0x78] sm:$0xf]
    %v2396 = vld [vmem:[#allocation8 + $0x7c] sm:$0xf]
    %v2397 = vld [vmem:[#allocation8 + $0x80] sm:$0xf]
    %v2398 = vld [vmem:[#allocation8 + $0x84] sm:$0xf]
    %v2399 = vld [vmem:[#allocation8 + $0x88] sm:$0xf]
    %v2400 = vld [vmem:[#allocation8 + $0x8c] sm:$0xf]
    %v2401 = vld [vmem:[#allocation8 + $0x90] sm:$0xf]
    %v2402 = vld [vmem:[#allocation8 + $0x94] sm:$0xf]
    %v2403 = vld [vmem:[#allocation8 + $0x98] sm:$0xf]
    %v2404 = vld [vmem:[#allocation8 + $0x9c] sm:$0xf]
    %v2405 = vld [vmem:[#allocation8 + $0xa0] sm:$0xf]
    %v2406 = vld [vmem:[#allocation8 + $0xa4] sm:$0xf]
    %v2407 = vld [vmem:[#allocation8 + $0xa8] sm:$0xf]
    %v2408 = vld [vmem:[#allocation8 + $0xac] sm:$0xf]
    %v2409 = vld [vmem:[#allocation8 + $0xb0] sm:$0xf]
    %v2410 = vld [vmem:[#allocation8 + $0xb4] sm:$0xf]
    %v2411 = vld [vmem:[#allocation8 + $0xb8] sm:$0xf]
    %v2412 = vld [vmem:[#allocation8 + $0xbc] sm:$0xf]
    %v2413 = vld [vmem:[#allocation8 + $0xc0] sm:$0xf]
    %v2414 = vld [vmem:[#allocation8 + $0xc4] sm:$0xf]
    %v2415 = vld [vmem:[#allocation8 + $0xc8] sm:$0xf]
    %v2416 = vld [vmem:[#allocation8 + $0xcc] sm:$0xf]
    %v2417 = vld [vmem:[#allocation8 + $0xd0] sm:$0xf]
    %v2418 = vld [vmem:[#allocation8 + $0xd4] sm:$0xf]
    %v2419 = vld [vmem:[#allocation8 + $0xd8] sm:$0xf]
    %v2420 = vld [vmem:[#allocation8 + $0xdc] sm:$0xf]
    %v2421 = vld [vmem:[#allocation8 + $0xe0] sm:$0xf]
    %v2422 = vld [vmem:[#allocation8 + $0xe4] sm:$0xf]
    %v2423 = vld [vmem:[#allocation8 + $0xe8] sm:$0xf]
    %v2424 = vld [vmem:[#allocation8 + $0xec] sm:$0xf]
    %v2425 = vld [vmem:[#allocation8 + $0xf0] sm:$0xf]
    %v2426 = vld [vmem:[#allocation8 + $0xf4] sm:$0xf]
    %v2427 = vld [vmem:[#allocation8 + $0xf8] sm:$0xf]
    %v2428 = vld [vmem:[#allocation8 + $0xfc] sm:$0xf]
    %v2429 = vld [vmem:[#allocation8 + $0x100] sm:$0xf]
    %v2430 = vld [vmem:[#allocation8 + $0x104] sm:$0xf]
    %v2431 = vld [vmem:[#allocation8 + $0x108] sm:$0xf]
    %v2432 = vld [vmem:[#allocation8 + $0x10c] sm:$0xf]
    %v2433 = vld [vmem:[#allocation8 + $0x110] sm:$0xf]
    %v2434 = vld [vmem:[#allocation8 + $0x114] sm:$0xf]
    %v2435 = vld [vmem:[#allocation8 + $0x118] sm:$0xf]
    %v2436 = vld [vmem:[#allocation8 + $0x11c] sm:$0xf]
    %v2437 = vld [vmem:[#allocation8 + $0x120] sm:$0xf]
    %v2438 = vld [vmem:[#allocation8 + $0x124] sm:$0xf]
    %v2439 = vld [vmem:[#allocation8 + $0x128] sm:$0xf]
    %v2440 = vld [vmem:[#allocation8 + $0x12c] sm:$0xf]
    %v2441 = vld [vmem:[#allocation8 + $0x130] sm:$0xf]
    %v2442 = vld [vmem:[#allocation8 + $0x134] sm:$0xf]
    %v2443 = vld [vmem:[#allocation8 + $0x138] sm:$0xf]
    %v2444 = vld [vmem:[#allocation8 + $0x13c] sm:$0xf]
    %v2445 = vld [vmem:[#allocation8 + $0x140] sm:$0xf]
    %v2446 = vld [vmem:[#allocation8 + $0x144] sm:$0xf]
    %v2447 = vld [vmem:[#allocation8 + $0x148] sm:$0xf]
    %v2448 = vld [vmem:[#allocation8 + $0x14c] sm:$0xf]
    %v2449 = vld [vmem:[#allocation8 + $0x150] sm:$0xf]
    %v2450 = vld [vmem:[#allocation8 + $0x154] sm:$0xf]
    %v2451 = vld [vmem:[#allocation8 + $0x158] sm:$0xf]
    %v2452 = vld [vmem:[#allocation8 + $0x15c] sm:$0xf]
    %v2453 = vld [vmem:[#allocation8 + $0x160] sm:$0xf]
    %v2454 = vld [vmem:[#allocation8 + $0x164] sm:$0xf]
    %v2455 = vld [vmem:[#allocation8 + $0x168] sm:$0xf]
    %v2456 = vld [vmem:[#allocation8 + $0x16c] sm:$0xf]
    %v2457 = vld [vmem:[#allocation8 + $0x170] sm:$0xf]
    %v2458 = vld [vmem:[#allocation8 + $0x174] sm:$0xf]
    %v2459 = vld [vmem:[#allocation8 + $0x178] sm:$0xf]
    %v2460 = vld [vmem:[#allocation8 + $0x17c] sm:$0xf]
    %v2557 = vunpack.c.l.b16 %v2365
    %v2558 = vunpack.c.l.b16 %v2366
    %v2559 = vunpack.c.l.b16 %v2367
    %v2560 = vunpack.c.l.b16 %v2368
    %v2561 = vunpack.c.l.b16 %v2369
    %v2562 = vunpack.c.l.b16 %v2370
    %v2563 = vunpack.c.l.b16 %v2371
    %v2564 = vunpack.c.l.b16 %v2372
    %v2565 = vunpack.c.l.b16 %v2373
    %v2566 = vunpack.c.l.b16 %v2374
    %v2567 = vunpack.c.l.b16 %v2375
    %v2568 = vunpack.c.l.b16 %v2376
    %v2569 = vunpack.c.l.b16 %v2377
    %v2570 = vunpack.c.l.b16 %v2378
    %v2571 = vunpack.c.l.b16 %v2379
    %v2572 = vunpack.c.l.b16 %v2380
    %v2573 = vunpack.c.l.b16 %v2381
    %v2574 = vunpack.c.l.b16 %v2382
    %v2575 = vunpack.c.l.b16 %v2383
    %v2576 = vunpack.c.l.b16 %v2384
    %v2577 = vunpack.c.l.b16 %v2385
    %v2578 = vunpack.c.l.b16 %v2386
    %v2579 = vunpack.c.l.b16 %v2387
    %v2580 = vunpack.c.l.b16 %v2388
    %v2581 = vunpack.c.l.b16 %v2389
    %v2582 = vunpack.c.l.b16 %v2390
    %v2583 = vunpack.c.l.b16 %v2391
    %v2584 = vunpack.c.l.b16 %v2392
    %v2585 = vunpack.c.l.b16 %v2393
    %v2586 = vunpack.c.l.b16 %v2394
    %v2587 = vunpack.c.l.b16 %v2395
    %v2588 = vunpack.c.l.b16 %v2396
    %v2589 = vunpack.c.l.b16 %v2397
    %v2590 = vunpack.c.l.b16 %v2398
    %v2591 = vunpack.c.l.b16 %v2399
    %v2592 = vunpack.c.l.b16 %v2400
    %v2593 = vunpack.c.l.b16 %v2401
    %v2594 = vunpack.c.l.b16 %v2402
    %v2595 = vunpack.c.l.b16 %v2403
    %v2596 = vunpack.c.l.b16 %v2404
    %v2597 = vunpack.c.l.b16 %v2405
    %v2598 = vunpack.c.l.b16 %v2406
    %v2599 = vunpack.c.l.b16 %v2407
    %v2600 = vunpack.c.l.b16 %v2408
    %v2601 = vunpack.c.l.b16 %v2409
    %v2602 = vunpack.c.l.b16 %v2410
    %v2603 = vunpack.c.l.b16 %v2411
    %v2604 = vunpack.c.l.b16 %v2412
    %v2605 = vunpack.c.l.b16 %v2413
    %v2606 = vunpack.c.l.b16 %v2414
    %v2607 = vunpack.c.l.b16 %v2415
    %v2608 = vunpack.c.l.b16 %v2416
    %v2609 = vunpack.c.l.b16 %v2417
    %v2610 = vunpack.c.l.b16 %v2418
    %v2611 = vunpack.c.l.b16 %v2419
    %v2612 = vunpack.c.l.b16 %v2420
    %v2613 = vunpack.c.l.b16 %v2421
    %v2614 = vunpack.c.l.b16 %v2422
    %v2615 = vunpack.c.l.b16 %v2423
    %v2616 = vunpack.c.l.b16 %v2424
    %v2617 = vunpack.c.l.b16 %v2425
    %v2618 = vunpack.c.l.b16 %v2426
    %v2619 = vunpack.c.l.b16 %v2427
    %v2620 = vunpack.c.l.b16 %v2428
    %v2621 = vunpack.c.l.b16 %v2429
    %v2622 = vunpack.c.l.b16 %v2430
    %v2623 = vunpack.c.l.b16 %v2431
    %v2624 = vunpack.c.l.b16 %v2432
    %v2625 = vunpack.c.l.b16 %v2433
    %v2626 = vunpack.c.l.b16 %v2434
    %v2627 = vunpack.c.l.b16 %v2435
    %v2628 = vunpack.c.l.b16 %v2436
    %v2629 = vunpack.c.l.b16 %v2437
    %v2630 = vunpack.c.l.b16 %v2438
    %v2631 = vunpack.c.l.b16 %v2439
    %v2632 = vunpack.c.l.b16 %v2440
    %v2633 = vunpack.c.l.b16 %v2441
    %v2634 = vunpack.c.l.b16 %v2442
    %v2635 = vunpack.c.l.b16 %v2443
    %v2636 = vunpack.c.l.b16 %v2444
    %v2637 = vunpack.c.l.b16 %v2445
    %v2638 = vunpack.c.l.b16 %v2446
    %v2639 = vunpack.c.l.b16 %v2447
    %v2640 = vunpack.c.l.b16 %v2448
    %v2641 = vunpack.c.l.b16 %v2449
    %v2642 = vunpack.c.l.b16 %v2450
    %v2643 = vunpack.c.l.b16 %v2451
    %v2644 = vunpack.c.l.b16 %v2452
    %v2645 = vunpack.c.l.b16 %v2453
    %v2646 = vunpack.c.l.b16 %v2454
    %v2647 = vunpack.c.l.b16 %v2455
    %v2648 = vunpack.c.l.b16 %v2456
    %v2649 = vunpack.c.l.b16 %v2457
    %v2650 = vunpack.c.l.b16 %v2458
    %v2651 = vunpack.c.l.b16 %v2459
    %v2652 = vunpack.c.l.b16 %v2460
    %v2653 = vpack.c.b16 %v2558, %v2557
    %v2654 = vpack.c.b16 %v2560, %v2559
    %v2655 = vpack.c.b16 %v2562, %v2561
    %v2656 = vpack.c.b16 %v2564, %v2563
    %v2657 = vpack.c.b16 %v2566, %v2565
    %v2658 = vpack.c.b16 %v2568, %v2567
    %v2659 = vpack.c.b16 %v2570, %v2569
    %v2660 = vpack.c.b16 %v2572, %v2571
    %v2661 = vpack.c.b16 %v2574, %v2573
    %v2662 = vpack.c.b16 %v2576, %v2575
    %v2663 = vpack.c.b16 %v2578, %v2577
    %v2664 = vpack.c.b16 %v2580, %v2579
    %v2665 = vpack.c.b16 %v2582, %v2581
    %v2666 = vpack.c.b16 %v2584, %v2583
    %v2667 = vpack.c.b16 %v2586, %v2585
    %v2668 = vpack.c.b16 %v2588, %v2587
    %v2669 = vpack.c.b16 %v2590, %v2589
    %v2670 = vpack.c.b16 %v2592, %v2591
    %v2671 = vpack.c.b16 %v2594, %v2593
    %v2672 = vpack.c.b16 %v2596, %v2595
    %v2673 = vpack.c.b16 %v2598, %v2597
    %v2674 = vpack.c.b16 %v2600, %v2599
    %v2675 = vpack.c.b16 %v2602, %v2601
    %v2676 = vpack.c.b16 %v2604, %v2603
    %v2677 = vpack.c.b16 %v2606, %v2605
    %v2678 = vpack.c.b16 %v2608, %v2607
    %v2679 = vpack.c.b16 %v2610, %v2609
    %v2680 = vpack.c.b16 %v2612, %v2611
    %v2681 = vpack.c.b16 %v2614, %v2613
    %v2682 = vpack.c.b16 %v2616, %v2615
    %v2683 = vpack.c.b16 %v2618, %v2617
    %v2684 = vpack.c.b16 %v2620, %v2619
    %v2685 = vpack.c.b16 %v2622, %v2621
    %v2686 = vpack.c.b16 %v2624, %v2623
    %v2687 = vpack.c.b16 %v2626, %v2625
    %v2688 = vpack.c.b16 %v2628, %v2627
    %v2689 = vpack.c.b16 %v2630, %v2629
    %v2690 = vpack.c.b16 %v2632, %v2631
    %v2691 = vpack.c.b16 %v2634, %v2633
    %v2692 = vpack.c.b16 %v2636, %v2635
    %v2693 = vpack.c.b16 %v2638, %v2637
    %v2694 = vpack.c.b16 %v2640, %v2639
    %v2695 = vpack.c.b16 %v2642, %v2641
    %v2696 = vpack.c.b16 %v2644, %v2643
    %v2697 = vpack.c.b16 %v2646, %v2645
    %v2698 = vpack.c.b16 %v2648, %v2647
    %v2699 = vpack.c.b16 %v2650, %v2649
    %v2700 = vpack.c.b16 %v2652, %v2651
    %2749 = vmatprep.subr.bf16.mxu0 0
    %2750 = vmatpush1.bf16.msra.mxu0 %v2660
    %2751 = vmatprep.subr.bf16.mxu0 0
    %2752 = vmatpush1.bf16.msra.mxu0 %v2659
    %2753 = vmatprep.subr.bf16.mxu0 0
    %2754 = vmatpush1.bf16.msra.mxu0 %v2658
    %2755 = vmatprep.subr.bf16.mxu0 0
    %2756 = vmatpush1.bf16.msra.mxu0 %v2657
    %2757 = vmatprep.subr.bf16.mxu0 0
    %2758 = vmatpush1.bf16.msra.mxu0 %v2656
    %2759 = vmatprep.subr.bf16.mxu0 0
    %2760 = vmatpush1.bf16.msra.mxu0 %v2655
    %2761 = vmatprep.subr.bf16.mxu0 0
    %2762 = vmatpush1.bf16.msra.mxu0 %v2654
    %2763 = vmatprep.subr.bf16.mxu0 0
    %2764 = vmatpush1.bf16.msra.mxu0 %v2653
    %2765 = vmatprep.subr.bf16.mxu0 0
    %2766 = vmatpush2.bf16.msra.mxu0 %v2668
    %2767 = vmatprep.subr.bf16.mxu0 0
    %2768 = vmatpush2.bf16.msra.mxu0 %v2667
    %2769 = vmatprep.subr.bf16.mxu0 0
    %2770 = vmatpush2.bf16.msra.mxu0 %v2666
    %2771 = vmatprep.subr.bf16.mxu0 0
    %2772 = vmatpush2.bf16.msra.mxu0 %v2665
    %2773 = vmatprep.subr.bf16.mxu0 0
    %2774 = vmatpush2.bf16.msra.mxu0 %v2664
    %2775 = vmatprep.subr.bf16.mxu0 0
    %2776 = vmatpush2.bf16.msra.mxu0 %v2663
    %2777 = vmatprep.subr.bf16.mxu0 0
    %2778 = vmatpush2.bf16.msra.mxu0 %v2662
    %2779 = vmatprep.subr.bf16.mxu0 0
    %2780 = vmatpush2.bf16.msra.mxu0 %v2661
    %2781 = vmatprep.mubr.bf16.mxu0 %v2354
    %2782 = vmatmul.mubr.bf16.gmra.mxu0 %v2353
    %v2783 = vpop.f32.mrf.mxu0
    %v2784 = vadd.f32 0.0, %v2783
    %v2785 = vpop.f32.mrf.mxu0
    %v2786 = vpop.f32.mrf.mxu0
    %v2787 = vpop.f32.mrf.mxu0
    %2788 = vdwg.mxu0
    %2789 = vmatprep.subr.bf16.mxu0 0
    %2790 = vmatpush1.bf16.msra.mxu0 %v2676
    %2791 = vmatprep.subr.bf16.mxu0 0
    %2792 = vmatpush1.bf16.msra.mxu0 %v2675
    %2793 = vmatprep.subr.bf16.mxu0 0
    %2794 = vmatpush1.bf16.msra.mxu0 %v2674
    %2795 = vmatprep.subr.bf16.mxu0 0
    %2796 = vmatpush1.bf16.msra.mxu0 %v2673
    %2797 = vmatprep.subr.bf16.mxu0 0
    %2798 = vmatpush1.bf16.msra.mxu0 %v2672
    %2799 = vmatprep.subr.bf16.mxu0 0
    %2800 = vmatpush1.bf16.msra.mxu0 %v2671
    %2801 = vmatprep.subr.bf16.mxu0 0
    %2802 = vmatpush1.bf16.msra.mxu0 %v2670
    %2803 = vmatprep.subr.bf16.mxu0 0
    %2804 = vmatpush1.bf16.msra.mxu0 %v2669
    %2805 = vmatprep.subr.bf16.mxu0 0
    %2806 = vmatpush2.bf16.msra.mxu0 %v2684
    %2807 = vmatprep.subr.bf16.mxu0 0
    %2808 = vmatpush2.bf16.msra.mxu0 %v2683
    %2809 = vmatprep.subr.bf16.mxu0 0
    %2810 = vmatpush2.bf16.msra.mxu0 %v2682
    %2811 = vmatprep.subr.bf16.mxu0 0
    %2812 = vmatpush2.bf16.msra.mxu0 %v2681
    %2813 = vmatprep.subr.bf16.mxu0 0
    %2814 = vmatpush2.bf16.msra.mxu0 %v2680
    %2815 = vmatprep.subr.bf16.mxu0 0
    %2816 = vmatpush2.bf16.msra.mxu0 %v2679
    %2817 = vmatprep.subr.bf16.mxu0 0
    %2818 = vmatpush2.bf16.msra.mxu0 %v2678
    %2819 = vmatprep.subr.bf16.mxu0 0
    %2820 = vmatpush2.bf16.msra.mxu0 %v2677
    %2821 = vmatprep.mubr.bf16.mxu0 %v2356
    %2822 = vmatmul.mubr.bf16.gmra.mxu0 %v2355
    %v2823 = vpop.f32.mrf.mxu0
    %v2824 = vadd.f32 %v2784, %v2823
    %v2825 = vpop.f32.mrf.mxu0
    %v2826 = vpop.f32.mrf.mxu0
    %v2827 = vpop.f32.mrf.mxu0
    %2828 = vdwg.mxu0
    %2829 = vmatprep.subr.bf16.mxu0 0
    %2830 = vmatpush1.bf16.msra.mxu0 %v2692
    %2831 = vmatprep.subr.bf16.mxu0 0
    %2832 = vmatpush1.bf16.msra.mxu0 %v2691
    %2833 = vmatprep.subr.bf16.mxu0 0
    %2834 = vmatpush1.bf16.msra.mxu0 %v2690
    %2835 = vmatprep.subr.bf16.mxu0 0
    %2836 = vmatpush1.bf16.msra.mxu0 %v2689
    %2837 = vmatprep.subr.bf16.mxu0 0
    %2838 = vmatpush1.bf16.msra.mxu0 %v2688
    %2839 = vmatprep.subr.bf16.mxu0 0
    %2840 = vmatpush1.bf16.msra.mxu0 %v2687
    %2841 = vmatprep.subr.bf16.mxu0 0
    %2842 = vmatpush1.bf16.msra.mxu0 %v2686
    %2843 = vmatprep.subr.bf16.mxu0 0
    %2844 = vmatpush1.bf16.msra.mxu0 %v2685
    %2845 = vmatprep.subr.bf16.mxu0 0
    %2846 = vmatpush2.bf16.msra.mxu0 %v2700
    %2847 = vmatprep.subr.bf16.mxu0 0
    %2848 = vmatpush2.bf16.msra.mxu0 %v2699
    %2849 = vmatprep.subr.bf16.mxu0 0
    %2850 = vmatpush2.bf16.msra.mxu0 %v2698
    %2851 = vmatprep.subr.bf16.mxu0 0
    %2852 = vmatpush2.bf16.msra.mxu0 %v2697
    %2853 = vmatprep.subr.bf16.mxu0 0
    %2854 = vmatpush2.bf16.msra.mxu0 %v2696
    %2855 = vmatprep.subr.bf16.mxu0 0
    %2856 = vmatpush2.bf16.msra.mxu0 %v2695
    %2857 = vmatprep.subr.bf16.mxu0 0
    %2858 = vmatpush2.bf16.msra.mxu0 %v2694
    %2859 = vmatprep.subr.bf16.mxu0 0
    %2860 = vmatpush2.bf16.msra.mxu0 %v2693
    %2861 = vmatprep.mubr.bf16.mxu0 %v2358
    %2862 = vmatmul.mubr.bf16.gmra.mxu0 %v2357
    %v2863 = vpop.f32.mrf.mxu0
    %v2864 = vadd.f32 %v2824, %v2863
    %v2865 = vpop.f32.mrf.mxu0
    %v2866 = vpop.f32.mrf.mxu0
    %v2867 = vpop.f32.mrf.mxu0
    %2868 = vdwg.mxu0
    %s2869 = scalar_lea.vmem [#allocation8], 384
    %v2870 = vld [vmem:[%s2869] sm:$0xf]
    %v2871 = vld [vmem:[%s2869 + $0x4] sm:$0xf]
    %v2872 = vld [vmem:[%s2869 + $0x8] sm:$0xf]
    %v2873 = vld [vmem:[%s2869 + $0xc] sm:$0xf]
    %v2874 = vld [vmem:[%s2869 + $0x10] sm:$0xf]
    %v2875 = vld [vmem:[%s2869 + $0x14] sm:$0xf]
    %v2876 = vld [vmem:[%s2869 + $0x18] sm:$0xf]
    %v2877 = vld [vmem:[%s2869 + $0x1c] sm:$0xf]
    %v2878 = vld [vmem:[%s2869 + $0x20] sm:$0xf]
    %v2879 = vld [vmem:[%s2869 + $0x24] sm:$0xf]
    %v2880 = vld [vmem:[%s2869 + $0x28] sm:$0xf]
    %v2881 = vld [vmem:[%s2869 + $0x2c] sm:$0xf]
    %v2882 = vld [vmem:[%s2869 + $0x30] sm:$0xf]
    %v2883 = vld [vmem:[%s2869 + $0x34] sm:$0xf]
    %v2884 = vld [vmem:[%s2869 + $0x38] sm:$0xf]
    %v2885 = vld [vmem:[%s2869 + $0x3c] sm:$0xf]
    %v2886 = vld [vmem:[%s2869 + $0x40] sm:$0xf]
    %v2887 = vld [vmem:[%s2869 + $0x44] sm:$0xf]
    %v2888 = vld [vmem:[%s2869 + $0x48] sm:$0xf]
    %v2889 = vld [vmem:[%s2869 + $0x4c] sm:$0xf]
    %v2890 = vld [vmem:[%s2869 + $0x50] sm:$0xf]
    %v2891 = vld [vmem:[%s2869 + $0x54] sm:$0xf]
    %v2892 = vld [vmem:[%s2869 + $0x58] sm:$0xf]
    %v2893 = vld [vmem:[%s2869 + $0x5c] sm:$0xf]
    %v2894 = vld [vmem:[%s2869 + $0x60] sm:$0xf]
    %v2895 = vld [vmem:[%s2869 + $0x64] sm:$0xf]
    %v2896 = vld [vmem:[%s2869 + $0x68] sm:$0xf]
    %v2897 = vld [vmem:[%s2869 + $0x6c] sm:$0xf]
    %v2898 = vld [vmem:[%s2869 + $0x70] sm:$0xf]
    %v2899 = vld [vmem:[%s2869 + $0x74] sm:$0xf]
    %v2900 = vld [vmem:[%s2869 + $0x78] sm:$0xf]
    %v2901 = vld [vmem:[%s2869 + $0x7c] sm:$0xf]
    %v2902 = vld [vmem:[%s2869 + $0x80] sm:$0xf]
    %v2903 = vld [vmem:[%s2869 + $0x84] sm:$0xf]
    %v2904 = vld [vmem:[%s2869 + $0x88] sm:$0xf]
    %v2905 = vld [vmem:[%s2869 + $0x8c] sm:$0xf]
    %v2906 = vld [vmem:[%s2869 + $0x90] sm:$0xf]
    %v2907 = vld [vmem:[%s2869 + $0x94] sm:$0xf]
    %v2908 = vld [vmem:[%s2869 + $0x98] sm:$0xf]
    %v2909 = vld [vmem:[%s2869 + $0x9c] sm:$0xf]
    %v2910 = vld [vmem:[%s2869 + $0xa0] sm:$0xf]
    %v2911 = vld [vmem:[%s2869 + $0xa4] sm:$0xf]
    %v2912 = vld [vmem:[%s2869 + $0xa8] sm:$0xf]
    %v2913 = vld [vmem:[%s2869 + $0xac] sm:$0xf]
    %v2914 = vld [vmem:[%s2869 + $0xb0] sm:$0xf]
    %v2915 = vld [vmem:[%s2869 + $0xb4] sm:$0xf]
    %v2916 = vld [vmem:[%s2869 + $0xb8] sm:$0xf]
    %v2917 = vld [vmem:[%s2869 + $0xbc] sm:$0xf]
    %v2918 = vld [vmem:[%s2869 + $0xc0] sm:$0xf]
    %v2919 = vld [vmem:[%s2869 + $0xc4] sm:$0xf]
    %v2920 = vld [vmem:[%s2869 + $0xc8] sm:$0xf]
    %v2921 = vld [vmem:[%s2869 + $0xcc] sm:$0xf]
    %v2922 = vld [vmem:[%s2869 + $0xd0] sm:$0xf]
    %v2923 = vld [vmem:[%s2869 + $0xd4] sm:$0xf]
    %v2924 = vld [vmem:[%s2869 + $0xd8] sm:$0xf]
    %v2925 = vld [vmem:[%s2869 + $0xdc] sm:$0xf]
    %v2926 = vld [vmem:[%s2869 + $0xe0] sm:$0xf]
    %v2927 = vld [vmem:[%s2869 + $0xe4] sm:$0xf]
    %v2928 = vld [vmem:[%s2869 + $0xe8] sm:$0xf]
    %v2929 = vld [vmem:[%s2869 + $0xec] sm:$0xf]
    %v2930 = vld [vmem:[%s2869 + $0xf0] sm:$0xf]
    %v2931 = vld [vmem:[%s2869 + $0xf4] sm:$0xf]
    %v2932 = vld [vmem:[%s2869 + $0xf8] sm:$0xf]
    %v2933 = vld [vmem:[%s2869 + $0xfc] sm:$0xf]
    %v2934 = vld [vmem:[%s2869 + $0x100] sm:$0xf]
    %v2935 = vld [vmem:[%s2869 + $0x104] sm:$0xf]
    %v2936 = vld [vmem:[%s2869 + $0x108] sm:$0xf]
    %v2937 = vld [vmem:[%s2869 + $0x10c] sm:$0xf]
    %v2938 = vld [vmem:[%s2869 + $0x110] sm:$0xf]
    %v2939 = vld [vmem:[%s2869 + $0x114] sm:$0xf]
    %v2940 = vld [vmem:[%s2869 + $0x118] sm:$0xf]
    %v2941 = vld [vmem:[%s2869 + $0x11c] sm:$0xf]
    %v2942 = vld [vmem:[%s2869 + $0x120] sm:$0xf]
    %v2943 = vld [vmem:[%s2869 + $0x124] sm:$0xf]
    %v2944 = vld [vmem:[%s2869 + $0x128] sm:$0xf]
    %v2945 = vld [vmem:[%s2869 + $0x12c] sm:$0xf]
    %v2946 = vld [vmem:[%s2869 + $0x130] sm:$0xf]
    %v2947 = vld [vmem:[%s2869 + $0x134] sm:$0xf]
    %v2948 = vld [vmem:[%s2869 + $0x138] sm:$0xf]
    %v2949 = vld [vmem:[%s2869 + $0x13c] sm:$0xf]
    %v2950 = vld [vmem:[%s2869 + $0x140] sm:$0xf]
    %v2951 = vld [vmem:[%s2869 + $0x144] sm:$0xf]
    %v2952 = vld [vmem:[%s2869 + $0x148] sm:$0xf]
    %v2953 = vld [vmem:[%s2869 + $0x14c] sm:$0xf]
    %v2954 = vld [vmem:[%s2869 + $0x150] sm:$0xf]
    %v2955 = vld [vmem:[%s2869 + $0x154] sm:$0xf]
    %v2956 = vld [vmem:[%s2869 + $0x158] sm:$0xf]
    %v2957 = vld [vmem:[%s2869 + $0x15c] sm:$0xf]
    %v2958 = vld [vmem:[%s2869 + $0x160] sm:$0xf]
    %v2959 = vld [vmem:[%s2869 + $0x164] sm:$0xf]
    %v2960 = vld [vmem:[%s2869 + $0x168] sm:$0xf]
    %v2961 = vld [vmem:[%s2869 + $0x16c] sm:$0xf]
    %v2962 = vld [vmem:[%s2869 + $0x170] sm:$0xf]
    %v2963 = vld [vmem:[%s2869 + $0x174] sm:$0xf]
    %v2964 = vld [vmem:[%s2869 + $0x178] sm:$0xf]
    %v2965 = vld [vmem:[%s2869 + $0x17c] sm:$0xf]
    %v2972 = vrot.slane %v2353, 4
    %v2973 = vrot.slane %v2354, 4
    %v2974 = vrot.slane %v2355, 4
    %v2975 = vrot.slane %v2356, 4
    %v2976 = vrot.slane %v2357, 4
    %v2977 = vrot.slane %v2358, 4
    %v3080 = vunpack.c.l.b16 %v2870
    %v3081 = vunpack.c.l.b16 %v2871
    %v3082 = vunpack.c.l.b16 %v2872
    %v3083 = vunpack.c.l.b16 %v2873
    %v3084 = vunpack.c.l.b16 %v2874
    %v3085 = vunpack.c.l.b16 %v2875
    %v3086 = vunpack.c.l.b16 %v2876
    %v3087 = vunpack.c.l.b16 %v2877
    %v3088 = vunpack.c.l.b16 %v2878
    %v3089 = vunpack.c.l.b16 %v2879
    %v3090 = vunpack.c.l.b16 %v2880
    %v3091 = vunpack.c.l.b16 %v2881
    %v3092 = vunpack.c.l.b16 %v2882
    %v3093 = vunpack.c.l.b16 %v2883
    %v3094 = vunpack.c.l.b16 %v2884
    %v3095 = vunpack.c.l.b16 %v2885
    %v3096 = vunpack.c.l.b16 %v2886
    %v3097 = vunpack.c.l.b16 %v2887
    %v3098 = vunpack.c.l.b16 %v2888
    %v3099 = vunpack.c.l.b16 %v2889
    %v3100 = vunpack.c.l.b16 %v2890
    %v3101 = vunpack.c.l.b16 %v2891
    %v3102 = vunpack.c.l.b16 %v2892
    %v3103 = vunpack.c.l.b16 %v2893
    %v3104 = vunpack.c.l.b16 %v2894
    %v3105 = vunpack.c.l.b16 %v2895
    %v3106 = vunpack.c.l.b16 %v2896
    %v3107 = vunpack.c.l.b16 %v2897
    %v3108 = vunpack.c.l.b16 %v2898
    %v3109 = vunpack.c.l.b16 %v2899
    %v3110 = vunpack.c.l.b16 %v2900
    %v3111 = vunpack.c.l.b16 %v2901
    %v3112 = vunpack.c.l.b16 %v2902
    %v3113 = vunpack.c.l.b16 %v2903
    %v3114 = vunpack.c.l.b16 %v2904
    %v3115 = vunpack.c.l.b16 %v2905
    %v3116 = vunpack.c.l.b16 %v2906
    %v3117 = vunpack.c.l.b16 %v2907
    %v3118 = vunpack.c.l.b16 %v2908
    %v3119 = vunpack.c.l.b16 %v2909
    %v3120 = vunpack.c.l.b16 %v2910
    %v3121 = vunpack.c.l.b16 %v2911
    %v3122 = vunpack.c.l.b16 %v2912
    %v3123 = vunpack.c.l.b16 %v2913
    %v3124 = vunpack.c.l.b16 %v2914
    %v3125 = vunpack.c.l.b16 %v2915
    %v3126 = vunpack.c.l.b16 %v2916
    %v3127 = vunpack.c.l.b16 %v2917
    %v3128 = vunpack.c.l.b16 %v2918
    %v3129 = vunpack.c.l.b16 %v2919
    %v3130 = vunpack.c.l.b16 %v2920
    %v3131 = vunpack.c.l.b16 %v2921
    %v3132 = vunpack.c.l.b16 %v2922
    %v3133 = vunpack.c.l.b16 %v2923
    %v3134 = vunpack.c.l.b16 %v2924
    %v3135 = vunpack.c.l.b16 %v2925
    %v3136 = vunpack.c.l.b16 %v2926
    %v3137 = vunpack.c.l.b16 %v2927
    %v3138 = vunpack.c.l.b16 %v2928
    %v3139 = vunpack.c.l.b16 %v2929
    %v3140 = vunpack.c.l.b16 %v2930
    %v3141 = vunpack.c.l.b16 %v2931
    %v3142 = vunpack.c.l.b16 %v2932
    %v3143 = vunpack.c.l.b16 %v2933
    %v3144 = vunpack.c.l.b16 %v2934
    %v3145 = vunpack.c.l.b16 %v2935
    %v3146 = vunpack.c.l.b16 %v2936
    %v3147 = vunpack.c.l.b16 %v2937
    %v3148 = vunpack.c.l.b16 %v2938
    %v3149 = vunpack.c.l.b16 %v2939
    %v3150 = vunpack.c.l.b16 %v2940
    %v3151 = vunpack.c.l.b16 %v2941
    %v3152 = vunpack.c.l.b16 %v2942
    %v3153 = vunpack.c.l.b16 %v2943
    %v3154 = vunpack.c.l.b16 %v2944
    %v3155 = vunpack.c.l.b16 %v2945
    %v3156 = vunpack.c.l.b16 %v2946
    %v3157 = vunpack.c.l.b16 %v2947
    %v3158 = vunpack.c.l.b16 %v2948
    %v3159 = vunpack.c.l.b16 %v2949
    %v3160 = vunpack.c.l.b16 %v2950
    %v3161 = vunpack.c.l.b16 %v2951
    %v3162 = vunpack.c.l.b16 %v2952
    %v3163 = vunpack.c.l.b16 %v2953
    %v3164 = vunpack.c.l.b16 %v2954
    %v3165 = vunpack.c.l.b16 %v2955
    %v3166 = vunpack.c.l.b16 %v2956
    %v3167 = vunpack.c.l.b16 %v2957
    %v3168 = vunpack.c.l.b16 %v2958
    %v3169 = vunpack.c.l.b16 %v2959
    %v3170 = vunpack.c.l.b16 %v2960
    %v3171 = vunpack.c.l.b16 %v2961
    %v3172 = vunpack.c.l.b16 %v2962
    %v3173 = vunpack.c.l.b16 %v2963
    %v3174 = vunpack.c.l.b16 %v2964
    %v3175 = vunpack.c.l.b16 %v2965
    %v3176 = vpack.c.b16 %v3081, %v3080
    %v3177 = vpack.c.b16 %v3083, %v3082
    %v3178 = vpack.c.b16 %v3085, %v3084
    %v3179 = vpack.c.b16 %v3087, %v3086
    %v3180 = vpack.c.b16 %v3089, %v3088
    %v3181 = vpack.c.b16 %v3091, %v3090
    %v3182 = vpack.c.b16 %v3093, %v3092
    %v3183 = vpack.c.b16 %v3095, %v3094
    %v3184 = vpack.c.b16 %v3097, %v3096
    %v3185 = vpack.c.b16 %v3099, %v3098
    %v3186 = vpack.c.b16 %v3101, %v3100
    %v3187 = vpack.c.b16 %v3103, %v3102
    %v3188 = vpack.c.b16 %v3105, %v3104
    %v3189 = vpack.c.b16 %v3107, %v3106
    %v3190 = vpack.c.b16 %v3109, %v3108
    %v3191 = vpack.c.b16 %v3111, %v3110
    %v3192 = vpack.c.b16 %v3113, %v3112
    %v3193 = vpack.c.b16 %v3115, %v3114
    %v3194 = vpack.c.b16 %v3117, %v3116
    %v3195 = vpack.c.b16 %v3119, %v3118
    %v3196 = vpack.c.b16 %v3121, %v3120
    %v3197 = vpack.c.b16 %v3123, %v3122
    %v3198 = vpack.c.b16 %v3125, %v3124
    %v3199 = vpack.c.b16 %v3127, %v3126
    %v3200 = vpack.c.b16 %v3129, %v3128
    %v3201 = vpack.c.b16 %v3131, %v3130
    %v3202 = vpack.c.b16 %v3133, %v3132
    %v3203 = vpack.c.b16 %v3135, %v3134
    %v3204 = vpack.c.b16 %v3137, %v3136
    %v3205 = vpack.c.b16 %v3139, %v3138
    %v3206 = vpack.c.b16 %v3141, %v3140
    %v3207 = vpack.c.b16 %v3143, %v3142
    %v3208 = vpack.c.b16 %v3145, %v3144
    %v3209 = vpack.c.b16 %v3147, %v3146
    %v3210 = vpack.c.b16 %v3149, %v3148
    %v3211 = vpack.c.b16 %v3151, %v3150
    %v3212 = vpack.c.b16 %v3153, %v3152
    %v3213 = vpack.c.b16 %v3155, %v3154
    %v3214 = vpack.c.b16 %v3157, %v3156
    %v3215 = vpack.c.b16 %v3159, %v3158
    %v3216 = vpack.c.b16 %v3161, %v3160
    %v3217 = vpack.c.b16 %v3163, %v3162
    %v3218 = vpack.c.b16 %v3165, %v3164
    %v3219 = vpack.c.b16 %v3167, %v3166
    %v3220 = vpack.c.b16 %v3169, %v3168
    %v3221 = vpack.c.b16 %v3171, %v3170
    %v3222 = vpack.c.b16 %v3173, %v3172
    %v3223 = vpack.c.b16 %v3175, %v3174
    %3272 = vmatprep.subr.bf16.mxu0 0
    %3273 = vmatpush1.bf16.msra.mxu0 %v3183
    %3274 = vmatprep.subr.bf16.mxu0 0
    %3275 = vmatpush1.bf16.msra.mxu0 %v3182
    %3276 = vmatprep.subr.bf16.mxu0 0
    %3277 = vmatpush1.bf16.msra.mxu0 %v3181
    %3278 = vmatprep.subr.bf16.mxu0 0
    %3279 = vmatpush1.bf16.msra.mxu0 %v3180
    %3280 = vmatprep.subr.bf16.mxu0 0
    %3281 = vmatpush1.bf16.msra.mxu0 %v3179
    %3282 = vmatprep.subr.bf16.mxu0 0
    %3283 = vmatpush1.bf16.msra.mxu0 %v3178
    %3284 = vmatprep.subr.bf16.mxu0 0
    %3285 = vmatpush1.bf16.msra.mxu0 %v3177
    %3286 = vmatprep.subr.bf16.mxu0 0
    %3287 = vmatpush1.bf16.msra.mxu0 %v3176
    %3288 = vmatprep.subr.bf16.mxu0 0
    %3289 = vmatpush2.bf16.msra.mxu0 %v3191
    %3290 = vmatprep.subr.bf16.mxu0 0
    %3291 = vmatpush2.bf16.msra.mxu0 %v3190
    %3292 = vmatprep.subr.bf16.mxu0 0
    %3293 = vmatpush2.bf16.msra.mxu0 %v3189
    %3294 = vmatprep.subr.bf16.mxu0 0
    %3295 = vmatpush2.bf16.msra.mxu0 %v3188
    %3296 = vmatprep.subr.bf16.mxu0 0
    %3297 = vmatpush2.bf16.msra.mxu0 %v3187
    %3298 = vmatprep.subr.bf16.mxu0 0
    %3299 = vmatpush2.bf16.msra.mxu0 %v3186
    %3300 = vmatprep.subr.bf16.mxu0 0
    %3301 = vmatpush2.bf16.msra.mxu0 %v3185
    %3302 = vmatprep.subr.bf16.mxu0 0
    %3303 = vmatpush2.bf16.msra.mxu0 %v3184
    %3304 = vmatprep.mubr.bf16.mxu0 %v2973
    %3305 = vmatmul.mubr.bf16.gmra.mxu0 %v2972
    %v3306 = vpop.f32.mrf.mxu0
    %v3307 = vadd.f32 0.0, %v3306
    %v3308 = vpop.f32.mrf.mxu0
    %v3309 = vpop.f32.mrf.mxu0
    %v3310 = vpop.f32.mrf.mxu0
    %3311 = vdwg.mxu0
    %3312 = vmatprep.subr.bf16.mxu0 0
    %3313 = vmatpush1.bf16.msra.mxu0 %v3199
    %3314 = vmatprep.subr.bf16.mxu0 0
    %3315 = vmatpush1.bf16.msra.mxu0 %v3198
    %3316 = vmatprep.subr.bf16.mxu0 0
    %3317 = vmatpush1.bf16.msra.mxu0 %v3197
    %3318 = vmatprep.subr.bf16.mxu0 0
    %3319 = vmatpush1.bf16.msra.mxu0 %v3196
    %3320 = vmatprep.subr.bf16.mxu0 0
    %3321 = vmatpush1.bf16.msra.mxu0 %v3195
    %3322 = vmatprep.subr.bf16.mxu0 0
    %3323 = vmatpush1.bf16.msra.mxu0 %v3194
    %3324 = vmatprep.subr.bf16.mxu0 0
    %3325 = vmatpush1.bf16.msra.mxu0 %v3193
    %3326 = vmatprep.subr.bf16.mxu0 0
    %3327 = vmatpush1.bf16.msra.mxu0 %v3192
    %3328 = vmatprep.subr.bf16.mxu0 0
    %3329 = vmatpush2.bf16.msra.mxu0 %v3207
    %3330 = vmatprep.subr.bf16.mxu0 0
    %3331 = vmatpush2.bf16.msra.mxu0 %v3206
    %3332 = vmatprep.subr.bf16.mxu0 0
    %3333 = vmatpush2.bf16.msra.mxu0 %v3205
    %3334 = vmatprep.subr.bf16.mxu0 0
    %3335 = vmatpush2.bf16.msra.mxu0 %v3204
    %3336 = vmatprep.subr.bf16.mxu0 0
    %3337 = vmatpush2.bf16.msra.mxu0 %v3203
    %3338 = vmatprep.subr.bf16.mxu0 0
    %3339 = vmatpush2.bf16.msra.mxu0 %v3202
    %3340 = vmatprep.subr.bf16.mxu0 0
    %3341 = vmatpush2.bf16.msra.mxu0 %v3201
    %3342 = vmatprep.subr.bf16.mxu0 0
    %3343 = vmatpush2.bf16.msra.mxu0 %v3200
    %3344 = vmatprep.mubr.bf16.mxu0 %v2975
    %3345 = vmatmul.mubr.bf16.gmra.mxu0 %v2974
    %v3346 = vpop.f32.mrf.mxu0
    %v3347 = vadd.f32 %v3307, %v3346
    %v3348 = vpop.f32.mrf.mxu0
    %v3349 = vpop.f32.mrf.mxu0
    %v3350 = vpop.f32.mrf.mxu0
    %3351 = vdwg.mxu0
    %3352 = vmatprep.subr.bf16.mxu0 0
    %3353 = vmatpush1.bf16.msra.mxu0 %v3215
    %3354 = vmatprep.subr.bf16.mxu0 0
    %3355 = vmatpush1.bf16.msra.mxu0 %v3214
    %3356 = vmatprep.subr.bf16.mxu0 0
    %3357 = vmatpush1.bf16.msra.mxu0 %v3213
    %3358 = vmatprep.subr.bf16.mxu0 0
    %3359 = vmatpush1.bf16.msra.mxu0 %v3212
    %3360 = vmatprep.subr.bf16.mxu0 0
    %3361 = vmatpush1.bf16.msra.mxu0 %v3211
    %3362 = vmatprep.subr.bf16.mxu0 0
    %3363 = vmatpush1.bf16.msra.mxu0 %v3210
    %3364 = vmatprep.subr.bf16.mxu0 0
    %3365 = vmatpush1.bf16.msra.mxu0 %v3209
    %3366 = vmatprep.subr.bf16.mxu0 0
    %3367 = vmatpush1.bf16.msra.mxu0 %v3208
    %3368 = vmatprep.subr.bf16.mxu0 0
    %3369 = vmatpush2.bf16.msra.mxu0 %v3223
    %3370 = vmatprep.subr.bf16.mxu0 0
    %3371 = vmatpush2.bf16.msra.mxu0 %v3222
    %3372 = vmatprep.subr.bf16.mxu0 0
    %3373 = vmatpush2.bf16.msra.mxu0 %v3221
    %3374 = vmatprep.subr.bf16.mxu0 0
    %3375 = vmatpush2.bf16.msra.mxu0 %v3220
    %3376 = vmatprep.subr.bf16.mxu0 0
    %3377 = vmatpush2.bf16.msra.mxu0 %v3219
    %3378 = vmatprep.subr.bf16.mxu0 0
    %3379 = vmatpush2.bf16.msra.mxu0 %v3218
    %3380 = vmatprep.subr.bf16.mxu0 0
    %3381 = vmatpush2.bf16.msra.mxu0 %v3217
    %3382 = vmatprep.subr.bf16.mxu0 0
    %3383 = vmatpush2.bf16.msra.mxu0 %v3216
    %3384 = vmatprep.mubr.bf16.mxu0 %v2977
    %3385 = vmatmul.mubr.bf16.gmra.mxu0 %v2976
    %v3386 = vpop.f32.mrf.mxu0
    %v3387 = vadd.f32 %v3347, %v3386
    %v3388 = vpop.f32.mrf.mxu0
    %v3389 = vpop.f32.mrf.mxu0
    %v3390 = vpop.f32.mrf.mxu0
    %3391 = vdwg.mxu0
    %s3392 = scalar_lea.vmem [#allocation8], 768
    %v3393 = vld [vmem:[%s3392] sm:$0xf]
    %v3394 = vld [vmem:[%s3392 + $0x4] sm:$0xf]
    %v3395 = vld [vmem:[%s3392 + $0x8] sm:$0xf]
    %v3396 = vld [vmem:[%s3392 + $0xc] sm:$0xf]
    %v3397 = vld [vmem:[%s3392 + $0x10] sm:$0xf]
    %v3398 = vld [vmem:[%s3392 + $0x14] sm:$0xf]
    %v3399 = vld [vmem:[%s3392 + $0x18] sm:$0xf]
    %v3400 = vld [vmem:[%s3392 + $0x1c] sm:$0xf]
    %v3401 = vld [vmem:[%s3392 + $0x20] sm:$0xf]
    %v3402 = vld [vmem:[%s3392 + $0x24] sm:$0xf]
    %v3403 = vld [vmem:[%s3392 + $0x28] sm:$0xf]
    %v3404 = vld [vmem:[%s3392 + $0x2c] sm:$0xf]
    %v3405 = vld [vmem:[%s3392 + $0x30] sm:$0xf]
    %v3406 = vld [vmem:[%s3392 + $0x34] sm:$0xf]
    %v3407 = vld [vmem:[%s3392 + $0x38] sm:$0xf]
    %v3408 = vld [vmem:[%s3392 + $0x3c] sm:$0xf]
    %v3409 = vld [vmem:[%s3392 + $0x40] sm:$0xf]
    %v3410 = vld [vmem:[%s3392 + $0x44] sm:$0xf]
    %v3411 = vld [vmem:[%s3392 + $0x48] sm:$0xf]
    %v3412 = vld [vmem:[%s3392 + $0x4c] sm:$0xf]
    %v3413 = vld [vmem:[%s3392 + $0x50] sm:$0xf]
    %v3414 = vld [vmem:[%s3392 + $0x54] sm:$0xf]
    %v3415 = vld [vmem:[%s3392 + $0x58] sm:$0xf]
    %v3416 = vld [vmem:[%s3392 + $0x5c] sm:$0xf]
    %v3417 = vld [vmem:[%s3392 + $0x60] sm:$0xf]
    %v3418 = vld [vmem:[%s3392 + $0x64] sm:$0xf]
    %v3419 = vld [vmem:[%s3392 + $0x68] sm:$0xf]
    %v3420 = vld [vmem:[%s3392 + $0x6c] sm:$0xf]
    %v3421 = vld [vmem:[%s3392 + $0x70] sm:$0xf]
    %v3422 = vld [vmem:[%s3392 + $0x74] sm:$0xf]
    %v3423 = vld [vmem:[%s3392 + $0x78] sm:$0xf]
    %v3424 = vld [vmem:[%s3392 + $0x7c] sm:$0xf]
    %v3425 = vld [vmem:[%s3392 + $0x80] sm:$0xf]
    %v3426 = vld [vmem:[%s3392 + $0x84] sm:$0xf]
    %v3427 = vld [vmem:[%s3392 + $0x88] sm:$0xf]
    %v3428 = vld [vmem:[%s3392 + $0x8c] sm:$0xf]
    %v3429 = vld [vmem:[%s3392 + $0x90] sm:$0xf]
    %v3430 = vld [vmem:[%s3392 + $0x94] sm:$0xf]
    %v3431 = vld [vmem:[%s3392 + $0x98] sm:$0xf]
    %v3432 = vld [vmem:[%s3392 + $0x9c] sm:$0xf]
    %v3433 = vld [vmem:[%s3392 + $0xa0] sm:$0xf]
    %v3434 = vld [vmem:[%s3392 + $0xa4] sm:$0xf]
    %v3435 = vld [vmem:[%s3392 + $0xa8] sm:$0xf]
    %v3436 = vld [vmem:[%s3392 + $0xac] sm:$0xf]
    %v3437 = vld [vmem:[%s3392 + $0xb0] sm:$0xf]
    %v3438 = vld [vmem:[%s3392 + $0xb4] sm:$0xf]
    %v3439 = vld [vmem:[%s3392 + $0xb8] sm:$0xf]
    %v3440 = vld [vmem:[%s3392 + $0xbc] sm:$0xf]
    %v3441 = vld [vmem:[%s3392 + $0xc0] sm:$0xf]
    %v3442 = vld [vmem:[%s3392 + $0xc4] sm:$0xf]
    %v3443 = vld [vmem:[%s3392 + $0xc8] sm:$0xf]
    %v3444 = vld [vmem:[%s3392 + $0xcc] sm:$0xf]
    %v3445 = vld [vmem:[%s3392 + $0xd0] sm:$0xf]
    %v3446 = vld [vmem:[%s3392 + $0xd4] sm:$0xf]
    %v3447 = vld [vmem:[%s3392 + $0xd8] sm:$0xf]
    %v3448 = vld [vmem:[%s3392 + $0xdc] sm:$0xf]
    %v3449 = vld [vmem:[%s3392 + $0xe0] sm:$0xf]
    %v3450 = vld [vmem:[%s3392 + $0xe4] sm:$0xf]
    %v3451 = vld [vmem:[%s3392 + $0xe8] sm:$0xf]
    %v3452 = vld [vmem:[%s3392 + $0xec] sm:$0xf]
    %v3453 = vld [vmem:[%s3392 + $0xf0] sm:$0xf]
    %v3454 = vld [vmem:[%s3392 + $0xf4] sm:$0xf]
    %v3455 = vld [vmem:[%s3392 + $0xf8] sm:$0xf]
    %v3456 = vld [vmem:[%s3392 + $0xfc] sm:$0xf]
    %v3457 = vld [vmem:[%s3392 + $0x100] sm:$0xf]
    %v3458 = vld [vmem:[%s3392 + $0x104] sm:$0xf]
    %v3459 = vld [vmem:[%s3392 + $0x108] sm:$0xf]
    %v3460 = vld [vmem:[%s3392 + $0x10c] sm:$0xf]
    %v3461 = vld [vmem:[%s3392 + $0x110] sm:$0xf]
    %v3462 = vld [vmem:[%s3392 + $0x114] sm:$0xf]
    %v3463 = vld [vmem:[%s3392 + $0x118] sm:$0xf]
    %v3464 = vld [vmem:[%s3392 + $0x11c] sm:$0xf]
    %v3465 = vld [vmem:[%s3392 + $0x120] sm:$0xf]
    %v3466 = vld [vmem:[%s3392 + $0x124] sm:$0xf]
    %v3467 = vld [vmem:[%s3392 + $0x128] sm:$0xf]
    %v3468 = vld [vmem:[%s3392 + $0x12c] sm:$0xf]
    %v3469 = vld [vmem:[%s3392 + $0x130] sm:$0xf]
    %v3470 = vld [vmem:[%s3392 + $0x134] sm:$0xf]
    %v3471 = vld [vmem:[%s3392 + $0x138] sm:$0xf]
    %v3472 = vld [vmem:[%s3392 + $0x13c] sm:$0xf]
    %v3473 = vld [vmem:[%s3392 + $0x140] sm:$0xf]
    %v3474 = vld [vmem:[%s3392 + $0x144] sm:$0xf]
    %v3475 = vld [vmem:[%s3392 + $0x148] sm:$0xf]
    %v3476 = vld [vmem:[%s3392 + $0x14c] sm:$0xf]
    %v3477 = vld [vmem:[%s3392 + $0x150] sm:$0xf]
    %v3478 = vld [vmem:[%s3392 + $0x154] sm:$0xf]
    %v3479 = vld [vmem:[%s3392 + $0x158] sm:$0xf]
    %v3480 = vld [vmem:[%s3392 + $0x15c] sm:$0xf]
    %v3481 = vld [vmem:[%s3392 + $0x160] sm:$0xf]
    %v3482 = vld [vmem:[%s3392 + $0x164] sm:$0xf]
    %v3483 = vld [vmem:[%s3392 + $0x168] sm:$0xf]
    %v3484 = vld [vmem:[%s3392 + $0x16c] sm:$0xf]
    %v3485 = vld [vmem:[%s3392 + $0x170] sm:$0xf]
    %v3486 = vld [vmem:[%s3392 + $0x174] sm:$0xf]
    %v3487 = vld [vmem:[%s3392 + $0x178] sm:$0xf]
    %v3488 = vld [vmem:[%s3392 + $0x17c] sm:$0xf]
    %v3585 = vunpack.c.l.b16 %v3393
    %v3586 = vunpack.c.l.b16 %v3394
    %v3587 = vunpack.c.l.b16 %v3395
    %v3588 = vunpack.c.l.b16 %v3396
    %v3589 = vunpack.c.l.b16 %v3397
    %v3590 = vunpack.c.l.b16 %v3398
    %v3591 = vunpack.c.l.b16 %v3399
    %v3592 = vunpack.c.l.b16 %v3400
    %v3593 = vunpack.c.l.b16 %v3401
    %v3594 = vunpack.c.l.b16 %v3402
    %v3595 = vunpack.c.l.b16 %v3403
    %v3596 = vunpack.c.l.b16 %v3404
    %v3597 = vunpack.c.l.b16 %v3405
    %v3598 = vunpack.c.l.b16 %v3406
    %v3599 = vunpack.c.l.b16 %v3407
    %v3600 = vunpack.c.l.b16 %v3408
    %v3601 = vunpack.c.l.b16 %v3409
    %v3602 = vunpack.c.l.b16 %v3410
    %v3603 = vunpack.c.l.b16 %v3411
    %v3604 = vunpack.c.l.b16 %v3412
    %v3605 = vunpack.c.l.b16 %v3413
    %v3606 = vunpack.c.l.b16 %v3414
    %v3607 = vunpack.c.l.b16 %v3415
    %v3608 = vunpack.c.l.b16 %v3416
    %v3609 = vunpack.c.l.b16 %v3417
    %v3610 = vunpack.c.l.b16 %v3418
    %v3611 = vunpack.c.l.b16 %v3419
    %v3612 = vunpack.c.l.b16 %v3420
    %v3613 = vunpack.c.l.b16 %v3421
    %v3614 = vunpack.c.l.b16 %v3422
    %v3615 = vunpack.c.l.b16 %v3423
    %v3616 = vunpack.c.l.b16 %v3424
    %v3617 = vunpack.c.l.b16 %v3425
    %v3618 = vunpack.c.l.b16 %v3426
    %v3619 = vunpack.c.l.b16 %v3427
    %v3620 = vunpack.c.l.b16 %v3428
    %v3621 = vunpack.c.l.b16 %v3429
    %v3622 = vunpack.c.l.b16 %v3430
    %v3623 = vunpack.c.l.b16 %v3431
    %v3624 = vunpack.c.l.b16 %v3432
    %v3625 = vunpack.c.l.b16 %v3433
    %v3626 = vunpack.c.l.b16 %v3434
    %v3627 = vunpack.c.l.b16 %v3435
    %v3628 = vunpack.c.l.b16 %v3436
    %v3629 = vunpack.c.l.b16 %v3437
    %v3630 = vunpack.c.l.b16 %v3438
    %v3631 = vunpack.c.l.b16 %v3439
    %v3632 = vunpack.c.l.b16 %v3440
    %v3633 = vunpack.c.l.b16 %v3441
    %v3634 = vunpack.c.l.b16 %v3442
    %v3635 = vunpack.c.l.b16 %v3443
    %v3636 = vunpack.c.l.b16 %v3444
    %v3637 = vunpack.c.l.b16 %v3445
    %v3638 = vunpack.c.l.b16 %v3446
    %v3639 = vunpack.c.l.b16 %v3447
    %v3640 = vunpack.c.l.b16 %v3448
    %v3641 = vunpack.c.l.b16 %v3449
    %v3642 = vunpack.c.l.b16 %v3450
    %v3643 = vunpack.c.l.b16 %v3451
    %v3644 = vunpack.c.l.b16 %v3452
    %v3645 = vunpack.c.l.b16 %v3453
    %v3646 = vunpack.c.l.b16 %v3454
    %v3647 = vunpack.c.l.b16 %v3455
    %v3648 = vunpack.c.l.b16 %v3456
    %v3649 = vunpack.c.l.b16 %v3457
    %v3650 = vunpack.c.l.b16 %v3458
    %v3651 = vunpack.c.l.b16 %v3459
    %v3652 = vunpack.c.l.b16 %v3460
    %v3653 = vunpack.c.l.b16 %v3461
    %v3654 = vunpack.c.l.b16 %v3462
    %v3655 = vunpack.c.l.b16 %v3463
    %v3656 = vunpack.c.l.b16 %v3464
    %v3657 = vunpack.c.l.b16 %v3465
    %v3658 = vunpack.c.l.b16 %v3466
    %v3659 = vunpack.c.l.b16 %v3467
    %v3660 = vunpack.c.l.b16 %v3468
    %v3661 = vunpack.c.l.b16 %v3469
    %v3662 = vunpack.c.l.b16 %v3470
    %v3663 = vunpack.c.l.b16 %v3471
    %v3664 = vunpack.c.l.b16 %v3472
    %v3665 = vunpack.c.l.b16 %v3473
    %v3666 = vunpack.c.l.b16 %v3474
    %v3667 = vunpack.c.l.b16 %v3475
    %v3668 = vunpack.c.l.b16 %v3476
    %v3669 = vunpack.c.l.b16 %v3477
    %v3670 = vunpack.c.l.b16 %v3478
    %v3671 = vunpack.c.l.b16 %v3479
    %v3672 = vunpack.c.l.b16 %v3480
    %v3673 = vunpack.c.l.b16 %v3481
    %v3674 = vunpack.c.l.b16 %v3482
    %v3675 = vunpack.c.l.b16 %v3483
    %v3676 = vunpack.c.l.b16 %v3484
    %v3677 = vunpack.c.l.b16 %v3485
    %v3678 = vunpack.c.l.b16 %v3486
    %v3679 = vunpack.c.l.b16 %v3487
    %v3680 = vunpack.c.l.b16 %v3488
    %v3681 = vpack.c.b16 %v3586, %v3585
    %v3682 = vpack.c.b16 %v3588, %v3587
    %v3683 = vpack.c.b16 %v3590, %v3589
    %v3684 = vpack.c.b16 %v3592, %v3591
    %v3685 = vpack.c.b16 %v3594, %v3593
    %v3686 = vpack.c.b16 %v3596, %v3595
    %v3687 = vpack.c.b16 %v3598, %v3597
    %v3688 = vpack.c.b16 %v3600, %v3599
    %v3689 = vpack.c.b16 %v3602, %v3601
    %v3690 = vpack.c.b16 %v3604, %v3603
    %v3691 = vpack.c.b16 %v3606, %v3605
    %v3692 = vpack.c.b16 %v3608, %v3607
    %v3693 = vpack.c.b16 %v3610, %v3609
    %v3694 = vpack.c.b16 %v3612, %v3611
    %v3695 = vpack.c.b16 %v3614, %v3613
    %v3696 = vpack.c.b16 %v3616, %v3615
    %v3697 = vpack.c.b16 %v3618, %v3617
    %v3698 = vpack.c.b16 %v3620, %v3619
    %v3699 = vpack.c.b16 %v3622, %v3621
    %v3700 = vpack.c.b16 %v3624, %v3623
    %v3701 = vpack.c.b16 %v3626, %v3625
    %v3702 = vpack.c.b16 %v3628, %v3627
    %v3703 = vpack.c.b16 %v3630, %v3629
    %v3704 = vpack.c.b16 %v3632, %v3631
    %v3705 = vpack.c.b16 %v3634, %v3633
    %v3706 = vpack.c.b16 %v3636, %v3635
    %v3707 = vpack.c.b16 %v3638, %v3637
    %v3708 = vpack.c.b16 %v3640, %v3639
    %v3709 = vpack.c.b16 %v3642, %v3641
    %v3710 = vpack.c.b16 %v3644, %v3643
    %v3711 = vpack.c.b16 %v3646, %v3645
    %v3712 = vpack.c.b16 %v3648, %v3647
    %v3713 = vpack.c.b16 %v3650, %v3649
    %v3714 = vpack.c.b16 %v3652, %v3651
    %v3715 = vpack.c.b16 %v3654, %v3653
    %v3716 = vpack.c.b16 %v3656, %v3655
    %v3717 = vpack.c.b16 %v3658, %v3657
    %v3718 = vpack.c.b16 %v3660, %v3659
    %v3719 = vpack.c.b16 %v3662, %v3661
    %v3720 = vpack.c.b16 %v3664, %v3663
    %v3721 = vpack.c.b16 %v3666, %v3665
    %v3722 = vpack.c.b16 %v3668, %v3667
    %v3723 = vpack.c.b16 %v3670, %v3669
    %v3724 = vpack.c.b16 %v3672, %v3671
    %v3725 = vpack.c.b16 %v3674, %v3673
    %v3726 = vpack.c.b16 %v3676, %v3675
    %v3727 = vpack.c.b16 %v3678, %v3677
    %v3728 = vpack.c.b16 %v3680, %v3679
    %3777 = vmatprep.subr.bf16.mxu0 0
    %3778 = vmatpush1.bf16.msra.mxu0 %v3688
    %3779 = vmatprep.subr.bf16.mxu0 0
    %3780 = vmatpush1.bf16.msra.mxu0 %v3687
    %3781 = vmatprep.subr.bf16.mxu0 0
    %3782 = vmatpush1.bf16.msra.mxu0 %v3686
    %3783 = vmatprep.subr.bf16.mxu0 0
    %3784 = vmatpush1.bf16.msra.mxu0 %v3685
    %3785 = vmatprep.subr.bf16.mxu0 0
    %3786 = vmatpush1.bf16.msra.mxu0 %v3684
    %3787 = vmatprep.subr.bf16.mxu0 0
    %3788 = vmatpush1.bf16.msra.mxu0 %v3683
    %3789 = vmatprep.subr.bf16.mxu0 0
    %3790 = vmatpush1.bf16.msra.mxu0 %v3682
    %3791 = vmatprep.subr.bf16.mxu0 0
    %3792 = vmatpush1.bf16.msra.mxu0 %v3681
    %3793 = vmatprep.subr.bf16.mxu0 0
    %3794 = vmatpush2.bf16.msra.mxu0 %v3696
    %3795 = vmatprep.subr.bf16.mxu0 0
    %3796 = vmatpush2.bf16.msra.mxu0 %v3695
    %3797 = vmatprep.subr.bf16.mxu0 0
    %3798 = vmatpush2.bf16.msra.mxu0 %v3694
    %3799 = vmatprep.subr.bf16.mxu0 0
    %3800 = vmatpush2.bf16.msra.mxu0 %v3693
    %3801 = vmatprep.subr.bf16.mxu0 0
    %3802 = vmatpush2.bf16.msra.mxu0 %v3692
    %3803 = vmatprep.subr.bf16.mxu0 0
    %3804 = vmatpush2.bf16.msra.mxu0 %v3691
    %3805 = vmatprep.subr.bf16.mxu0 0
    %3806 = vmatpush2.bf16.msra.mxu0 %v3690
    %3807 = vmatprep.subr.bf16.mxu0 0
    %3808 = vmatpush2.bf16.msra.mxu0 %v3689
    %3809 = vmatprep.mubr.bf16.mxu0 %v2360
    %3810 = vmatmul.mubr.bf16.gmra.mxu0 %v2359
    %v3811 = vpop.f32.mrf.mxu0
    %v3812 = vadd.f32 0.0, %v3811
    %v3813 = vpop.f32.mrf.mxu0
    %v3814 = vpop.f32.mrf.mxu0
    %v3815 = vpop.f32.mrf.mxu0
    %3816 = vdwg.mxu0
    %3817 = vmatprep.subr.bf16.mxu0 0
    %3818 = vmatpush1.bf16.msra.mxu0 %v3704
    %3819 = vmatprep.subr.bf16.mxu0 0
    %3820 = vmatpush1.bf16.msra.mxu0 %v3703
    %3821 = vmatprep.subr.bf16.mxu0 0
    %3822 = vmatpush1.bf16.msra.mxu0 %v3702
    %3823 = vmatprep.subr.bf16.mxu0 0
    %3824 = vmatpush1.bf16.msra.mxu0 %v3701
    %3825 = vmatprep.subr.bf16.mxu0 0
    %3826 = vmatpush1.bf16.msra.mxu0 %v3700
    %3827 = vmatprep.subr.bf16.mxu0 0
    %3828 = vmatpush1.bf16.msra.mxu0 %v3699
    %3829 = vmatprep.subr.bf16.mxu0 0
    %3830 = vmatpush1.bf16.msra.mxu0 %v3698
    %3831 = vmatprep.subr.bf16.mxu0 0
    %3832 = vmatpush1.bf16.msra.mxu0 %v3697
    %3833 = vmatprep.subr.bf16.mxu0 0
    %3834 = vmatpush2.bf16.msra.mxu0 %v3712
    %3835 = vmatprep.subr.bf16.mxu0 0
    %3836 = vmatpush2.bf16.msra.mxu0 %v3711
    %3837 = vmatprep.subr.bf16.mxu0 0
    %3838 = vmatpush2.bf16.msra.mxu0 %v3710
    %3839 = vmatprep.subr.bf16.mxu0 0
    %3840 = vmatpush2.bf16.msra.mxu0 %v3709
    %3841 = vmatprep.subr.bf16.mxu0 0
    %3842 = vmatpush2.bf16.msra.mxu0 %v3708
    %3843 = vmatprep.subr.bf16.mxu0 0
    %3844 = vmatpush2.bf16.msra.mxu0 %v3707
    %3845 = vmatprep.subr.bf16.mxu0 0
    %3846 = vmatpush2.bf16.msra.mxu0 %v3706
    %3847 = vmatprep.subr.bf16.mxu0 0
    %3848 = vmatpush2.bf16.msra.mxu0 %v3705
    %3849 = vmatprep.mubr.bf16.mxu0 %v2362
    %3850 = vmatmul.mubr.bf16.gmra.mxu0 %v2361
    %v3851 = vpop.f32.mrf.mxu0
    %v3852 = vadd.f32 %v3812, %v3851
    %v3853 = vpop.f32.mrf.mxu0
    %v3854 = vpop.f32.mrf.mxu0
    %v3855 = vpop.f32.mrf.mxu0
    %3856 = vdwg.mxu0
    %3857 = vmatprep.subr.bf16.mxu0 0
    %3858 = vmatpush1.bf16.msra.mxu0 %v3720
    %3859 = vmatprep.subr.bf16.mxu0 0
    %3860 = vmatpush1.bf16.msra.mxu0 %v3719
    %3861 = vmatprep.subr.bf16.mxu0 0
    %3862 = vmatpush1.bf16.msra.mxu0 %v3718
    %3863 = vmatprep.subr.bf16.mxu0 0
    %3864 = vmatpush1.bf16.msra.mxu0 %v3717
    %3865 = vmatprep.subr.bf16.mxu0 0
    %3866 = vmatpush1.bf16.msra.mxu0 %v3716
    %3867 = vmatprep.subr.bf16.mxu0 0
    %3868 = vmatpush1.bf16.msra.mxu0 %v3715
    %3869 = vmatprep.subr.bf16.mxu0 0
    %3870 = vmatpush1.bf16.msra.mxu0 %v3714
    %3871 = vmatprep.subr.bf16.mxu0 0
    %3872 = vmatpush1.bf16.msra.mxu0 %v3713
    %3873 = vmatprep.subr.bf16.mxu0 0
    %3874 = vmatpush2.bf16.msra.mxu0 %v3728
    %3875 = vmatprep.subr.bf16.mxu0 0
    %3876 = vmatpush2.bf16.msra.mxu0 %v3727
    %3877 = vmatprep.subr.bf16.mxu0 0
    %3878 = vmatpush2.bf16.msra.mxu0 %v3726
    %3879 = vmatprep.subr.bf16.mxu0 0
    %3880 = vmatpush2.bf16.msra.mxu0 %v3725
    %3881 = vmatprep.subr.bf16.mxu0 0
    %3882 = vmatpush2.bf16.msra.mxu0 %v3724
    %3883 = vmatprep.subr.bf16.mxu0 0
    %3884 = vmatpush2.bf16.msra.mxu0 %v3723
    %3885 = vmatprep.subr.bf16.mxu0 0
    %3886 = vmatpush2.bf16.msra.mxu0 %v3722
    %3887 = vmatprep.subr.bf16.mxu0 0
    %3888 = vmatpush2.bf16.msra.mxu0 %v3721
    %3889 = vmatprep.mubr.bf16.mxu0 %v2364
    %3890 = vmatmul.mubr.bf16.gmra.mxu0 %v2363
    %v3891 = vpop.f32.mrf.mxu0
    %v3892 = vadd.f32 %v3852, %v3891
    %v3893 = vpop.f32.mrf.mxu0
    %v3894 = vpop.f32.mrf.mxu0
    %v3895 = vpop.f32.mrf.mxu0
    %3896 = vdwg.mxu0
    %s3897 = sld [smem:[#allocation2]]
    %s3898 = sld [smem:[#allocation2 + $0x1]]
    %s3899 = sld [smem:[#allocation2 + $0x2]]
    %v3900 = vld [vmem:[#allocation9] sm:$0x1]
    %v3901 = vstv %s3897
    %v3902 = vmul.f32 %v3901, %v3900
    %v3903 = vld [vmem:[#allocation9 + $0x1] sm:$0x1]
    %v3904 = vstv %s3898
    %v3905 = vmul.f32 %v3904, %v3903
    %v3906 = vadd.f32 %v3902, %v3905
    %v3907 = vld [vmem:[#allocation9 + $0x2] sm:$0x1]
    %v3908 = vstv %s3899
    %v3909 = vmul.f32 %v3908, %v3907
    %v3910 = vadd.f32 %v3906, %v3909
    %v3911 = vmul.f32 %v3901, %v2864
    %v3912 = vmul.f32 %v3904, %v3387
    %v3913 = vadd.f32 %v3911, %v3912
    %v3914 = vmul.f32 %v3908, %v3892
    %v3915 = vadd.f32 %v3913, %v3914
    %v3916 = vlaneseq
    %v3917 = vshrl.u32 %v3916, 7
    %v3918 = vsub.s32 0, %v3917
    %v3919 = vrot.slane %v3910, %v3918
    %v3920 = vadd.f32 %v3915, %v3919
    %3921 = vst [vmem:[%s6] sm:$0xff] %v3920
    // Predicated region
    $region46: #{krel_forward.1} parent=1 // pred_check
      _
    $region47: #{krel_forward.1} parent=1 // pred_check_branch
      %3923 = sbr.rel (0) target = $region49
    $region48: #{krel_forward.1} parent=1 // pred_region
      _
    $region49: #{krel_forward.1} parent=1 // pred_fallthru
      _
    // Predicated region
    $region50: #{krel_forward.1} parent=1 // pred_check
      _
    $region51: #{krel_forward.1} parent=1 // pred_check_branch
      %3925 = sbr.rel (0) target = $region53
    $region52: #{krel_forward.1} parent=1 // pred_region
      _
    $region53: #{krel_forward.1} parent=1 // pred_fallthru
      _
    %3926 = vsyncpa [#allocation3], 1
    %3927 = vsyncpa [#allocation7], 1
    %3928 = vsyncpa [#allocation10], 1
    %3929 = vsyncpa [#allocation4], 1

</llo_original>
